<compile_context>
chip_gen: v5e
topology: v5e:2x2
jax: 0.10.0
libtpu: 0.0.40
codegen_flags: <defaults>
</compile_context>

<pallas_src>
import jax
import jax.numpy as jnp
from jax.experimental import pallas as pl
from jax.experimental.pallas import tpu as pltpu

BN_EPS = 1e-5


# ---------------------------------------------------------------------------
# In-kernel helpers (trace-time; operate on refs / values)
# ---------------------------------------------------------------------------
def _conv_bn_relu(pad_ref, w_ref, shift_ref, *, K, L, B):
    """Conv1d('same') + folded-BN shift + ReLU as K accumulated MXU matmuls.

    pad_ref: (B, L + K - 1, Cin) bf16 (zero halos), w_ref: (K, Cin, Cout) bf16.
    Returns (B*L, Cout) f32.
    """
    cin = pad_ref.shape[-1]
    acc = jnp.dot(pad_ref[:, pl.ds(0, L), :].reshape(B * L, cin), w_ref[0],
                  preferred_element_type=jnp.float32)
    for k in range(1, K):
        acc = acc + jnp.dot(pad_ref[:, pl.ds(k, L), :].reshape(B * L, cin),
                            w_ref[k], preferred_element_type=jnp.float32)
    return jnp.maximum(acc + shift_ref[...], 0.0)


def _maxpool2(y, tmp_ref):
    """max_pool1d(kernel=2, stride=2) over rows of y (B*L, C) -> (B*L/2, C).

    One whole-tile store + two stride-2 reads + one max (no per-batch loop).
    Row pairs never straddle samples because every per-sample L is even.
    """
    tmp_ref[...] = y
    half = tmp_ref.shape[0] // 2
    return jnp.maximum(tmp_ref[pl.ds(0, half, 2), :],
                       tmp_ref[pl.ds(1, half, 2), :])


def _zero_halo(pad_ref, halo, L):
    """Zero only the halo rows (first/last `halo`) of a 'same'-pad buffer."""
    B = pad_ref.shape[0]
    C = pad_ref.shape[-1]
    z = jnp.zeros((B, halo, C), pad_ref.dtype)
    pad_ref[:, pl.ds(0, halo), :] = z
    pad_ref[:, pl.ds(L + halo, halo), :] = z


# ---------------------------------------------------------------------------
# Fused kernel (whole network for one batch tile)
# ---------------------------------------------------------------------------
def _cnn_kernel(xc_ref,
                w1_ref, s1_ref, w2_ref, s2_ref, w3_ref, s3_ref, w4_ref, s4_ref,
                fc1w_ref, fc1b_ref, fc2w_ref, fc2b_ref,
                o_ref,
                pad2, pad3, pad4, tmp1, tmp2):
    B, L0, cin1 = xc_ref.shape
    L1, L2 = L0 // 2, L0 // 4

    # -- layer 1: conv(3->32, K=5), input pre-im2col'd -> one matmul ----------
    y1 = jnp.dot(xc_ref[...].reshape(B * L0, cin1), w1_ref[...],
                 preferred_element_type=jnp.float32)
    y1 = jnp.maximum(y1 + s1_ref[...], 0.0)                        # (B*L0, 32)
    # maxpool(2) -> bf16 'same'-padded input for conv2.
    _zero_halo(pad2, 2, L1)
    p1 = _maxpool2(y1, tmp1)                                       # (B*L1, 32)
    pad2[:, pl.ds(2, L1), :] = p1.reshape(B, L1, -1).astype(pad2.dtype)

    # -- layer 2: conv(32->64, K=5) + BN + ReLU, maxpool(2) -------------------
    y2 = _conv_bn_relu(pad2, w2_ref, s2_ref, K=5, L=L1, B=B)       # (B*L1, 64)
    _zero_halo(pad3, 2, L2)
    p2 = _maxpool2(y2, tmp2)                                       # (B*L2, 64)
    pad3[:, pl.ds(2, L2), :] = p2.reshape(B, L2, -1).astype(pad3.dtype)

    # -- layer 3: conv(64->128, K=5) + BN + ReLU ------------------------------
    y3 = _conv_bn_relu(pad3, w3_ref, s3_ref, K=5, L=L2, B=B)       # (B*L2, 128)
    _zero_halo(pad4, 1, L2)
    pad4[:, pl.ds(1, L2), :] = y3.reshape(B, L2, -1).astype(pad4.dtype)

    # -- layer 4: conv(128->128, K=3) + BN + ReLU -----------------------------
    y4 = _conv_bn_relu(pad4, w4_ref, s4_ref, K=3, L=L2, B=B)       # (B*L2, 128)

    # -- head: AdaptiveAvgPool1d(1) + fc1 + ReLU + fc2 ------------------------
    # TODO(synk): Dropout(p=0.4) is identity here (eval-mode semantics).
    gap = jnp.sum(y4.reshape(B, L2, y4.shape[-1]), axis=1) * (1.0 / L2)  # (B,128)
    h = jnp.dot(gap, fc1w_ref[...], preferred_element_type=jnp.float32)
    h = jnp.maximum(h + fc1b_ref[...], 0.0)
    o_ref[...] = (jnp.dot(h, fc2w_ref[...], preferred_element_type=jnp.float32)
                  + fc2b_ref[...])


# ---------------------------------------------------------------------------
# Wrapper
# ---------------------------------------------------------------------------
def cnn_forward(params, x_ncl, *, batch_tile=8):
    c = params["convs"]
    K1, cin, c1 = c[0]["w"].shape
    c2, c3 = c[1]["w"].shape[2], c[2]["w"].shape[2]
    nc = params["fc2_b"].shape[-1]

    x = jnp.transpose(x_ncl, (0, 2, 1)).astype(jnp.float32)        # NCL -> (B,L,C)
    B0, L0, _ = x.shape
    assert L0 % 4 == 0, "two maxpool(2) stages assume L divisible by 4"
    # TODO(synk): non-multiple-of-4 lengths (PyTorch floor pooling) unsupported.
    L1, L2 = L0 // 2, L0 // 4

    # conv1 im2col in XLA: lane-dense (B, L0, 16) bf16 operand for the kernel.
    xp = jnp.pad(x, ((0, 0), (2, 2), (0, 0)))
    cols = jnp.concatenate([xp[:, k:k + L0, :] for k in range(K1)], axis=-1)
    kc = K1 * cin
    kc_p = ((kc + 7) // 8) * 8
    cols = jnp.pad(cols, ((0, 0), (0, 0), (0, kc_p - kc))).astype(jnp.bfloat16)
    w1 = jnp.pad(c[0]["w"].reshape(kc, c1), ((0, kc_p - kc), (0, 0)))  # bf16

    # pad batch to a multiple of the batch tile.
    bt = min(batch_tile, B0)
    n_tiles = -(-B0 // bt)
    Bp = n_tiles * bt
    if Bp != B0:
        cols = jnp.pad(cols, ((0, Bp - B0), (0, 0), (0, 0)))

    inputs = [cols, w1, c[0]["shift"],
              c[1]["w"], c[1]["shift"], c[2]["w"], c[2]["shift"],
              c[3]["w"], c[3]["shift"],
              params["fc1_w"], params["fc1_b"],
              params["fc2_w"], params["fc2_b"]]

    def const_spec(a):
        n = a.ndim
        return pl.BlockSpec(a.shape, lambda i, _n=n: (0,) * _n)    # VMEM-resident

    in_specs = [pl.BlockSpec((bt, L0, kc_p), lambda i: (i, 0, 0))]
    in_specs += [const_spec(a) for a in inputs[1:]]

    out = pl.pallas_call(
        _cnn_kernel,
        out_shape=jax.ShapeDtypeStruct((Bp, nc), jnp.float32),
        grid=(n_tiles,),
        in_specs=in_specs,
        out_specs=pl.BlockSpec((bt, nc), lambda i: (i, 0)),
        scratch_shapes=[
            pltpu.VMEM((bt, L1 + 4, c1), jnp.bfloat16),   # pad2: conv2 input
            pltpu.VMEM((bt, L2 + 4, c2), jnp.bfloat16),   # pad3: conv3 input
            pltpu.VMEM((bt, L2 + 2, c3), jnp.bfloat16),   # pad4: conv4 input
            pltpu.VMEM((bt * L0, c1), jnp.float32),       # tmp1: pre-pool conv1 out
            pltpu.VMEM((bt * L1, c2), jnp.float32),       # tmp2: pre-pool conv2 out
        ],
        compiler_params=pltpu.CompilerParams(
            dimension_semantics=("parallel",),
            vmem_limit_bytes=32 * 1024 * 1024),
    )(*inputs)
    return out[:B0]


# ---------------------------------------------------------------------------
# Parameters (deterministic, PyTorch-default-style init; BN folded, eval mode)
# ---------------------------------------------------------------------------
def _uniform(key, shape, bound):
    return jax.random.uniform(key, shape, jnp.float32, -bound, bound)


def init_params(key, num_classes):
    conv_cfg = [  # (Cin, Cout, K)
        (3, 32, 5),
        (32, 64, 5),
        (64, 128, 5),
        (128, 128, 3),
    ]
    keys = jax.random.split(key, 2 * len(conv_cfg) + 4)
    bn_scale = (1.0 + BN_EPS) ** -0.5   # eval-mode BN: mean=0, var=1, gamma=1, beta=0
    convs = []
    for i, (cin, cout, k) in enumerate(conv_cfg):
        bound = 1.0 / (cin * k) ** 0.5
        w_ock = _uniform(keys[2 * i], (cout, cin, k), bound)       # PyTorch layout
        bias = _uniform(keys[2 * i + 1], (cout,), bound)
        w = jnp.transpose(w_ock, (2, 1, 0)) * bn_scale             # (K, Cin, Cout)
        convs.append(dict(w=w.astype(jnp.bfloat16),
                          shift=(bias * bn_scale).reshape(1, cout)))

    b1 = 1.0 / (128 ** 0.5)
    fc1_w = _uniform(keys[-4], (64, 128), b1)                      # PyTorch (out, in)
    fc1_b = _uniform(keys[-3], (64,), b1)
    b2 = 1.0 / (64 ** 0.5)
    fc2_w = _uniform(keys[-2], (num_classes, 64), b2)
    fc2_b = _uniform(keys[-1], (num_classes,), b2)
    return dict(
        convs=convs,
        fc1_w=jnp.transpose(fc1_w), fc1_b=fc1_b.reshape(1, 64),
        fc2_w=jnp.transpose(fc2_w), fc2_b=fc2_b.reshape(1, num_classes),
    )


if __name__ == "__main__":
    key = jax.random.PRNGKey(0)
    k_x, k_p = jax.random.split(key)

    batch, length, num_classes = 16, 64, 10
    x = jax.random.normal(k_x, (batch, 3, length), jnp.float32)    # PyTorch NCL input
    params = init_params(k_p, num_classes)

    out = jax.jit(cnn_forward)(params, x)
    out = jax.block_until_ready(out)
    assert out.shape == (batch, num_classes), out.shape
    print("KERNEL_OK")
</pallas_src>

<mosaic_0001>
module attributes {stable_mosaic.version = 11 : i64} {
  func.func @_cnn_kernel(%arg0: i32, %arg1: memref<8x64x16xbf16, #tpu.memory_space<vmem>>, %arg2: memref<16x32xbf16, #tpu.memory_space<vmem>>, %arg3: memref<1x32xf32, #tpu.memory_space<vmem>>, %arg4: memref<5x32x64xbf16, #tpu.memory_space<vmem>>, %arg5: memref<1x64xf32, #tpu.memory_space<vmem>>, %arg6: memref<5x64x128xbf16, #tpu.memory_space<vmem>>, %arg7: memref<1x128xf32, #tpu.memory_space<vmem>>, %arg8: memref<3x128x128xbf16, #tpu.memory_space<vmem>>, %arg9: memref<1x128xf32, #tpu.memory_space<vmem>>, %arg10: memref<128x64xf32, #tpu.memory_space<vmem>>, %arg11: memref<1x64xf32, #tpu.memory_space<vmem>>, %arg12: memref<64x10xf32, #tpu.memory_space<vmem>>, %arg13: memref<1x10xf32, #tpu.memory_space<vmem>>, %arg14: memref<8x10xf32, #tpu.memory_space<vmem>>, %arg15: memref<8x36x32xbf16, #tpu.memory_space<vmem>>, %arg16: memref<8x20x64xbf16, #tpu.memory_space<vmem>>, %arg17: memref<8x18x128xbf16, #tpu.memory_space<vmem>>, %arg18: memref<512x32xf32, #tpu.memory_space<vmem>>, %arg19: memref<256x64xf32, #tpu.memory_space<vmem>>) attributes {dimension_semantics = [#tpu.dimension_semantics<parallel>], iteration_bounds = array<i64: 2>, scalar_prefetch = 0 : i64, scratch_operands = 5 : i64, tpu.core_type = #tpu.core_type<tc>, window_params = [{transform_indices = @transform_0, window_bounds = array<i64: 8, 64, 16>}, {pipeline_mode = #tpu.pipeline_mode<synchronous>, transform_indices = @transform_1, window_bounds = array<i64: 16, 32>}, {pipeline_mode = #tpu.pipeline_mode<synchronous>, transform_indices = @transform_2, window_bounds = array<i64: 1, 32>}, {pipeline_mode = #tpu.pipeline_mode<synchronous>, transform_indices = @transform_3, window_bounds = array<i64: 5, 32, 64>}, {pipeline_mode = #tpu.pipeline_mode<synchronous>, transform_indices = @transform_4, window_bounds = array<i64: 1, 64>}, {pipeline_mode = #tpu.pipeline_mode<synchronous>, transform_indices = @transform_5, window_bounds = array<i64: 5, 64, 128>}, {pipeline_mode = #tpu.pipeline_mode<synchronous>, transform_indices = @transform_6, window_bounds = array<i64: 1, 128>}, {pipeline_mode = #tpu.pipeline_mode<synchronous>, transform_indices = @transform_7, window_bounds = array<i64: 3, 128, 128>}, {pipeline_mode = #tpu.pipeline_mode<synchronous>, transform_indices = @transform_8, window_bounds = array<i64: 1, 128>}, {pipeline_mode = #tpu.pipeline_mode<synchronous>, transform_indices = @transform_9, window_bounds = array<i64: 128, 64>}, {pipeline_mode = #tpu.pipeline_mode<synchronous>, transform_indices = @transform_10, window_bounds = array<i64: 1, 64>}, {pipeline_mode = #tpu.pipeline_mode<synchronous>, transform_indices = @transform_11, window_bounds = array<i64: 64, 10>}, {pipeline_mode = #tpu.pipeline_mode<synchronous>, transform_indices = @transform_12, window_bounds = array<i64: 1, 10>}, {transform_indices = @transform_13, window_bounds = array<i64: 8, 10>}]} {
    %c0 = arith.constant 0 : index
    %c0_0 = arith.constant 0 : index
    %c0_1 = arith.constant 0 : index
    %0 = vector.load %arg1[%c0, %c0_0, %c0_1] : memref<8x64x16xbf16, #tpu.memory_space<vmem>>, vector<8x64x16xbf16>
    %1 = vector.shape_cast %0 : vector<8x64x16xbf16> to vector<512x16xbf16>
    %c0_2 = arith.constant 0 : index
    %c0_3 = arith.constant 0 : index
    %2 = vector.load %arg2[%c0_2, %c0_3] : memref<16x32xbf16, #tpu.memory_space<vmem>>, vector<16x32xbf16>
    %cst = arith.constant dense<0.000000e+00> : vector<512x32xf32>
    %3 = tpu.matmul %1, %2, %cst {dimension_numbers = #tpu.dot_dimension_numbers<[1], [0], [0], [1], [0, 0, 1, 1], [], []>} : vector<512x16xbf16>, vector<16x32xbf16>, vector<512x32xf32> -> vector<512x32xf32>
    %c0_4 = arith.constant 0 : index
    %c0_5 = arith.constant 0 : index
    %4 = vector.load %arg3[%c0_4, %c0_5] : memref<1x32xf32, #tpu.memory_space<vmem>>, vector<1x32xf32>
    %5 = vector.broadcast %4 : vector<1x32xf32> to vector<512x32xf32>
    %6 = arith.addf %3, %5 : vector<512x32xf32>
    %cst_6 = arith.constant 0.000000e+00 : f32
    %7 = vector.broadcast %cst_6 : f32 to vector<512x32xf32>
    %8 = arith.maximumf %6, %7 : vector<512x32xf32>
    %cst_7 = arith.constant 0.000000e+00 : bf16
    %9 = vector.broadcast %cst_7 : bf16 to vector<8x2x32xbf16>
    %c0_8 = arith.constant 0 : index
    %c0_9 = arith.constant 0 : index
    %c0_10 = arith.constant 0 : index
    %10 = vector.load %arg15[%c0_8, %c0_9, %c0_10] : memref<8x36x32xbf16, #tpu.memory_space<vmem>>, vector<8x2x32xbf16>
    tpu.vector_store %arg15[%c0_8, %c0_9, %c0_10], %9 {strides = array<i32>} : memref<8x36x32xbf16, #tpu.memory_space<vmem>>, vector<8x2x32xbf16>,
    %c0_11 = arith.constant 0 : index
    %c34 = arith.constant 34 : index
    %c0_12 = arith.constant 0 : index
    %11 = vector.load %arg15[%c0_11, %c34, %c0_12] : memref<8x36x32xbf16, #tpu.memory_space<vmem>>, vector<8x2x32xbf16>
    tpu.vector_store %arg15[%c0_11, %c34, %c0_12], %9 {strides = array<i32>} : memref<8x36x32xbf16, #tpu.memory_space<vmem>>, vector<8x2x32xbf16>,
    %c0_13 = arith.constant 0 : index
    %c0_14 = arith.constant 0 : index
    %12 = vector.load %arg18[%c0_13, %c0_14] : memref<512x32xf32, #tpu.memory_space<vmem>>, vector<512x32xf32>
    tpu.vector_store %arg18[%c0_13, %c0_14], %8 {strides = array<i32>} : memref<512x32xf32, #tpu.memory_space<vmem>>, vector<512x32xf32>,
    %c0_15 = arith.constant 0 : index
    %c0_16 = arith.constant 0 : index
    %13 = tpu.strided_load %arg18[%c0_15, %c0_16] {strides = array<i32: 2, 1>} : memref<512x32xf32, #tpu.memory_space<vmem>>, vector<256x32xf32>
    %c1 = arith.constant 1 : index
    %c0_17 = arith.constant 0 : index
    %14 = tpu.strided_load %arg18[%c1, %c0_17] {strides = array<i32: 2, 1>} : memref<512x32xf32, #tpu.memory_space<vmem>>, vector<256x32xf32>
    %15 = arith.maximumf %13, %14 : vector<256x32xf32>
    %16 = vector.shape_cast %15 : vector<256x32xf32> to vector<8x32x32xf32>
    %17 = arith.truncf %16 : vector<8x32x32xf32> to vector<8x32x32xbf16>
    %c0_18 = arith.constant 0 : index
    %c2 = arith.constant 2 : index
    %c0_19 = arith.constant 0 : index
    %18 = vector.load %arg15[%c0_18, %c2, %c0_19] : memref<8x36x32xbf16, #tpu.memory_space<vmem>>, vector<8x32x32xbf16>
    tpu.vector_store %arg15[%c0_18, %c2, %c0_19], %17 {strides = array<i32>} : memref<8x36x32xbf16, #tpu.memory_space<vmem>>, vector<8x32x32xbf16>,
    %c0_20 = arith.constant 0 : index
    %c0_21 = arith.constant 0 : index
    %c0_22 = arith.constant 0 : index
    %19 = vector.load %arg15[%c0_20, %c0_21, %c0_22] : memref<8x36x32xbf16, #tpu.memory_space<vmem>>, vector<8x32x32xbf16>
    %20 = vector.shape_cast %19 : vector<8x32x32xbf16> to vector<256x32xbf16>
    %c0_23 = arith.constant 0 : index
    %c0_24 = arith.constant 0 : index
    %c0_25 = arith.constant 0 : index
    %21 = vector.load %arg4[%c0_23, %c0_24, %c0_25] : memref<5x32x64xbf16, #tpu.memory_space<vmem>>, vector<1x32x64xbf16>
    %22 = vector.shape_cast %21 : vector<1x32x64xbf16> to vector<32x64xbf16>
    %cst_26 = arith.constant dense<0.000000e+00> : vector<256x64xf32>
    %23 = tpu.matmul %20, %22, %cst_26 {dimension_numbers = #tpu.dot_dimension_numbers<[1], [0], [0], [1], [0, 0, 1, 1], [], []>} : vector<256x32xbf16>, vector<32x64xbf16>, vector<256x64xf32> -> vector<256x64xf32>
    %c0_27 = arith.constant 0 : index
    %c1_28 = arith.constant 1 : index
    %c0_29 = arith.constant 0 : index
    %24 = vector.load %arg15[%c0_27, %c1_28, %c0_29] : memref<8x36x32xbf16, #tpu.memory_space<vmem>>, vector<8x32x32xbf16>
    %25 = vector.shape_cast %24 : vector<8x32x32xbf16> to vector<256x32xbf16>
    %c1_30 = arith.constant 1 : index
    %c0_31 = arith.constant 0 : index
    %c0_32 = arith.constant 0 : index
    %26 = vector.load %arg4[%c1_30, %c0_31, %c0_32] : memref<5x32x64xbf16, #tpu.memory_space<vmem>>, vector<1x32x64xbf16>
    %27 = vector.shape_cast %26 : vector<1x32x64xbf16> to vector<32x64xbf16>
    %cst_33 = arith.constant dense<0.000000e+00> : vector<256x64xf32>
    %28 = tpu.matmul %25, %27, %cst_33 {dimension_numbers = #tpu.dot_dimension_numbers<[1], [0], [0], [1], [0, 0, 1, 1], [], []>} : vector<256x32xbf16>, vector<32x64xbf16>, vector<256x64xf32> -> vector<256x64xf32>
    %29 = arith.addf %23, %28 : vector<256x64xf32>
    %c0_34 = arith.constant 0 : index
    %c2_35 = arith.constant 2 : index
    %c0_36 = arith.constant 0 : index
    %30 = vector.load %arg15[%c0_34, %c2_35, %c0_36] : memref<8x36x32xbf16, #tpu.memory_space<vmem>>, vector<8x32x32xbf16>
    %31 = vector.shape_cast %30 : vector<8x32x32xbf16> to vector<256x32xbf16>
    %c2_37 = arith.constant 2 : index
    %c0_38 = arith.constant 0 : index
    %c0_39 = arith.constant 0 : index
    %32 = vector.load %arg4[%c2_37, %c0_38, %c0_39] : memref<5x32x64xbf16, #tpu.memory_space<vmem>>, vector<1x32x64xbf16>
    %33 = vector.shape_cast %32 : vector<1x32x64xbf16> to vector<32x64xbf16>
    %cst_40 = arith.constant dense<0.000000e+00> : vector<256x64xf32>
    %34 = tpu.matmul %31, %33, %cst_40 {dimension_numbers = #tpu.dot_dimension_numbers<[1], [0], [0], [1], [0, 0, 1, 1], [], []>} : vector<256x32xbf16>, vector<32x64xbf16>, vector<256x64xf32> -> vector<256x64xf32>
    %35 = arith.addf %29, %34 : vector<256x64xf32>
    %c0_41 = arith.constant 0 : index
    %c3 = arith.constant 3 : index
    %c0_42 = arith.constant 0 : index
    %36 = vector.load %arg15[%c0_41, %c3, %c0_42] : memref<8x36x32xbf16, #tpu.memory_space<vmem>>, vector<8x32x32xbf16>
    %37 = vector.shape_cast %36 : vector<8x32x32xbf16> to vector<256x32xbf16>
    %c3_43 = arith.constant 3 : index
    %c0_44 = arith.constant 0 : index
    %c0_45 = arith.constant 0 : index
    %38 = vector.load %arg4[%c3_43, %c0_44, %c0_45] : memref<5x32x64xbf16, #tpu.memory_space<vmem>>, vector<1x32x64xbf16>
    %39 = vector.shape_cast %38 : vector<1x32x64xbf16> to vector<32x64xbf16>
    %cst_46 = arith.constant dense<0.000000e+00> : vector<256x64xf32>
    %40 = tpu.matmul %37, %39, %cst_46 {dimension_numbers = #tpu.dot_dimension_numbers<[1], [0], [0], [1], [0, 0, 1, 1], [], []>} : vector<256x32xbf16>, vector<32x64xbf16>, vector<256x64xf32> -> vector<256x64xf32>
    %41 = arith.addf %35, %40 : vector<256x64xf32>
    %c0_47 = arith.constant 0 : index
    %c4 = arith.constant 4 : index
    %c0_48 = arith.constant 0 : index
    %42 = vector.load %arg15[%c0_47, %c4, %c0_48] : memref<8x36x32xbf16, #tpu.memory_space<vmem>>, vector<8x32x32xbf16>
    %43 = vector.shape_cast %42 : vector<8x32x32xbf16> to vector<256x32xbf16>
    %c4_49 = arith.constant 4 : index
    %c0_50 = arith.constant 0 : index
    %c0_51 = arith.constant 0 : index
    %44 = vector.load %arg4[%c4_49, %c0_50, %c0_51] : memref<5x32x64xbf16, #tpu.memory_space<vmem>>, vector<1x32x64xbf16>
    %45 = vector.shape_cast %44 : vector<1x32x64xbf16> to vector<32x64xbf16>
    %cst_52 = arith.constant dense<0.000000e+00> : vector<256x64xf32>
    %46 = tpu.matmul %43, %45, %cst_52 {dimension_numbers = #tpu.dot_dimension_numbers<[1], [0], [0], [1], [0, 0, 1, 1], [], []>} : vector<256x32xbf16>, vector<32x64xbf16>, vector<256x64xf32> -> vector<256x64xf32>
    %47 = arith.addf %41, %46 : vector<256x64xf32>
    %c0_53 = arith.constant 0 : index
    %c0_54 = arith.constant 0 : index
    %48 = vector.load %arg5[%c0_53, %c0_54] : memref<1x64xf32, #tpu.memory_space<vmem>>, vector<1x64xf32>
    %49 = vector.broadcast %48 : vector<1x64xf32> to vector<256x64xf32>
    %50 = arith.addf %47, %49 : vector<256x64xf32>
    %cst_55 = arith.constant 0.000000e+00 : f32
    %51 = vector.broadcast %cst_55 : f32 to vector<256x64xf32>
    %52 = arith.maximumf %50, %51 : vector<256x64xf32>
    %cst_56 = arith.constant 0.000000e+00 : bf16
    %53 = vector.broadcast %cst_56 : bf16 to vector<8x2x64xbf16>
    %c0_57 = arith.constant 0 : index
    %c0_58 = arith.constant 0 : index
    %c0_59 = arith.constant 0 : index
    %54 = vector.load %arg16[%c0_57, %c0_58, %c0_59] : memref<8x20x64xbf16, #tpu.memory_space<vmem>>, vector<8x2x64xbf16>
    tpu.vector_store %arg16[%c0_57, %c0_58, %c0_59], %53 {strides = array<i32>} : memref<8x20x64xbf16, #tpu.memory_space<vmem>>, vector<8x2x64xbf16>,
    %c0_60 = arith.constant 0 : index
    %c18 = arith.constant 18 : index
    %c0_61 = arith.constant 0 : index
    %55 = vector.load %arg16[%c0_60, %c18, %c0_61] : memref<8x20x64xbf16, #tpu.memory_space<vmem>>, vector<8x2x64xbf16>
    tpu.vector_store %arg16[%c0_60, %c18, %c0_61], %53 {strides = array<i32>} : memref<8x20x64xbf16, #tpu.memory_space<vmem>>, vector<8x2x64xbf16>,
    %c0_62 = arith.constant 0 : index
    %c0_63 = arith.constant 0 : index
    %56 = vector.load %arg19[%c0_62, %c0_63] : memref<256x64xf32, #tpu.memory_space<vmem>>, vector<256x64xf32>
    tpu.vector_store %arg19[%c0_62, %c0_63], %52 {strides = array<i32>} : memref<256x64xf32, #tpu.memory_space<vmem>>, vector<256x64xf32>,
    %c0_64 = arith.constant 0 : index
    %c0_65 = arith.constant 0 : index
    %57 = tpu.strided_load %arg19[%c0_64, %c0_65] {strides = array<i32: 2, 1>} : memref<256x64xf32, #tpu.memory_space<vmem>>, vector<128x64xf32>
    %c1_66 = arith.constant 1 : index
    %c0_67 = arith.constant 0 : index
    %58 = tpu.strided_load %arg19[%c1_66, %c0_67] {strides = array<i32: 2, 1>} : memref<256x64xf32, #tpu.memory_space<vmem>>, vector<128x64xf32>
    %59 = arith.maximumf %57, %58 : vector<128x64xf32>
    %60 = vector.shape_cast %59 : vector<128x64xf32> to vector<8x16x64xf32>
    %61 = arith.truncf %60 : vector<8x16x64xf32> to vector<8x16x64xbf16>
    %c0_68 = arith.constant 0 : index
    %c2_69 = arith.constant 2 : index
    %c0_70 = arith.constant 0 : index
    %62 = vector.load %arg16[%c0_68, %c2_69, %c0_70] : memref<8x20x64xbf16, #tpu.memory_space<vmem>>, vector<8x16x64xbf16>
    tpu.vector_store %arg16[%c0_68, %c2_69, %c0_70], %61 {strides = array<i32>} : memref<8x20x64xbf16, #tpu.memory_space<vmem>>, vector<8x16x64xbf16>,
    %c0_71 = arith.constant 0 : index
    %c0_72 = arith.constant 0 : index
    %c0_73 = arith.constant 0 : index
    %63 = vector.load %arg16[%c0_71, %c0_72, %c0_73] : memref<8x20x64xbf16, #tpu.memory_space<vmem>>, vector<8x16x64xbf16>
    %64 = vector.shape_cast %63 : vector<8x16x64xbf16> to vector<128x64xbf16>
    %c0_74 = arith.constant 0 : index
    %c0_75 = arith.constant 0 : index
    %c0_76 = arith.constant 0 : index
    %65 = vector.load %arg6[%c0_74, %c0_75, %c0_76] : memref<5x64x128xbf16, #tpu.memory_space<vmem>>, vector<1x64x128xbf16>
    %66 = vector.shape_cast %65 : vector<1x64x128xbf16> to vector<64x128xbf16>
    %cst_77 = arith.constant dense<0.000000e+00> : vector<128x128xf32>
    %67 = tpu.matmul %64, %66, %cst_77 {dimension_numbers = #tpu.dot_dimension_numbers<[1], [0], [0], [1], [0, 0, 1, 1], [], []>} : vector<128x64xbf16>, vector<64x128xbf16>, vector<128x128xf32> -> vector<128x128xf32>
    %c0_78 = arith.constant 0 : index
    %c1_79 = arith.constant 1 : index
    %c0_80 = arith.constant 0 : index
    %68 = vector.load %arg16[%c0_78, %c1_79, %c0_80] : memref<8x20x64xbf16, #tpu.memory_space<vmem>>, vector<8x16x64xbf16>
    %69 = vector.shape_cast %68 : vector<8x16x64xbf16> to vector<128x64xbf16>
    %c1_81 = arith.constant 1 : index
    %c0_82 = arith.constant 0 : index
    %c0_83 = arith.constant 0 : index
    %70 = vector.load %arg6[%c1_81, %c0_82, %c0_83] : memref<5x64x128xbf16, #tpu.memory_space<vmem>>, vector<1x64x128xbf16>
    %71 = vector.shape_cast %70 : vector<1x64x128xbf16> to vector<64x128xbf16>
    %cst_84 = arith.constant dense<0.000000e+00> : vector<128x128xf32>
    %72 = tpu.matmul %69, %71, %cst_84 {dimension_numbers = #tpu.dot_dimension_numbers<[1], [0], [0], [1], [0, 0, 1, 1], [], []>} : vector<128x64xbf16>, vector<64x128xbf16>, vector<128x128xf32> -> vector<128x128xf32>
    %73 = arith.addf %67, %72 : vector<128x128xf32>
    %c0_85 = arith.constant 0 : index
    %c2_86 = arith.constant 2 : index
    %c0_87 = arith.constant 0 : index
    %74 = vector.load %arg16[%c0_85, %c2_86, %c0_87] : memref<8x20x64xbf16, #tpu.memory_space<vmem>>, vector<8x16x64xbf16>
    %75 = vector.shape_cast %74 : vector<8x16x64xbf16> to vector<128x64xbf16>
    %c2_88 = arith.constant 2 : index
    %c0_89 = arith.constant 0 : index
    %c0_90 = arith.constant 0 : index
    %76 = vector.load %arg6[%c2_88, %c0_89, %c0_90] : memref<5x64x128xbf16, #tpu.memory_space<vmem>>, vector<1x64x128xbf16>
    %77 = vector.shape_cast %76 : vector<1x64x128xbf16> to vector<64x128xbf16>
    %cst_91 = arith.constant dense<0.000000e+00> : vector<128x128xf32>
    %78 = tpu.matmul %75, %77, %cst_91 {dimension_numbers = #tpu.dot_dimension_numbers<[1], [0], [0], [1], [0, 0, 1, 1], [], []>} : vector<128x64xbf16>, vector<64x128xbf16>, vector<128x128xf32> -> vector<128x128xf32>
    %79 = arith.addf %73, %78 : vector<128x128xf32>
    %c0_92 = arith.constant 0 : index
    %c3_93 = arith.constant 3 : index
    %c0_94 = arith.constant 0 : index
    %80 = vector.load %arg16[%c0_92, %c3_93, %c0_94] : memref<8x20x64xbf16, #tpu.memory_space<vmem>>, vector<8x16x64xbf16>
    %81 = vector.shape_cast %80 : vector<8x16x64xbf16> to vector<128x64xbf16>
    %c3_95 = arith.constant 3 : index
    %c0_96 = arith.constant 0 : index
    %c0_97 = arith.constant 0 : index
    %82 = vector.load %arg6[%c3_95, %c0_96, %c0_97] : memref<5x64x128xbf16, #tpu.memory_space<vmem>>, vector<1x64x128xbf16>
    %83 = vector.shape_cast %82 : vector<1x64x128xbf16> to vector<64x128xbf16>
    %cst_98 = arith.constant dense<0.000000e+00> : vector<128x128xf32>
    %84 = tpu.matmul %81, %83, %cst_98 {dimension_numbers = #tpu.dot_dimension_numbers<[1], [0], [0], [1], [0, 0, 1, 1], [], []>} : vector<128x64xbf16>, vector<64x128xbf16>, vector<128x128xf32> -> vector<128x128xf32>
    %85 = arith.addf %79, %84 : vector<128x128xf32>
    %c0_99 = arith.constant 0 : index
    %c4_100 = arith.constant 4 : index
    %c0_101 = arith.constant 0 : index
    %86 = vector.load %arg16[%c0_99, %c4_100, %c0_101] : memref<8x20x64xbf16, #tpu.memory_space<vmem>>, vector<8x16x64xbf16>
    %87 = vector.shape_cast %86 : vector<8x16x64xbf16> to vector<128x64xbf16>
    %c4_102 = arith.constant 4 : index
    %c0_103 = arith.constant 0 : index
    %c0_104 = arith.constant 0 : index
    %88 = vector.load %arg6[%c4_102, %c0_103, %c0_104] : memref<5x64x128xbf16, #tpu.memory_space<vmem>>, vector<1x64x128xbf16>
    %89 = vector.shape_cast %88 : vector<1x64x128xbf16> to vector<64x128xbf16>
    %cst_105 = arith.constant dense<0.000000e+00> : vector<128x128xf32>
    %90 = tpu.matmul %87, %89, %cst_105 {dimension_numbers = #tpu.dot_dimension_numbers<[1], [0], [0], [1], [0, 0, 1, 1], [], []>} : vector<128x64xbf16>, vector<64x128xbf16>, vector<128x128xf32> -> vector<128x128xf32>
    %91 = arith.addf %85, %90 : vector<128x128xf32>
    %c0_106 = arith.constant 0 : index
    %c0_107 = arith.constant 0 : index
    %92 = vector.load %arg7[%c0_106, %c0_107] : memref<1x128xf32, #tpu.memory_space<vmem>>, vector<1x128xf32>
    %93 = vector.broadcast %92 : vector<1x128xf32> to vector<128x128xf32>
    %94 = arith.addf %91, %93 : vector<128x128xf32>
    %cst_108 = arith.constant 0.000000e+00 : f32
    %95 = vector.broadcast %cst_108 : f32 to vector<128x128xf32>
    %96 = arith.maximumf %94, %95 : vector<128x128xf32>
    %cst_109 = arith.constant 0.000000e+00 : bf16
    %97 = vector.broadcast %cst_109 : bf16 to vector<8x1x128xbf16>
    %c0_110 = arith.constant 0 : index
    %c0_111 = arith.constant 0 : index
    %c0_112 = arith.constant 0 : index
    %98 = vector.load %arg17[%c0_110, %c0_111, %c0_112] : memref<8x18x128xbf16, #tpu.memory_space<vmem>>, vector<8x1x128xbf16>
    tpu.vector_store %arg17[%c0_110, %c0_111, %c0_112], %97 {strides = array<i32>} : memref<8x18x128xbf16, #tpu.memory_space<vmem>>, vector<8x1x128xbf16>,
    %c0_113 = arith.constant 0 : index
    %c17 = arith.constant 17 : index
    %c0_114 = arith.constant 0 : index
    %99 = vector.load %arg17[%c0_113, %c17, %c0_114] : memref<8x18x128xbf16, #tpu.memory_space<vmem>>, vector<8x1x128xbf16>
    tpu.vector_store %arg17[%c0_113, %c17, %c0_114], %97 {strides = array<i32>} : memref<8x18x128xbf16, #tpu.memory_space<vmem>>, vector<8x1x128xbf16>,
    %100 = vector.shape_cast %96 : vector<128x128xf32> to vector<8x16x128xf32>
    %101 = arith.truncf %100 : vector<8x16x128xf32> to vector<8x16x128xbf16>
    %c0_115 = arith.constant 0 : index
    %c1_116 = arith.constant 1 : index
    %c0_117 = arith.constant 0 : index
    %102 = vector.load %arg17[%c0_115, %c1_116, %c0_117] : memref<8x18x128xbf16, #tpu.memory_space<vmem>>, vector<8x16x128xbf16>
    tpu.vector_store %arg17[%c0_115, %c1_116, %c0_117], %101 {strides = array<i32>} : memref<8x18x128xbf16, #tpu.memory_space<vmem>>, vector<8x16x128xbf16>,
    %c0_118 = arith.constant 0 : index
    %c0_119 = arith.constant 0 : index
    %c0_120 = arith.constant 0 : index
    %103 = vector.load %arg17[%c0_118, %c0_119, %c0_120] : memref<8x18x128xbf16, #tpu.memory_space<vmem>>, vector<8x16x128xbf16>
    %104 = vector.shape_cast %103 : vector<8x16x128xbf16> to vector<128x128xbf16>
    %c0_121 = arith.constant 0 : index
    %c0_122 = arith.constant 0 : index
    %c0_123 = arith.constant 0 : index
    %105 = vector.load %arg8[%c0_121, %c0_122, %c0_123] : memref<3x128x128xbf16, #tpu.memory_space<vmem>>, vector<1x128x128xbf16>
    %106 = vector.shape_cast %105 : vector<1x128x128xbf16> to vector<128x128xbf16>
    %cst_124 = arith.constant dense<0.000000e+00> : vector<128x128xf32>
    %107 = tpu.matmul %104, %106, %cst_124 {dimension_numbers = #tpu.dot_dimension_numbers<[1], [0], [0], [1], [0, 0, 1, 1], [], []>} : vector<128x128xbf16>, vector<128x128xbf16>, vector<128x128xf32> -> vector<128x128xf32>
    %c0_125 = arith.constant 0 : index
    %c1_126 = arith.constant 1 : index
    %c0_127 = arith.constant 0 : index
    %108 = vector.load %arg17[%c0_125, %c1_126, %c0_127] : memref<8x18x128xbf16, #tpu.memory_space<vmem>>, vector<8x16x128xbf16>
    %109 = vector.shape_cast %108 : vector<8x16x128xbf16> to vector<128x128xbf16>
    %c1_128 = arith.constant 1 : index
    %c0_129 = arith.constant 0 : index
    %c0_130 = arith.constant 0 : index
    %110 = vector.load %arg8[%c1_128, %c0_129, %c0_130] : memref<3x128x128xbf16, #tpu.memory_space<vmem>>, vector<1x128x128xbf16>
    %111 = vector.shape_cast %110 : vector<1x128x128xbf16> to vector<128x128xbf16>
    %cst_131 = arith.constant dense<0.000000e+00> : vector<128x128xf32>
    %112 = tpu.matmul %109, %111, %cst_131 {dimension_numbers = #tpu.dot_dimension_numbers<[1], [0], [0], [1], [0, 0, 1, 1], [], []>} : vector<128x128xbf16>, vector<128x128xbf16>, vector<128x128xf32> -> vector<128x128xf32>
    %113 = arith.addf %107, %112 : vector<128x128xf32>
    %c0_132 = arith.constant 0 : index
    %c2_133 = arith.constant 2 : index
    %c0_134 = arith.constant 0 : index
    %114 = vector.load %arg17[%c0_132, %c2_133, %c0_134] : memref<8x18x128xbf16, #tpu.memory_space<vmem>>, vector<8x16x128xbf16>
    %115 = vector.shape_cast %114 : vector<8x16x128xbf16> to vector<128x128xbf16>
    %c2_135 = arith.constant 2 : index
    %c0_136 = arith.constant 0 : index
    %c0_137 = arith.constant 0 : index
    %116 = vector.load %arg8[%c2_135, %c0_136, %c0_137] : memref<3x128x128xbf16, #tpu.memory_space<vmem>>, vector<1x128x128xbf16>
    %117 = vector.shape_cast %116 : vector<1x128x128xbf16> to vector<128x128xbf16>
    %cst_138 = arith.constant dense<0.000000e+00> : vector<128x128xf32>
    %118 = tpu.matmul %115, %117, %cst_138 {dimension_numbers = #tpu.dot_dimension_numbers<[1], [0], [0], [1], [0, 0, 1, 1], [], []>} : vector<128x128xbf16>, vector<128x128xbf16>, vector<128x128xf32> -> vector<128x128xf32>
    %119 = arith.addf %113, %118 : vector<128x128xf32>
    %c0_139 = arith.constant 0 : index
    %c0_140 = arith.constant 0 : index
    %120 = vector.load %arg9[%c0_139, %c0_140] : memref<1x128xf32, #tpu.memory_space<vmem>>, vector<1x128xf32>
    %121 = vector.broadcast %120 : vector<1x128xf32> to vector<128x128xf32>
    %122 = arith.addf %119, %121 : vector<128x128xf32>
    %cst_141 = arith.constant 0.000000e+00 : f32
    %123 = vector.broadcast %cst_141 : f32 to vector<128x128xf32>
    %124 = arith.maximumf %122, %123 : vector<128x128xf32>
    %125 = vector.shape_cast %124 : vector<128x128xf32> to vector<8x16x128xf32>
    %cst_142 = arith.constant dense<0.000000e+00> : vector<8x128xf32>
    %126 = vector.multi_reduction <add>, %125, %cst_142 [1] : vector<8x16x128xf32> to vector<8x128xf32>
    %cst_143 = arith.constant 6.250000e-02 : f32
    %127 = vector.broadcast %cst_143 : f32 to vector<8x128xf32>
    %128 = arith.mulf %126, %127 : vector<8x128xf32>
    %c0_144 = arith.constant 0 : index
    %c0_145 = arith.constant 0 : index
    %129 = vector.load %arg10[%c0_144, %c0_145] : memref<128x64xf32, #tpu.memory_space<vmem>>, vector<128x64xf32>
    %cst_146 = arith.constant dense<0.000000e+00> : vector<8x64xf32>
    %130 = tpu.matmul %128, %129, %cst_146 {dimension_numbers = #tpu.dot_dimension_numbers<[1], [0], [0], [1], [0, 0, 1, 1], [], []>} : vector<8x128xf32>, vector<128x64xf32>, vector<8x64xf32> -> vector<8x64xf32>
    %c0_147 = arith.constant 0 : index
    %c0_148 = arith.constant 0 : index
    %131 = vector.load %arg11[%c0_147, %c0_148] : memref<1x64xf32, #tpu.memory_space<vmem>>, vector<1x64xf32>
    %132 = vector.broadcast %131 : vector<1x64xf32> to vector<8x64xf32>
    %133 = arith.addf %130, %132 : vector<8x64xf32>
    %cst_149 = arith.constant 0.000000e+00 : f32
    %134 = vector.broadcast %cst_149 : f32 to vector<8x64xf32>
    %135 = arith.maximumf %133, %134 : vector<8x64xf32>
    %c0_150 = arith.constant 0 : index
    %c0_151 = arith.constant 0 : index
    %136 = vector.load %arg12[%c0_150, %c0_151] : memref<64x10xf32, #tpu.memory_space<vmem>>, vector<64x10xf32>
    %cst_152 = arith.constant dense<0.000000e+00> : vector<8x10xf32>
    %137 = tpu.matmul %135, %136, %cst_152 {dimension_numbers = #tpu.dot_dimension_numbers<[1], [0], [0], [1], [0, 0, 1, 1], [], []>} : vector<8x64xf32>, vector<64x10xf32>, vector<8x10xf32> -> vector<8x10xf32>
    %c0_153 = arith.constant 0 : index
    %c0_154 = arith.constant 0 : index
    %138 = vector.load %arg13[%c0_153, %c0_154] : memref<1x10xf32, #tpu.memory_space<vmem>>, vector<1x10xf32>
    %139 = vector.broadcast %138 : vector<1x10xf32> to vector<8x10xf32>
    %140 = arith.addf %137, %139 : vector<8x10xf32>
    %c0_155 = arith.constant 0 : index
    %c0_156 = arith.constant 0 : index
    %141 = vector.load %arg14[%c0_155, %c0_156] : memref<8x10xf32, #tpu.memory_space<vmem>>, vector<8x10xf32>
    tpu.vector_store %arg14[%c0_155, %c0_156], %140 {strides = array<i32>} : memref<8x10xf32, #tpu.memory_space<vmem>>, vector<8x10xf32>,
    return
  }
  func.func @transform_0(%arg0: i32) -> (i32, i32, i32) {
    %c0_i32 = arith.constant 0 : i32
    %c0_i32_0 = arith.constant 0 : i32
    %c0_i32_1 = arith.constant 0 : i32
    return %arg0, %c0_i32, %c0_i32_0 : i32, i32, i32
  }
  func.func @transform_1(%arg0: i32) -> (i32, i32) {
    %c0_i32 = arith.constant 0 : i32
    %c0_i32_0 = arith.constant 0 : i32
    %c0_i32_1 = arith.constant 0 : i32
    return %c0_i32, %c0_i32_0 : i32, i32
  }
  func.func @transform_2(%arg0: i32) -> (i32, i32) {
    %c0_i32 = arith.constant 0 : i32
    %c0_i32_0 = arith.constant 0 : i32
    %c0_i32_1 = arith.constant 0 : i32
    return %c0_i32, %c0_i32_0 : i32, i32
  }
  func.func @transform_3(%arg0: i32) -> (i32, i32, i32) {
    %c0_i32 = arith.constant 0 : i32
    %c0_i32_0 = arith.constant 0 : i32
    %c0_i32_1 = arith.constant 0 : i32
    %c0_i32_2 = arith.constant 0 : i32
    return %c0_i32, %c0_i32_0, %c0_i32_1 : i32, i32, i32
  }
  func.func @transform_4(%arg0: i32) -> (i32, i32) {
    %c0_i32 = arith.constant 0 : i32
    %c0_i32_0 = arith.constant 0 : i32
    %c0_i32_1 = arith.constant 0 : i32
    return %c0_i32, %c0_i32_0 : i32, i32
  }
  func.func @transform_5(%arg0: i32) -> (i32, i32, i32) {
    %c0_i32 = arith.constant 0 : i32
    %c0_i32_0 = arith.constant 0 : i32
    %c0_i32_1 = arith.constant 0 : i32
    %c0_i32_2 = arith.constant 0 : i32
    return %c0_i32, %c0_i32_0, %c0_i32_1 : i32, i32, i32
  }
  func.func @transform_6(%arg0: i32) -> (i32, i32) {
    %c0_i32 = arith.constant 0 : i32
    %c0_i32_0 = arith.constant 0 : i32
    %c0_i32_1 = arith.constant 0 : i32
    return %c0_i32, %c0_i32_0 : i32, i32
  }
  func.func @transform_7(%arg0: i32) -> (i32, i32, i32) {
    %c0_i32 = arith.constant 0 : i32
    %c0_i32_0 = arith.constant 0 : i32
    %c0_i32_1 = arith.constant 0 : i32
    %c0_i32_2 = arith.constant 0 : i32
    return %c0_i32, %c0_i32_0, %c0_i32_1 : i32, i32, i32
  }
  func.func @transform_8(%arg0: i32) -> (i32, i32) {
    %c0_i32 = arith.constant 0 : i32
    %c0_i32_0 = arith.constant 0 : i32
    %c0_i32_1 = arith.constant 0 : i32
    return %c0_i32, %c0_i32_0 : i32, i32
  }
  func.func @transform_9(%arg0: i32) -> (i32, i32) {
    %c0_i32 = arith.constant 0 : i32
    %c0_i32_0 = arith.constant 0 : i32
    %c0_i32_1 = arith.constant 0 : i32
    return %c0_i32, %c0_i32_0 : i32, i32
  }
  func.func @transform_10(%arg0: i32) -> (i32, i32) {
    %c0_i32 = arith.constant 0 : i32
    %c0_i32_0 = arith.constant 0 : i32
    %c0_i32_1 = arith.constant 0 : i32
    return %c0_i32, %c0_i32_0 : i32, i32
  }
  func.func @transform_11(%arg0: i32) -> (i32, i32) {
    %c0_i32 = arith.constant 0 : i32
    %c0_i32_0 = arith.constant 0 : i32
    %c0_i32_1 = arith.constant 0 : i32
    return %c0_i32, %c0_i32_0 : i32, i32
  }
  func.func @transform_12(%arg0: i32) -> (i32, i32) {
    %c0_i32 = arith.constant 0 : i32
    %c0_i32_0 = arith.constant 0 : i32
    %c0_i32_1 = arith.constant 0 : i32
    return %c0_i32, %c0_i32_0 : i32, i32
  }
  func.func @transform_13(%arg0: i32) -> (i32, i32) {
    %c0_i32 = arith.constant 0 : i32
    %c0_i32_0 = arith.constant 0 : i32
    return %arg0, %c0_i32 : i32, i32
  }
}

</mosaic_0001>

<llo_original>
// kernel: cnn_forward.1
$region0: #{cnn_forward.1}
  #allocation0 [shape = 'u32[]', space=smem, size = 0x4, offset = 0x4, fixed_abs, tag = 'smem constant byte address 0x4 - core index']
  #allocation1 [shape = 'u32[72,128]{1,0:T(1,128)}', space=vmem, size = 0x9000, scoped, tag = 'internal scratch']
  #allocation2 [shape = 'bf16[8,36,32]{2,1,0:T(8,128)(2,1)}', space=vmem, size = 0x14000, scoped, tag = 'scratch operand']
  #allocation3 [shape = 'bf16[8,20,64]{2,1,0:T(8,128)(2,1)}', space=vmem, size = 0xc000, scoped, tag = 'scratch operand']
  #allocation4 [shape = 'bf16[8,18,128]{2,1,0:T(8,128)(2,1)}', space=vmem, size = 0xc000, scoped, tag = 'scratch operand']
  #allocation5 [shape = 'f32[512,32]{1,0:T(8,128)}', space=vmem, size = 0x40000, scoped, tag = 'scratch operand']
  #allocation6 [shape = 'f32[256,64]{1,0:T(8,128)}', space=vmem, size = 0x20000, scoped, tag = 'scratch operand']
  %s0 = inlined_call_operand.vmem [shape: bf16[16,64,16], index: 0, kind: input, shape index: {}]
  %s1 = inlined_call_operand.vmem [shape: bf16[16,32], index: 1, kind: input, shape index: {}]
  %s2 = inlined_call_operand.vmem [shape: f32[1,32], index: 2, kind: input, shape index: {}]
  %s3 = inlined_call_operand.vmem [shape: bf16[5,32,64], index: 3, kind: input, shape index: {}]
  %s4 = inlined_call_operand.vmem [shape: f32[1,64], index: 4, kind: input, shape index: {}]
  %s5 = inlined_call_operand.vmem [shape: bf16[5,64,128], index: 5, kind: input, shape index: {}]
  %s6 = inlined_call_operand.vmem [shape: f32[1,128], index: 6, kind: input, shape index: {}]
  %s7 = inlined_call_operand.vmem [shape: bf16[3,128,128], index: 7, kind: input, shape index: {}]
  %s8 = inlined_call_operand.vmem [shape: f32[1,128], index: 8, kind: input, shape index: {}]
  %s9 = inlined_call_operand.vmem [shape: f32[128,64], index: 9, kind: input, shape index: {}]
  %s10 = inlined_call_operand.vmem [shape: f32[1,64], index: 10, kind: input, shape index: {}]
  %s11 = inlined_call_operand.vmem [shape: f32[64,10], index: 11, kind: input, shape index: {}]
  %s12 = inlined_call_operand.vmem [shape: f32[1,10], index: 12, kind: input, shape index: {}]
  %s13 = inlined_call_operand.hbm [shape: f32[16,10], index: 13, kind: output, shape index: {}]
  %s14 = sld [smem:[#allocation0]]
  $region85: #{cnn_forward.1} parent=0
    _
  %s16 = ssub.s32 1, %s14
  %s17 = scalar_select 0, %s16, %s14
  $region1: #{cnn_forward.1} parent=0
    #allocation7 [shape = 'u8[8192]{0}', space=vmem, size = 0x2000, scoped, tag = 'output window, operand 0']
    #allocation8 [shape = 's32[2]{0}', space=sflag, size = 0x8, scoped, tag = 'scoped memory for cnn_forward.1']
    %18 = vsyncpa [#allocation8], 0
    %s19 = scalar_lea.sflag [#allocation8], 1
    %20 = vsyncpa %s19, 0
    loop: start=0, step=1, limit=4
    $region2: #{cnn_forward.1} parent=1 // loop_pre_header
      _
    $region3: #{cnn_forward.1} parent=1 // loop_header
      %s22 = sphi 0, %s26
      %p23 = scmp.ge.s32.totalorder %s22, 4
      %s32 = sphi 0, %s34
      %s35 = sphi 0, %s32
      %s36 = sphi 0, %s35
      %s52 = sphi 0, %s36
      %s56 = sphi 0, %s56
      %s58 = sphi 0, %s56
      %s59 = sphi 0, %s58
      %s73 = sphi 0, %s59
      %s77 = sphi 0, %s77
      %s79 = sphi 0, %s77
      %s80 = sphi 0, %s79
      %s94 = sphi 0, %s80
      %s98 = sphi 0, %s98
      %s100 = sphi 0, %s98
      %s101 = sphi 0, %s100
      %s115 = sphi 0, %s101
      %s119 = sphi 0, %s119
      %s121 = sphi 0, %s119
      %s122 = sphi 0, %s121
      %s136 = sphi 0, %s122
      %s140 = sphi 0, %s140
      %s142 = sphi 0, %s140
      %s143 = sphi 0, %s142
      %s157 = sphi 0, %s143
      %s161 = sphi 0, %s161
      %s163 = sphi 0, %s161
      %s164 = sphi 0, %s163
      %s178 = sphi 0, %s164
      %s182 = sphi 0, %s182
      %s184 = sphi 0, %s182
      %s185 = sphi 0, %s184
      %s199 = sphi 0, %s185
      %s203 = sphi 0, %s203
      %s205 = sphi 0, %s203
      %s206 = sphi 0, %s205
      %s220 = sphi 0, %s206
      %s224 = sphi 0, %s224
      %s226 = sphi 0, %s224
      %s227 = sphi 0, %s226
      %s241 = sphi 0, %s227
      %s245 = sphi 0, %s245
      %s247 = sphi 0, %s245
      %s248 = sphi 0, %s247
      %s262 = sphi 0, %s248
      %s266 = sphi 0, %s266
      %s268 = sphi 0, %s266
      %s269 = sphi 0, %s268
      %s283 = sphi 0, %s269
      %s287 = sphi 0, %s287
      %s289 = sphi 0, %s287
      %s290 = sphi 0, %s289
      %s304 = sphi 0, %s290
      %s310 = sphi 0, %s312
      %s313 = sphi 0, %s310
      %s314 = sphi 0, %s313
      %s330 = sphi 0, %s314
    $region4: #{cnn_forward.1} parent=1 // loop_header_branch
      %25 = sbr.rel (%p23) target = $region8
    $region5: #{cnn_forward.1} parent=1 // loop_body
      %s27 = ssub.s32 %s22, 1
      %s28 = ssub.s32 %s22, 2
      %s29 = sadd.s32 %s22, 1
      %s30 = ssub.s32 %s22, %s29
      %p31 = scmp.eq.s32.totalorder %s30, 0
      %s33 = sadd.s32 %s32, 1
      %s34 = scalar_select %p31, %s32, %s33
      %p37 = pneg %p31
      %p38 = scmp.eq.s32.totalorder %s22, 1
      %p39 = por %p37, %p38
      %p40 = scmp.ne.s32.totalorder %s32, %s35
      %p41 = scmp.eq.s32.totalorder %s22, 0
      %p42 = por %p40, %p41
      %p43 = scmp.ne.s32.totalorder %s32, %s35
      %p44 = scmp.eq.s32.totalorder %s27, 1
      %p45 = por %p43, %p44
      %p46 = scmp.ne.s32.totalorder %s35, %s36
      %p47 = scmp.eq.s32.totalorder %s27, 0
      %p48 = por %p46, %p47
      %p49 = scmp.ne.s32.totalorder %s35, %s36
      %p50 = scmp.eq.s32.totalorder %s28, 1
      %p51 = por %p49, %p50
      %p53 = scmp.ne.s32.totalorder %s36, %s52
      %p54 = scmp.eq.s32.totalorder %s28, 0
      %p55 = por %p53, %p54
      %s57 = sadd.s32 %s56, 1
      %p60 = scmp.eq.s32.totalorder %s22, 1
      %p61 = scmp.ne.s32.totalorder %s56, %s58
      %p62 = scmp.eq.s32.totalorder %s22, 0
      %p63 = por %p61, %p62
      %p64 = scmp.ne.s32.totalorder %s56, %s58
      %p65 = scmp.eq.s32.totalorder %s27, 1
      %p66 = por %p64, %p65
      %p67 = scmp.ne.s32.totalorder %s58, %s59
      %p68 = scmp.eq.s32.totalorder %s27, 0
      %p69 = por %p67, %p68
      %p70 = scmp.ne.s32.totalorder %s58, %s59
      %p71 = scmp.eq.s32.totalorder %s28, 1
      %p72 = por %p70, %p71
      %p74 = scmp.ne.s32.totalorder %s59, %s73
      %p75 = scmp.eq.s32.totalorder %s28, 0
      %p76 = por %p74, %p75
      %s78 = sadd.s32 %s77, 1
      %p81 = scmp.eq.s32.totalorder %s22, 1
      %p82 = scmp.ne.s32.totalorder %s77, %s79
      %p83 = scmp.eq.s32.totalorder %s22, 0
      %p84 = por %p82, %p83
      %p85 = scmp.ne.s32.totalorder %s77, %s79
      %p86 = scmp.eq.s32.totalorder %s27, 1
      %p87 = por %p85, %p86
      %p88 = scmp.ne.s32.totalorder %s79, %s80
      %p89 = scmp.eq.s32.totalorder %s27, 0
      %p90 = por %p88, %p89
      %p91 = scmp.ne.s32.totalorder %s79, %s80
      %p92 = scmp.eq.s32.totalorder %s28, 1
      %p93 = por %p91, %p92
      %p95 = scmp.ne.s32.totalorder %s80, %s94
      %p96 = scmp.eq.s32.totalorder %s28, 0
      %p97 = por %p95, %p96
      %s99 = sadd.s32 %s98, 1
      %p102 = scmp.eq.s32.totalorder %s22, 1
      %p103 = scmp.ne.s32.totalorder %s98, %s100
      %p104 = scmp.eq.s32.totalorder %s22, 0
      %p105 = por %p103, %p104
      %p106 = scmp.ne.s32.totalorder %s98, %s100
      %p107 = scmp.eq.s32.totalorder %s27, 1
      %p108 = por %p106, %p107
      %p109 = scmp.ne.s32.totalorder %s100, %s101
      %p110 = scmp.eq.s32.totalorder %s27, 0
      %p111 = por %p109, %p110
      %p112 = scmp.ne.s32.totalorder %s100, %s101
      %p113 = scmp.eq.s32.totalorder %s28, 1
      %p114 = por %p112, %p113
      %p116 = scmp.ne.s32.totalorder %s101, %s115
      %p117 = scmp.eq.s32.totalorder %s28, 0
      %p118 = por %p116, %p117
      %s120 = sadd.s32 %s119, 1
      %p123 = scmp.eq.s32.totalorder %s22, 1
      %p124 = scmp.ne.s32.totalorder %s119, %s121
      %p125 = scmp.eq.s32.totalorder %s22, 0
      %p126 = por %p124, %p125
      %p127 = scmp.ne.s32.totalorder %s119, %s121
      %p128 = scmp.eq.s32.totalorder %s27, 1
      %p129 = por %p127, %p128
      %p130 = scmp.ne.s32.totalorder %s121, %s122
      %p131 = scmp.eq.s32.totalorder %s27, 0
      %p132 = por %p130, %p131
      %p133 = scmp.ne.s32.totalorder %s121, %s122
      %p134 = scmp.eq.s32.totalorder %s28, 1
      %p135 = por %p133, %p134
      %p137 = scmp.ne.s32.totalorder %s122, %s136
      %p138 = scmp.eq.s32.totalorder %s28, 0
      %p139 = por %p137, %p138
      %s141 = sadd.s32 %s140, 1
      %p144 = scmp.eq.s32.totalorder %s22, 1
      %p145 = scmp.ne.s32.totalorder %s140, %s142
      %p146 = scmp.eq.s32.totalorder %s22, 0
      %p147 = por %p145, %p146
      %p148 = scmp.ne.s32.totalorder %s140, %s142
      %p149 = scmp.eq.s32.totalorder %s27, 1
      %p150 = por %p148, %p149
      %p151 = scmp.ne.s32.totalorder %s142, %s143
      %p152 = scmp.eq.s32.totalorder %s27, 0
      %p153 = por %p151, %p152
      %p154 = scmp.ne.s32.totalorder %s142, %s143
      %p155 = scmp.eq.s32.totalorder %s28, 1
      %p156 = por %p154, %p155
      %p158 = scmp.ne.s32.totalorder %s143, %s157
      %p159 = scmp.eq.s32.totalorder %s28, 0
      %p160 = por %p158, %p159
      %s162 = sadd.s32 %s161, 1
      %p165 = scmp.eq.s32.totalorder %s22, 1
      %p166 = scmp.ne.s32.totalorder %s161, %s163
      %p167 = scmp.eq.s32.totalorder %s22, 0
      %p168 = por %p166, %p167
      %p169 = scmp.ne.s32.totalorder %s161, %s163
      %p170 = scmp.eq.s32.totalorder %s27, 1
      %p171 = por %p169, %p170
      %p172 = scmp.ne.s32.totalorder %s163, %s164
      %p173 = scmp.eq.s32.totalorder %s27, 0
      %p174 = por %p172, %p173
      %p175 = scmp.ne.s32.totalorder %s163, %s164
      %p176 = scmp.eq.s32.totalorder %s28, 1
      %p177 = por %p175, %p176
      %p179 = scmp.ne.s32.totalorder %s164, %s178
      %p180 = scmp.eq.s32.totalorder %s28, 0
      %p181 = por %p179, %p180
      %s183 = sadd.s32 %s182, 1
      %p186 = scmp.eq.s32.totalorder %s22, 1
      %p187 = scmp.ne.s32.totalorder %s182, %s184
      %p188 = scmp.eq.s32.totalorder %s22, 0
      %p189 = por %p187, %p188
      %p190 = scmp.ne.s32.totalorder %s182, %s184
      %p191 = scmp.eq.s32.totalorder %s27, 1
      %p192 = por %p190, %p191
      %p193 = scmp.ne.s32.totalorder %s184, %s185
      %p194 = scmp.eq.s32.totalorder %s27, 0
      %p195 = por %p193, %p194
      %p196 = scmp.ne.s32.totalorder %s184, %s185
      %p197 = scmp.eq.s32.totalorder %s28, 1
      %p198 = por %p196, %p197
      %p200 = scmp.ne.s32.totalorder %s185, %s199
      %p201 = scmp.eq.s32.totalorder %s28, 0
      %p202 = por %p200, %p201
      %s204 = sadd.s32 %s203, 1
      %p207 = scmp.eq.s32.totalorder %s22, 1
      %p208 = scmp.ne.s32.totalorder %s203, %s205
      %p209 = scmp.eq.s32.totalorder %s22, 0
      %p210 = por %p208, %p209
      %p211 = scmp.ne.s32.totalorder %s203, %s205
      %p212 = scmp.eq.s32.totalorder %s27, 1
      %p213 = por %p211, %p212
      %p214 = scmp.ne.s32.totalorder %s205, %s206
      %p215 = scmp.eq.s32.totalorder %s27, 0
      %p216 = por %p214, %p215
      %p217 = scmp.ne.s32.totalorder %s205, %s206
      %p218 = scmp.eq.s32.totalorder %s28, 1
      %p219 = por %p217, %p218
      %p221 = scmp.ne.s32.totalorder %s206, %s220
      %p222 = scmp.eq.s32.totalorder %s28, 0
      %p223 = por %p221, %p222
      %s225 = sadd.s32 %s224, 1
      %p228 = scmp.eq.s32.totalorder %s22, 1
      %p229 = scmp.ne.s32.totalorder %s224, %s226
      %p230 = scmp.eq.s32.totalorder %s22, 0
      %p231 = por %p229, %p230
      %p232 = scmp.ne.s32.totalorder %s224, %s226
      %p233 = scmp.eq.s32.totalorder %s27, 1
      %p234 = por %p232, %p233
      %p235 = scmp.ne.s32.totalorder %s226, %s227
      %p236 = scmp.eq.s32.totalorder %s27, 0
      %p237 = por %p235, %p236
      %p238 = scmp.ne.s32.totalorder %s226, %s227
      %p239 = scmp.eq.s32.totalorder %s28, 1
      %p240 = por %p238, %p239
      %p242 = scmp.ne.s32.totalorder %s227, %s241
      %p243 = scmp.eq.s32.totalorder %s28, 0
      %p244 = por %p242, %p243
      %s246 = sadd.s32 %s245, 1
      %p249 = scmp.eq.s32.totalorder %s22, 1
      %p250 = scmp.ne.s32.totalorder %s245, %s247
      %p251 = scmp.eq.s32.totalorder %s22, 0
      %p252 = por %p250, %p251
      %p253 = scmp.ne.s32.totalorder %s245, %s247
      %p254 = scmp.eq.s32.totalorder %s27, 1
      %p255 = por %p253, %p254
      %p256 = scmp.ne.s32.totalorder %s247, %s248
      %p257 = scmp.eq.s32.totalorder %s27, 0
      %p258 = por %p256, %p257
      %p259 = scmp.ne.s32.totalorder %s247, %s248
      %p260 = scmp.eq.s32.totalorder %s28, 1
      %p261 = por %p259, %p260
      %p263 = scmp.ne.s32.totalorder %s248, %s262
      %p264 = scmp.eq.s32.totalorder %s28, 0
      %p265 = por %p263, %p264
      %s267 = sadd.s32 %s266, 1
      %p270 = scmp.eq.s32.totalorder %s22, 1
      %p271 = scmp.ne.s32.totalorder %s266, %s268
      %p272 = scmp.eq.s32.totalorder %s22, 0
      %p273 = por %p271, %p272
      %p274 = scmp.ne.s32.totalorder %s266, %s268
      %p275 = scmp.eq.s32.totalorder %s27, 1
      %p276 = por %p274, %p275
      %p277 = scmp.ne.s32.totalorder %s268, %s269
      %p278 = scmp.eq.s32.totalorder %s27, 0
      %p279 = por %p277, %p278
      %p280 = scmp.ne.s32.totalorder %s268, %s269
      %p281 = scmp.eq.s32.totalorder %s28, 1
      %p282 = por %p280, %p281
      %p284 = scmp.ne.s32.totalorder %s269, %s283
      %p285 = scmp.eq.s32.totalorder %s28, 0
      %p286 = por %p284, %p285
      %s288 = sadd.s32 %s287, 1
      %p291 = scmp.eq.s32.totalorder %s22, 1
      %p292 = scmp.ne.s32.totalorder %s287, %s289
      %p293 = scmp.eq.s32.totalorder %s22, 0
      %p294 = por %p292, %p293
      %p295 = scmp.ne.s32.totalorder %s287, %s289
      %p296 = scmp.eq.s32.totalorder %s27, 1
      %p297 = por %p295, %p296
      %p298 = scmp.ne.s32.totalorder %s289, %s290
      %p299 = scmp.eq.s32.totalorder %s27, 0
      %p300 = por %p298, %p299
      %p301 = scmp.ne.s32.totalorder %s289, %s290
      %p302 = scmp.eq.s32.totalorder %s28, 1
      %p303 = por %p301, %p302
      %p305 = scmp.ne.s32.totalorder %s290, %s304
      %p306 = scmp.eq.s32.totalorder %s28, 0
      %p307 = por %p305, %p306
      %s308 = ssub.s32 %s22, %s29
      %p309 = scmp.eq.s32.totalorder %s308, 0
      %s311 = sadd.s32 %s310, 1
      %s312 = scalar_select %p309, %s310, %s311
      %p315 = pneg %p309
      %p316 = scmp.eq.s32.totalorder %s22, 1
      %p317 = por %p315, %p316
      %p318 = scmp.ne.s32.totalorder %s310, %s313
      %p319 = scmp.eq.s32.totalorder %s22, 0
      %p320 = por %p318, %p319
      %p321 = scmp.ne.s32.totalorder %s310, %s313
      %p322 = scmp.eq.s32.totalorder %s27, 1
      %p323 = por %p321, %p322
      %p324 = scmp.ne.s32.totalorder %s313, %s314
      %p325 = scmp.eq.s32.totalorder %s27, 0
      %p326 = por %p324, %p325
      %p327 = scmp.ne.s32.totalorder %s313, %s314
      %p328 = scmp.eq.s32.totalorder %s28, 1
      %p329 = por %p327, %p328
      %p331 = scmp.ne.s32.totalorder %s314, %s330
      %p332 = scmp.eq.s32.totalorder %s28, 0
      %p333 = por %p331, %p332
      %p334 = scmp.le.s32.totalorder 1, %s22
      %p335 = scmp.lt.s32.totalorder %s22, 3
      %p336 = pnand %p334, %p335
      %p337 = pneg %p336
      // Predicated region
      $region9: #{cnn_forward.1} parent=5 // pred_check
        _
      $region10: #{cnn_forward.1} parent=5 // pred_check_branch
        %339 = sbr.rel (%p336) target = $region12
      $region11: #{cnn_forward.1} parent=5 // pred_region
        %s340 = ssub.s32 %s22, 1
        // Predicated region
        $region13: #{cnn_forward.1} parent=11 // pred_check
          %p341 = pneg %p69
        $region14: #{cnn_forward.1} parent=11 // pred_check_branch
          %343 = sbr.rel (%p341) target = $region16
        $region15: #{cnn_forward.1} parent=11 // pred_region
          _
        $region16: #{cnn_forward.1} parent=11 // pred_fallthru
          _
        // Predicated region
        $region17: #{cnn_forward.1} parent=11 // pred_check
          %p344 = pneg %p90
        $region18: #{cnn_forward.1} parent=11 // pred_check_branch
          %346 = sbr.rel (%p344) target = $region20
        $region19: #{cnn_forward.1} parent=11 // pred_region
          _
        $region20: #{cnn_forward.1} parent=11 // pred_fallthru
          _
        // Predicated region
        $region21: #{cnn_forward.1} parent=11 // pred_check
          %p347 = pneg %p111
        $region22: #{cnn_forward.1} parent=11 // pred_check_branch
          %349 = sbr.rel (%p347) target = $region24
        $region23: #{cnn_forward.1} parent=11 // pred_region
          _
        $region24: #{cnn_forward.1} parent=11 // pred_fallthru
          _
        // Predicated region
        $region25: #{cnn_forward.1} parent=11 // pred_check
          %p350 = pneg %p132
        $region26: #{cnn_forward.1} parent=11 // pred_check_branch
          %352 = sbr.rel (%p350) target = $region28
        $region27: #{cnn_forward.1} parent=11 // pred_region
          _
        $region28: #{cnn_forward.1} parent=11 // pred_fallthru
          _
        // Predicated region
        $region29: #{cnn_forward.1} parent=11 // pred_check
          %p353 = pneg %p153
        $region30: #{cnn_forward.1} parent=11 // pred_check_branch
          %355 = sbr.rel (%p353) target = $region32
        $region31: #{cnn_forward.1} parent=11 // pred_region
          _
        $region32: #{cnn_forward.1} parent=11 // pred_fallthru
          _
        // Predicated region
        $region33: #{cnn_forward.1} parent=11 // pred_check
          %p356 = pneg %p174
        $region34: #{cnn_forward.1} parent=11 // pred_check_branch
          %358 = sbr.rel (%p356) target = $region36
        $region35: #{cnn_forward.1} parent=11 // pred_region
          _
        $region36: #{cnn_forward.1} parent=11 // pred_fallthru
          _
        // Predicated region
        $region37: #{cnn_forward.1} parent=11 // pred_check
          %p359 = pneg %p195
        $region38: #{cnn_forward.1} parent=11 // pred_check_branch
          %361 = sbr.rel (%p359) target = $region40
        $region39: #{cnn_forward.1} parent=11 // pred_region
          _
        $region40: #{cnn_forward.1} parent=11 // pred_fallthru
          _
        // Predicated region
        $region41: #{cnn_forward.1} parent=11 // pred_check
          %p362 = pneg %p216
        $region42: #{cnn_forward.1} parent=11 // pred_check_branch
          %364 = sbr.rel (%p362) target = $region44
        $region43: #{cnn_forward.1} parent=11 // pred_region
          _
        $region44: #{cnn_forward.1} parent=11 // pred_fallthru
          _
        // Predicated region
        $region45: #{cnn_forward.1} parent=11 // pred_check
          %p365 = pneg %p237
        $region46: #{cnn_forward.1} parent=11 // pred_check_branch
          %367 = sbr.rel (%p365) target = $region48
        $region47: #{cnn_forward.1} parent=11 // pred_region
          _
        $region48: #{cnn_forward.1} parent=11 // pred_fallthru
          _
        // Predicated region
        $region49: #{cnn_forward.1} parent=11 // pred_check
          %p368 = pneg %p258
        $region50: #{cnn_forward.1} parent=11 // pred_check_branch
          %370 = sbr.rel (%p368) target = $region52
        $region51: #{cnn_forward.1} parent=11 // pred_region
          _
        $region52: #{cnn_forward.1} parent=11 // pred_fallthru
          _
        // Predicated region
        $region53: #{cnn_forward.1} parent=11 // pred_check
          %p371 = pneg %p279
        $region54: #{cnn_forward.1} parent=11 // pred_check_branch
          %373 = sbr.rel (%p371) target = $region56
        $region55: #{cnn_forward.1} parent=11 // pred_region
          _
        $region56: #{cnn_forward.1} parent=11 // pred_fallthru
          _
        // Predicated region
        $region57: #{cnn_forward.1} parent=11 // pred_check
          %p374 = pneg %p300
        $region58: #{cnn_forward.1} parent=11 // pred_check_branch
          %376 = sbr.rel (%p374) target = $region60
        $region59: #{cnn_forward.1} parent=11 // pred_region
          _
        $region60: #{cnn_forward.1} parent=11 // pred_fallthru
          _
      $region12: #{cnn_forward.1} parent=5 // pred_fallthru
        _
      %p377 = scmp.lt.s32.totalorder %s22, 2
      // Predicated region
      $region61: #{cnn_forward.1} parent=5 // pred_check
        %p378 = pneg %p377
      $region62: #{cnn_forward.1} parent=5 // pred_check_branch
        %380 = sbr.rel (%p378) target = $region64
      $region63: #{cnn_forward.1} parent=5 // pred_region
        // Predicated region
        $region65: #{cnn_forward.1} parent=63 // pred_check
          %p381 = pneg %p42
        $region66: #{cnn_forward.1} parent=63 // pred_check_branch
          %383 = sbr.rel (%p381) target = $region68
        $region67: #{cnn_forward.1} parent=63 // pred_region
          %s384 = smul.u32 8, %s22
          %p385 = scmp.lt.s32.totalorder %s384, 15
          %s386 = scalar_select %p385, %s384, 15
          %s387 = smul.addr %s386, 8
          %s388 = smul.addr %s387, 4
          %s389 = scalar_lea.vmem %s0, %s388
          %s390 = smul.u32 8, %s22
        $region68: #{cnn_forward.1} parent=63 // pred_fallthru
          _
      $region64: #{cnn_forward.1} parent=5 // pred_fallthru
        _
      %p391 = scmp.le.s32.totalorder 1, %s22
      %p392 = scmp.lt.s32.totalorder %s22, 3
      %p393 = pnand %p391, %p392
      %p394 = pneg %p393
      // Predicated region
      $region69: #{cnn_forward.1} parent=5 // pred_check
        _
      $region70: #{cnn_forward.1} parent=5 // pred_check_branch
        %396 = sbr.rel (%p393) target = $region72
      $region71: #{cnn_forward.1} parent=5 // pred_region
        %s397 = ssub.s32 %s22, 1
        %s398 = smul.u32 8, %s27
        %p399 = scmp.lt.s32.totalorder %s398, 15
        %s400 = scalar_select %p399, %s398, 15
        %s401 = smul.addr %s400, 8
        %s402 = smul.addr %s401, 4
        %s403 = scalar_lea.vmem %s0, %s402
        %p404 = pneg %p48
        %p405 = pneg %p45
        %p406 = pneg %p69
        %p407 = pneg %p66
        %p408 = pneg %p90
        %p409 = pneg %p87
        %p410 = pneg %p111
        %p411 = pneg %p108
        %p412 = pneg %p132
        %p413 = pneg %p129
        %p414 = pneg %p153
        %p415 = pneg %p150
        %p416 = pneg %p174
        %p417 = pneg %p171
        %p418 = pneg %p195
        %p419 = pneg %p192
        %p420 = pneg %p216
        %p421 = pneg %p213
        %p422 = pneg %p237
        %p423 = pneg %p234
        %p424 = pneg %p258
        %p425 = pneg %p255
        %p426 = pneg %p279
        %p427 = pneg %p276
        %p428 = pneg %p300
        %p429 = pneg %p297
        %p430 = pneg %p326
        %p431 = pneg %p323
        %s432 = sand.u32 %s313, 1
        %s433 = scalar_lea.sflag [#allocation8], %s432
        %s434 = sand.u32 %s313, 1
        %s435 = smul.addr %s434, 8
        %s436 = scalar_lea.vmem [#allocation7], %s435
        %s437 = smul.u32 8, %s27
        %p438 = scmp.lt.s32.totalorder %s437, 15
        %s439 = scalar_select %p438, %s437, 15
        %s440 = smul.addr %s439, 8
        %s441 = smul.addr %s440, 4
        %s442 = scalar_lea.vmem %s0, %s441
        %s443 = smul.u32 8, %s27
        %v445 = vld [vmem:[%s442] sm:$0xf]
        %v446 = vld [vmem:[%s442 + $0x4] sm:$0xf]
        %v447 = vld [vmem:[%s442 + $0x8] sm:$0xf]
        %v448 = vld [vmem:[%s442 + $0xc] sm:$0xf]
        %v449 = vld [vmem:[%s442 + $0x10] sm:$0xf]
        %v450 = vld [vmem:[%s442 + $0x14] sm:$0xf]
        %v451 = vld [vmem:[%s442 + $0x18] sm:$0xf]
        %v452 = vld [vmem:[%s442 + $0x1c] sm:$0xf]
        %v453 = vld [vmem:[%s442 + $0x20] sm:$0xf]
        %v454 = vld [vmem:[%s442 + $0x24] sm:$0xf]
        %v455 = vld [vmem:[%s442 + $0x28] sm:$0xf]
        %v456 = vld [vmem:[%s442 + $0x2c] sm:$0xf]
        %v457 = vld [vmem:[%s442 + $0x30] sm:$0xf]
        %v458 = vld [vmem:[%s442 + $0x34] sm:$0xf]
        %v459 = vld [vmem:[%s442 + $0x38] sm:$0xf]
        %v460 = vld [vmem:[%s442 + $0x3c] sm:$0xf]
        %v461 = vld [vmem:[%s442 + $0x40] sm:$0xf]
        %v462 = vld [vmem:[%s442 + $0x44] sm:$0xf]
        %v463 = vld [vmem:[%s442 + $0x48] sm:$0xf]
        %v464 = vld [vmem:[%s442 + $0x4c] sm:$0xf]
        %v465 = vld [vmem:[%s442 + $0x50] sm:$0xf]
        %v466 = vld [vmem:[%s442 + $0x54] sm:$0xf]
        %v467 = vld [vmem:[%s442 + $0x58] sm:$0xf]
        %v468 = vld [vmem:[%s442 + $0x5c] sm:$0xf]
        %v469 = vld [vmem:[%s442 + $0x60] sm:$0xf]
        %v470 = vld [vmem:[%s442 + $0x64] sm:$0xf]
        %v471 = vld [vmem:[%s442 + $0x68] sm:$0xf]
        %v472 = vld [vmem:[%s442 + $0x6c] sm:$0xf]
        %v473 = vld [vmem:[%s442 + $0x70] sm:$0xf]
        %v474 = vld [vmem:[%s442 + $0x74] sm:$0xf]
        %v475 = vld [vmem:[%s442 + $0x78] sm:$0xf]
        %v476 = vld [vmem:[%s442 + $0x7c] sm:$0xf]
        %v477 = vld [vmem:[%s442 + $0x80] sm:$0xf]
        %v478 = vld [vmem:[%s442 + $0x84] sm:$0xf]
        %v479 = vld [vmem:[%s442 + $0x88] sm:$0xf]
        %v480 = vld [vmem:[%s442 + $0x8c] sm:$0xf]
        %v481 = vld [vmem:[%s442 + $0x90] sm:$0xf]
        %v482 = vld [vmem:[%s442 + $0x94] sm:$0xf]
        %v483 = vld [vmem:[%s442 + $0x98] sm:$0xf]
        %v484 = vld [vmem:[%s442 + $0x9c] sm:$0xf]
        %v485 = vld [vmem:[%s442 + $0xa0] sm:$0xf]
        %v486 = vld [vmem:[%s442 + $0xa4] sm:$0xf]
        %v487 = vld [vmem:[%s442 + $0xa8] sm:$0xf]
        %v488 = vld [vmem:[%s442 + $0xac] sm:$0xf]
        %v489 = vld [vmem:[%s442 + $0xb0] sm:$0xf]
        %v490 = vld [vmem:[%s442 + $0xb4] sm:$0xf]
        %v491 = vld [vmem:[%s442 + $0xb8] sm:$0xf]
        %v492 = vld [vmem:[%s442 + $0xbc] sm:$0xf]
        %v493 = vld [vmem:[%s442 + $0xc0] sm:$0xf]
        %v494 = vld [vmem:[%s442 + $0xc4] sm:$0xf]
        %v495 = vld [vmem:[%s442 + $0xc8] sm:$0xf]
        %v496 = vld [vmem:[%s442 + $0xcc] sm:$0xf]
        %v497 = vld [vmem:[%s442 + $0xd0] sm:$0xf]
        %v498 = vld [vmem:[%s442 + $0xd4] sm:$0xf]
        %v499 = vld [vmem:[%s442 + $0xd8] sm:$0xf]
        %v500 = vld [vmem:[%s442 + $0xdc] sm:$0xf]
        %v501 = vld [vmem:[%s442 + $0xe0] sm:$0xf]
        %v502 = vld [vmem:[%s442 + $0xe4] sm:$0xf]
        %v503 = vld [vmem:[%s442 + $0xe8] sm:$0xf]
        %v504 = vld [vmem:[%s442 + $0xec] sm:$0xf]
        %v505 = vld [vmem:[%s442 + $0xf0] sm:$0xf]
        %v506 = vld [vmem:[%s442 + $0xf4] sm:$0xf]
        %v507 = vld [vmem:[%s442 + $0xf8] sm:$0xf]
        %v508 = vld [vmem:[%s442 + $0xfc] sm:$0xf]
        %v509 = vld [vmem:[%s1] sm:$0xf]
        %v510 = vld [vmem:[%s1 + $0x4] sm:$0xf]
        %v511 = vld [vmem:[%s2] sm:$0x1]
        %v513 = vperm.slane %v511, 0
        %v579 = vunpack.c.l.b16 %v445
        %v580 = vunpack.c.l.b16 %v446
        %v581 = vunpack.c.l.b16 %v447
        %v582 = vunpack.c.l.b16 %v448
        %v583 = vunpack.c.l.b16 %v449
        %v584 = vunpack.c.l.b16 %v450
        %v585 = vunpack.c.l.b16 %v451
        %v586 = vunpack.c.l.b16 %v452
        %v587 = vunpack.c.l.b16 %v453
        %v588 = vunpack.c.l.b16 %v454
        %v589 = vunpack.c.l.b16 %v455
        %v590 = vunpack.c.l.b16 %v456
        %v591 = vunpack.c.l.b16 %v457
        %v592 = vunpack.c.l.b16 %v458
        %v593 = vunpack.c.l.b16 %v459
        %v594 = vunpack.c.l.b16 %v460
        %v595 = vunpack.c.l.b16 %v461
        %v596 = vunpack.c.l.b16 %v462
        %v597 = vunpack.c.l.b16 %v463
        %v598 = vunpack.c.l.b16 %v464
        %v599 = vunpack.c.l.b16 %v465
        %v600 = vunpack.c.l.b16 %v466
        %v601 = vunpack.c.l.b16 %v467
        %v602 = vunpack.c.l.b16 %v468
        %v603 = vunpack.c.l.b16 %v469
        %v604 = vunpack.c.l.b16 %v470
        %v605 = vunpack.c.l.b16 %v471
        %v606 = vunpack.c.l.b16 %v472
        %v607 = vunpack.c.l.b16 %v473
        %v608 = vunpack.c.l.b16 %v474
        %v609 = vunpack.c.l.b16 %v475
        %v610 = vunpack.c.l.b16 %v476
        %v611 = vunpack.c.l.b16 %v477
        %v612 = vunpack.c.l.b16 %v478
        %v613 = vunpack.c.l.b16 %v479
        %v614 = vunpack.c.l.b16 %v480
        %v615 = vunpack.c.l.b16 %v481
        %v616 = vunpack.c.l.b16 %v482
        %v617 = vunpack.c.l.b16 %v483
        %v618 = vunpack.c.l.b16 %v484
        %v619 = vunpack.c.l.b16 %v485
        %v620 = vunpack.c.l.b16 %v486
        %v621 = vunpack.c.l.b16 %v487
        %v622 = vunpack.c.l.b16 %v488
        %v623 = vunpack.c.l.b16 %v489
        %v624 = vunpack.c.l.b16 %v490
        %v625 = vunpack.c.l.b16 %v491
        %v626 = vunpack.c.l.b16 %v492
        %v627 = vunpack.c.l.b16 %v493
        %v628 = vunpack.c.l.b16 %v494
        %v629 = vunpack.c.l.b16 %v495
        %v630 = vunpack.c.l.b16 %v496
        %v631 = vunpack.c.l.b16 %v497
        %v632 = vunpack.c.l.b16 %v498
        %v633 = vunpack.c.l.b16 %v499
        %v634 = vunpack.c.l.b16 %v500
        %v635 = vunpack.c.l.b16 %v501
        %v636 = vunpack.c.l.b16 %v502
        %v637 = vunpack.c.l.b16 %v503
        %v638 = vunpack.c.l.b16 %v504
        %v639 = vunpack.c.l.b16 %v505
        %v640 = vunpack.c.l.b16 %v506
        %v641 = vunpack.c.l.b16 %v507
        %v642 = vunpack.c.l.b16 %v508
        %v643 = vpack.c.b16 %v580, %v579
        %v644 = vpack.c.b16 %v582, %v581
        %v645 = vpack.c.b16 %v584, %v583
        %v646 = vpack.c.b16 %v586, %v585
        %v647 = vpack.c.b16 %v588, %v587
        %v648 = vpack.c.b16 %v590, %v589
        %v649 = vpack.c.b16 %v592, %v591
        %v650 = vpack.c.b16 %v594, %v593
        %v651 = vpack.c.b16 %v596, %v595
        %v652 = vpack.c.b16 %v598, %v597
        %v653 = vpack.c.b16 %v600, %v599
        %v654 = vpack.c.b16 %v602, %v601
        %v655 = vpack.c.b16 %v604, %v603
        %v656 = vpack.c.b16 %v606, %v605
        %v657 = vpack.c.b16 %v608, %v607
        %v658 = vpack.c.b16 %v610, %v609
        %v659 = vpack.c.b16 %v612, %v611
        %v660 = vpack.c.b16 %v614, %v613
        %v661 = vpack.c.b16 %v616, %v615
        %v662 = vpack.c.b16 %v618, %v617
        %v663 = vpack.c.b16 %v620, %v619
        %v664 = vpack.c.b16 %v622, %v621
        %v665 = vpack.c.b16 %v624, %v623
        %v666 = vpack.c.b16 %v626, %v625
        %v667 = vpack.c.b16 %v628, %v627
        %v668 = vpack.c.b16 %v630, %v629
        %v669 = vpack.c.b16 %v632, %v631
        %v670 = vpack.c.b16 %v634, %v633
        %v671 = vpack.c.b16 %v636, %v635
        %v672 = vpack.c.b16 %v638, %v637
        %v673 = vpack.c.b16 %v640, %v639
        %v674 = vpack.c.b16 %v642, %v641
        %v677 = vunpack.c.l.b16 %v509
        %v678 = vunpack.c.l.b16 %v510
        %v679 = vpack.c.b16 %v678, %v677
        %vm681 = vcmask 130048
        %v683 = vsel %vm681, %v643, 0
        %v686 = vsel %vm681, %v644, 0
        %v689 = vsel %vm681, %v645, 0
        %v692 = vsel %vm681, %v646, 0
        %v695 = vsel %vm681, %v647, 0
        %v698 = vsel %vm681, %v648, 0
        %v701 = vsel %vm681, %v649, 0
        %v704 = vsel %vm681, %v650, 0
        %v707 = vsel %vm681, %v651, 0
        %v710 = vsel %vm681, %v652, 0
        %v713 = vsel %vm681, %v653, 0
        %v716 = vsel %vm681, %v654, 0
        %v719 = vsel %vm681, %v655, 0
        %v722 = vsel %vm681, %v656, 0
        %v725 = vsel %vm681, %v657, 0
        %v728 = vsel %vm681, %v658, 0
        %v731 = vsel %vm681, %v659, 0
        %v734 = vsel %vm681, %v660, 0
        %v737 = vsel %vm681, %v661, 0
        %v740 = vsel %vm681, %v662, 0
        %v743 = vsel %vm681, %v663, 0
        %v746 = vsel %vm681, %v664, 0
        %v749 = vsel %vm681, %v665, 0
        %v752 = vsel %vm681, %v666, 0
        %v755 = vsel %vm681, %v667, 0
        %v758 = vsel %vm681, %v668, 0
        %v761 = vsel %vm681, %v669, 0
        %v764 = vsel %vm681, %v670, 0
        %v767 = vsel %vm681, %v671, 0
        %v770 = vsel %vm681, %v672, 0
        %v773 = vsel %vm681, %v673, 0
        %v776 = vsel %vm681, %v674, 0
        %778 = vmatpush.bf16.msra.mxu0 0
        %779 = vmatpush.bf16.msra.mxu0 0
        %780 = vmatpush.bf16.msra.mxu0 0
        %781 = vmatpush.bf16.msra.mxu0 0
        %782 = vmatpush.bf16.msra.mxu0 0
        %783 = vmatpush.bf16.msra.mxu0 0
        %784 = vmatpush.bf16.msra.mxu0 0
        %785 = vmatpush.bf16.msra.mxu0 %v679
        %786 = vmatmul.bf16.gmra.mxu0 %v683
        %v787 = vpop.f32.mrf.mxu0
        %v788 = vadd.f32 %v513, %v787
        %v789 = vpop.f32.mrf.mxu0
        %v790 = vadd.f32 %v513, %v789
        %791 = vmatmul.bf16.gmra.mxu0 %v686
        %v792 = vpop.f32.mrf.mxu0
        %v793 = vadd.f32 %v513, %v792
        %v794 = vpop.f32.mrf.mxu0
        %v795 = vadd.f32 %v513, %v794
        %796 = vmatmul.bf16.gmra.mxu0 %v689
        %v797 = vpop.f32.mrf.mxu0
        %v798 = vadd.f32 %v513, %v797
        %v799 = vpop.f32.mrf.mxu0
        %v800 = vadd.f32 %v513, %v799
        %801 = vmatmul.bf16.gmra.mxu0 %v692
        %v802 = vpop.f32.mrf.mxu0
        %v803 = vadd.f32 %v513, %v802
        %v804 = vpop.f32.mrf.mxu0
        %v805 = vadd.f32 %v513, %v804
        %806 = vmatmul.bf16.gmra.mxu0 %v695
        %v807 = vpop.f32.mrf.mxu0
        %v808 = vadd.f32 %v513, %v807
        %v809 = vpop.f32.mrf.mxu0
        %v810 = vadd.f32 %v513, %v809
        %811 = vmatmul.bf16.gmra.mxu0 %v698
        %v812 = vpop.f32.mrf.mxu0
        %v813 = vadd.f32 %v513, %v812
        %v814 = vpop.f32.mrf.mxu0
        %v815 = vadd.f32 %v513, %v814
        %816 = vmatmul.bf16.gmra.mxu0 %v701
        %v817 = vpop.f32.mrf.mxu0
        %v818 = vadd.f32 %v513, %v817
        %v819 = vpop.f32.mrf.mxu0
        %v820 = vadd.f32 %v513, %v819
        %821 = vmatmul.bf16.gmra.mxu0 %v704
        %v822 = vpop.f32.mrf.mxu0
        %v823 = vadd.f32 %v513, %v822
        %v824 = vpop.f32.mrf.mxu0
        %v825 = vadd.f32 %v513, %v824
        %826 = vmatmul.bf16.gmra.mxu0 %v707
        %v827 = vpop.f32.mrf.mxu0
        %v828 = vadd.f32 %v513, %v827
        %v829 = vpop.f32.mrf.mxu0
        %v830 = vadd.f32 %v513, %v829
        %831 = vmatmul.bf16.gmra.mxu0 %v710
        %v832 = vpop.f32.mrf.mxu0
        %v833 = vadd.f32 %v513, %v832
        %v834 = vpop.f32.mrf.mxu0
        %v835 = vadd.f32 %v513, %v834
        %836 = vmatmul.bf16.gmra.mxu0 %v713
        %v837 = vpop.f32.mrf.mxu0
        %v838 = vadd.f32 %v513, %v837
        %v839 = vpop.f32.mrf.mxu0
        %v840 = vadd.f32 %v513, %v839
        %841 = vmatmul.bf16.gmra.mxu0 %v716
        %v842 = vpop.f32.mrf.mxu0
        %v843 = vadd.f32 %v513, %v842
        %v844 = vpop.f32.mrf.mxu0
        %v845 = vadd.f32 %v513, %v844
        %846 = vmatmul.bf16.gmra.mxu0 %v719
        %v847 = vpop.f32.mrf.mxu0
        %v848 = vadd.f32 %v513, %v847
        %v849 = vpop.f32.mrf.mxu0
        %v850 = vadd.f32 %v513, %v849
        %851 = vmatmul.bf16.gmra.mxu0 %v722
        %v852 = vpop.f32.mrf.mxu0
        %v853 = vadd.f32 %v513, %v852
        %v854 = vpop.f32.mrf.mxu0
        %v855 = vadd.f32 %v513, %v854
        %856 = vmatmul.bf16.gmra.mxu0 %v725
        %v857 = vpop.f32.mrf.mxu0
        %v858 = vadd.f32 %v513, %v857
        %v859 = vpop.f32.mrf.mxu0
        %v860 = vadd.f32 %v513, %v859
        %861 = vmatmul.bf16.gmra.mxu0 %v728
        %v862 = vpop.f32.mrf.mxu0
        %v863 = vadd.f32 %v513, %v862
        %v864 = vpop.f32.mrf.mxu0
        %v865 = vadd.f32 %v513, %v864
        %866 = vmatmul.bf16.gmra.mxu0 %v731
        %v867 = vpop.f32.mrf.mxu0
        %v868 = vadd.f32 %v513, %v867
        %v869 = vpop.f32.mrf.mxu0
        %v870 = vadd.f32 %v513, %v869
        %871 = vmatmul.bf16.gmra.mxu0 %v734
        %v872 = vpop.f32.mrf.mxu0
        %v873 = vadd.f32 %v513, %v872
        %v874 = vpop.f32.mrf.mxu0
        %v875 = vadd.f32 %v513, %v874
        %876 = vmatmul.bf16.gmra.mxu0 %v737
        %v877 = vpop.f32.mrf.mxu0
        %v878 = vadd.f32 %v513, %v877
        %v879 = vpop.f32.mrf.mxu0
        %v880 = vadd.f32 %v513, %v879
        %881 = vmatmul.bf16.gmra.mxu0 %v740
        %v882 = vpop.f32.mrf.mxu0
        %v883 = vadd.f32 %v513, %v882
        %v884 = vpop.f32.mrf.mxu0
        %v885 = vadd.f32 %v513, %v884
        %886 = vmatmul.bf16.gmra.mxu0 %v743
        %v887 = vpop.f32.mrf.mxu0
        %v888 = vadd.f32 %v513, %v887
        %v889 = vpop.f32.mrf.mxu0
        %v890 = vadd.f32 %v513, %v889
        %891 = vmatmul.bf16.gmra.mxu0 %v746
        %v892 = vpop.f32.mrf.mxu0
        %v893 = vadd.f32 %v513, %v892
        %v894 = vpop.f32.mrf.mxu0
        %v895 = vadd.f32 %v513, %v894
        %896 = vmatmul.bf16.gmra.mxu0 %v749
        %v897 = vpop.f32.mrf.mxu0
        %v898 = vadd.f32 %v513, %v897
        %v899 = vpop.f32.mrf.mxu0
        %v900 = vadd.f32 %v513, %v899
        %901 = vmatmul.bf16.gmra.mxu0 %v752
        %v902 = vpop.f32.mrf.mxu0
        %v903 = vadd.f32 %v513, %v902
        %v904 = vpop.f32.mrf.mxu0
        %v905 = vadd.f32 %v513, %v904
        %906 = vmatmul.bf16.gmra.mxu0 %v755
        %v907 = vpop.f32.mrf.mxu0
        %v908 = vadd.f32 %v513, %v907
        %v909 = vpop.f32.mrf.mxu0
        %v910 = vadd.f32 %v513, %v909
        %911 = vmatmul.bf16.gmra.mxu0 %v758
        %v912 = vpop.f32.mrf.mxu0
        %v913 = vadd.f32 %v513, %v912
        %v914 = vpop.f32.mrf.mxu0
        %v915 = vadd.f32 %v513, %v914
        %916 = vmatmul.bf16.gmra.mxu0 %v761
        %v917 = vpop.f32.mrf.mxu0
        %v918 = vadd.f32 %v513, %v917
        %v919 = vpop.f32.mrf.mxu0
        %v920 = vadd.f32 %v513, %v919
        %921 = vmatmul.bf16.gmra.mxu0 %v764
        %v922 = vpop.f32.mrf.mxu0
        %v923 = vadd.f32 %v513, %v922
        %v924 = vpop.f32.mrf.mxu0
        %v925 = vadd.f32 %v513, %v924
        %926 = vmatmul.bf16.gmra.mxu0 %v767
        %v927 = vpop.f32.mrf.mxu0
        %v928 = vadd.f32 %v513, %v927
        %v929 = vpop.f32.mrf.mxu0
        %v930 = vadd.f32 %v513, %v929
        %931 = vmatmul.bf16.gmra.mxu0 %v770
        %v932 = vpop.f32.mrf.mxu0
        %v933 = vadd.f32 %v513, %v932
        %v934 = vpop.f32.mrf.mxu0
        %v935 = vadd.f32 %v513, %v934
        %936 = vmatmul.bf16.gmra.mxu0 %v773
        %v937 = vpop.f32.mrf.mxu0
        %v938 = vadd.f32 %v513, %v937
        %v939 = vpop.f32.mrf.mxu0
        %v940 = vadd.f32 %v513, %v939
        %941 = vmatmul.bf16.gmra.mxu0 %v776
        %v942 = vpop.f32.mrf.mxu0
        %v943 = vadd.f32 %v513, %v942
        %v944 = vpop.f32.mrf.mxu0
        %v945 = vadd.f32 %v513, %v944
        %946 = vdwg.mxu0
        %v947 = vmax.f32 %v788, 0.0
        %v948 = vmax.f32 %v790, 0.0
        %v949 = vmax.f32 %v793, 0.0
        %v950 = vmax.f32 %v795, 0.0
        %v951 = vmax.f32 %v798, 0.0
        %v952 = vmax.f32 %v800, 0.0
        %v953 = vmax.f32 %v803, 0.0
        %v954 = vmax.f32 %v805, 0.0
        %v955 = vmax.f32 %v808, 0.0
        %v956 = vmax.f32 %v810, 0.0
        %v957 = vmax.f32 %v813, 0.0
        %v958 = vmax.f32 %v815, 0.0
        %v959 = vmax.f32 %v818, 0.0
        %v960 = vmax.f32 %v820, 0.0
        %v961 = vmax.f32 %v823, 0.0
        %v962 = vmax.f32 %v825, 0.0
        %v963 = vmax.f32 %v828, 0.0
        %v964 = vmax.f32 %v830, 0.0
        %v965 = vmax.f32 %v833, 0.0
        %v966 = vmax.f32 %v835, 0.0
        %v967 = vmax.f32 %v838, 0.0
        %v968 = vmax.f32 %v840, 0.0
        %v969 = vmax.f32 %v843, 0.0
        %v970 = vmax.f32 %v845, 0.0
        %v971 = vmax.f32 %v848, 0.0
        %v972 = vmax.f32 %v850, 0.0
        %v973 = vmax.f32 %v853, 0.0
        %v974 = vmax.f32 %v855, 0.0
        %v975 = vmax.f32 %v858, 0.0
        %v976 = vmax.f32 %v860, 0.0
        %v977 = vmax.f32 %v863, 0.0
        %v978 = vmax.f32 %v865, 0.0
        %v979 = vmax.f32 %v868, 0.0
        %v980 = vmax.f32 %v870, 0.0
        %v981 = vmax.f32 %v873, 0.0
        %v982 = vmax.f32 %v875, 0.0
        %v983 = vmax.f32 %v878, 0.0
        %v984 = vmax.f32 %v880, 0.0
        %v985 = vmax.f32 %v883, 0.0
        %v986 = vmax.f32 %v885, 0.0
        %v987 = vmax.f32 %v888, 0.0
        %v988 = vmax.f32 %v890, 0.0
        %v989 = vmax.f32 %v893, 0.0
        %v990 = vmax.f32 %v895, 0.0
        %v991 = vmax.f32 %v898, 0.0
        %v992 = vmax.f32 %v900, 0.0
        %v993 = vmax.f32 %v903, 0.0
        %v994 = vmax.f32 %v905, 0.0
        %v995 = vmax.f32 %v908, 0.0
        %v996 = vmax.f32 %v910, 0.0
        %v997 = vmax.f32 %v913, 0.0
        %v998 = vmax.f32 %v915, 0.0
        %v999 = vmax.f32 %v918, 0.0
        %v1000 = vmax.f32 %v920, 0.0
        %v1001 = vmax.f32 %v923, 0.0
        %v1002 = vmax.f32 %v925, 0.0
        %v1003 = vmax.f32 %v928, 0.0
        %v1004 = vmax.f32 %v930, 0.0
        %v1005 = vmax.f32 %v933, 0.0
        %v1006 = vmax.f32 %v935, 0.0
        %v1007 = vmax.f32 %v938, 0.0
        %v1008 = vmax.f32 %v940, 0.0
        %v1009 = vmax.f32 %v943, 0.0
        %v1010 = vmax.f32 %v945, 0.0
        %vm1011 = vcmask 253952
        %1012 = vst.msk [vmem:[#allocation2] sm:$0x1] %vm1011, 0
        %1013 = vst.msk [vmem:[#allocation2 + $0x14] sm:$0x1] %vm1011, 0
        %1014 = vst.msk [vmem:[#allocation2 + $0x28] sm:$0x1] %vm1011, 0
        %1015 = vst.msk [vmem:[#allocation2 + $0x3c] sm:$0x1] %vm1011, 0
        %1016 = vst.msk [vmem:[#allocation2 + $0x50] sm:$0x1] %vm1011, 0
        %1017 = vst.msk [vmem:[#allocation2 + $0x64] sm:$0x1] %vm1011, 0
        %1018 = vst.msk [vmem:[#allocation2 + $0x78] sm:$0x1] %vm1011, 0
        %1019 = vst.msk [vmem:[#allocation2 + $0x8c] sm:$0x1] %vm1011, 0
        %vm1020 = vcmask 254977
        %1021 = vst.msk [vmem:[#allocation2 + $0x10] sm:$0x2] %vm1020, 0
        %1022 = vst.msk [vmem:[#allocation2 + $0x24] sm:$0x2] %vm1020, 0
        %1023 = vst.msk [vmem:[#allocation2 + $0x38] sm:$0x2] %vm1020, 0
        %1024 = vst.msk [vmem:[#allocation2 + $0x4c] sm:$0x2] %vm1020, 0
        %1025 = vst.msk [vmem:[#allocation2 + $0x60] sm:$0x2] %vm1020, 0
        %1026 = vst.msk [vmem:[#allocation2 + $0x74] sm:$0x2] %vm1020, 0
        %1027 = vst.msk [vmem:[#allocation2 + $0x88] sm:$0x2] %vm1020, 0
        %1028 = vst.msk [vmem:[#allocation2 + $0x9c] sm:$0x2] %vm1020, 0
        %vm1029 = vcmask 261120
        %1030 = vst.msk [vmem:[#allocation5] sm:$0xff] %vm1029, %v947
        %1031 = vst.msk [vmem:[#allocation5 + $0x8] sm:$0xff] %vm1029, %v948
        %1032 = vst.msk [vmem:[#allocation5 + $0x10] sm:$0xff] %vm1029, %v949
        %1033 = vst.msk [vmem:[#allocation5 + $0x18] sm:$0xff] %vm1029, %v950
        %1034 = vst.msk [vmem:[#allocation5 + $0x20] sm:$0xff] %vm1029, %v951
        %1035 = vst.msk [vmem:[#allocation5 + $0x28] sm:$0xff] %vm1029, %v952
        %1036 = vst.msk [vmem:[#allocation5 + $0x30] sm:$0xff] %vm1029, %v953
        %1037 = vst.msk [vmem:[#allocation5 + $0x38] sm:$0xff] %vm1029, %v954
        %1038 = vst.msk [vmem:[#allocation5 + $0x40] sm:$0xff] %vm1029, %v955
        %1039 = vst.msk [vmem:[#allocation5 + $0x48] sm:$0xff] %vm1029, %v956
        %1040 = vst.msk [vmem:[#allocation5 + $0x50] sm:$0xff] %vm1029, %v957
        %1041 = vst.msk [vmem:[#allocation5 + $0x58] sm:$0xff] %vm1029, %v958
        %1042 = vst.msk [vmem:[#allocation5 + $0x60] sm:$0xff] %vm1029, %v959
        %1043 = vst.msk [vmem:[#allocation5 + $0x68] sm:$0xff] %vm1029, %v960
        %1044 = vst.msk [vmem:[#allocation5 + $0x70] sm:$0xff] %vm1029, %v961
        %1045 = vst.msk [vmem:[#allocation5 + $0x78] sm:$0xff] %vm1029, %v962
        %1046 = vst.msk [vmem:[#allocation5 + $0x80] sm:$0xff] %vm1029, %v963
        %1047 = vst.msk [vmem:[#allocation5 + $0x88] sm:$0xff] %vm1029, %v964
        %1048 = vst.msk [vmem:[#allocation5 + $0x90] sm:$0xff] %vm1029, %v965
        %1049 = vst.msk [vmem:[#allocation5 + $0x98] sm:$0xff] %vm1029, %v966
        %1050 = vst.msk [vmem:[#allocation5 + $0xa0] sm:$0xff] %vm1029, %v967
        %1051 = vst.msk [vmem:[#allocation5 + $0xa8] sm:$0xff] %vm1029, %v968
        %1052 = vst.msk [vmem:[#allocation5 + $0xb0] sm:$0xff] %vm1029, %v969
        %1053 = vst.msk [vmem:[#allocation5 + $0xb8] sm:$0xff] %vm1029, %v970
        %1054 = vst.msk [vmem:[#allocation5 + $0xc0] sm:$0xff] %vm1029, %v971
        %1055 = vst.msk [vmem:[#allocation5 + $0xc8] sm:$0xff] %vm1029, %v972
        %1056 = vst.msk [vmem:[#allocation5 + $0xd0] sm:$0xff] %vm1029, %v973
        %1057 = vst.msk [vmem:[#allocation5 + $0xd8] sm:$0xff] %vm1029, %v974
        %1058 = vst.msk [vmem:[#allocation5 + $0xe0] sm:$0xff] %vm1029, %v975
        %1059 = vst.msk [vmem:[#allocation5 + $0xe8] sm:$0xff] %vm1029, %v976
        %1060 = vst.msk [vmem:[#allocation5 + $0xf0] sm:$0xff] %vm1029, %v977
        %1061 = vst.msk [vmem:[#allocation5 + $0xf8] sm:$0xff] %vm1029, %v978
        %1062 = vst.msk [vmem:[#allocation5 + $0x100] sm:$0xff] %vm1029, %v979
        %1063 = vst.msk [vmem:[#allocation5 + $0x108] sm:$0xff] %vm1029, %v980
        %1064 = vst.msk [vmem:[#allocation5 + $0x110] sm:$0xff] %vm1029, %v981
        %1065 = vst.msk [vmem:[#allocation5 + $0x118] sm:$0xff] %vm1029, %v982
        %1066 = vst.msk [vmem:[#allocation5 + $0x120] sm:$0xff] %vm1029, %v983
        %1067 = vst.msk [vmem:[#allocation5 + $0x128] sm:$0xff] %vm1029, %v984
        %1068 = vst.msk [vmem:[#allocation5 + $0x130] sm:$0xff] %vm1029, %v985
        %1069 = vst.msk [vmem:[#allocation5 + $0x138] sm:$0xff] %vm1029, %v986
        %1070 = vst.msk [vmem:[#allocation5 + $0x140] sm:$0xff] %vm1029, %v987
        %1071 = vst.msk [vmem:[#allocation5 + $0x148] sm:$0xff] %vm1029, %v988
        %1072 = vst.msk [vmem:[#allocation5 + $0x150] sm:$0xff] %vm1029, %v989
        %1073 = vst.msk [vmem:[#allocation5 + $0x158] sm:$0xff] %vm1029, %v990
        %1074 = vst.msk [vmem:[#allocation5 + $0x160] sm:$0xff] %vm1029, %v991
        %1075 = vst.msk [vmem:[#allocation5 + $0x168] sm:$0xff] %vm1029, %v992
        %1076 = vst.msk [vmem:[#allocation5 + $0x170] sm:$0xff] %vm1029, %v993
        %1077 = vst.msk [vmem:[#allocation5 + $0x178] sm:$0xff] %vm1029, %v994
        %1078 = vst.msk [vmem:[#allocation5 + $0x180] sm:$0xff] %vm1029, %v995
        %1079 = vst.msk [vmem:[#allocation5 + $0x188] sm:$0xff] %vm1029, %v996
        %1080 = vst.msk [vmem:[#allocation5 + $0x190] sm:$0xff] %vm1029, %v997
        %1081 = vst.msk [vmem:[#allocation5 + $0x198] sm:$0xff] %vm1029, %v998
        %1082 = vst.msk [vmem:[#allocation5 + $0x1a0] sm:$0xff] %vm1029, %v999
        %1083 = vst.msk [vmem:[#allocation5 + $0x1a8] sm:$0xff] %vm1029, %v1000
        %1084 = vst.msk [vmem:[#allocation5 + $0x1b0] sm:$0xff] %vm1029, %v1001
        %1085 = vst.msk [vmem:[#allocation5 + $0x1b8] sm:$0xff] %vm1029, %v1002
        %1086 = vst.msk [vmem:[#allocation5 + $0x1c0] sm:$0xff] %vm1029, %v1003
        %1087 = vst.msk [vmem:[#allocation5 + $0x1c8] sm:$0xff] %vm1029, %v1004
        %1088 = vst.msk [vmem:[#allocation5 + $0x1d0] sm:$0xff] %vm1029, %v1005
        %1089 = vst.msk [vmem:[#allocation5 + $0x1d8] sm:$0xff] %vm1029, %v1006
        %1090 = vst.msk [vmem:[#allocation5 + $0x1e0] sm:$0xff] %vm1029, %v1007
        %1091 = vst.msk [vmem:[#allocation5 + $0x1e8] sm:$0xff] %vm1029, %v1008
        %1092 = vst.msk [vmem:[#allocation5 + $0x1f0] sm:$0xff] %vm1029, %v1009
        %1093 = vst.msk [vmem:[#allocation5 + $0x1f8] sm:$0xff] %vm1029, %v1010
        %v1094 = vld [vmem:[#allocation5] ss:$2 sm:$0xff]
        %s1095 = scalar_lea.vmem [#allocation5], 16
        %v1096 = vld [vmem:[%s1095] ss:$2 sm:$0xff]
        %s1097 = scalar_lea.vmem [#allocation5], 32
        %v1098 = vld [vmem:[%s1097] ss:$2 sm:$0xff]
        %s1099 = scalar_lea.vmem [#allocation5], 48
        %v1100 = vld [vmem:[%s1099] ss:$2 sm:$0xff]
        %s1101 = scalar_lea.vmem [#allocation5], 64
        %v1102 = vld [vmem:[%s1101] ss:$2 sm:$0xff]
        %s1103 = scalar_lea.vmem [#allocation5], 80
        %v1104 = vld [vmem:[%s1103] ss:$2 sm:$0xff]
        %s1105 = scalar_lea.vmem [#allocation5], 96
        %v1106 = vld [vmem:[%s1105] ss:$2 sm:$0xff]
        %s1107 = scalar_lea.vmem [#allocation5], 112
        %v1108 = vld [vmem:[%s1107] ss:$2 sm:$0xff]
        %s1109 = scalar_lea.vmem [#allocation5], 128
        %v1110 = vld [vmem:[%s1109] ss:$2 sm:$0xff]
        %s1111 = scalar_lea.vmem [#allocation5], 144
        %v1112 = vld [vmem:[%s1111] ss:$2 sm:$0xff]
        %s1113 = scalar_lea.vmem [#allocation5], 160
        %v1114 = vld [vmem:[%s1113] ss:$2 sm:$0xff]
        %s1115 = scalar_lea.vmem [#allocation5], 176
        %v1116 = vld [vmem:[%s1115] ss:$2 sm:$0xff]
        %s1117 = scalar_lea.vmem [#allocation5], 192
        %v1118 = vld [vmem:[%s1117] ss:$2 sm:$0xff]
        %s1119 = scalar_lea.vmem [#allocation5], 208
        %v1120 = vld [vmem:[%s1119] ss:$2 sm:$0xff]
        %s1121 = scalar_lea.vmem [#allocation5], 224
        %v1122 = vld [vmem:[%s1121] ss:$2 sm:$0xff]
        %s1123 = scalar_lea.vmem [#allocation5], 240
        %v1124 = vld [vmem:[%s1123] ss:$2 sm:$0xff]
        %s1125 = scalar_lea.vmem [#allocation5], 256
        %v1126 = vld [vmem:[%s1125] ss:$2 sm:$0xff]
        %s1127 = scalar_lea.vmem [#allocation5], 272
        %v1128 = vld [vmem:[%s1127] ss:$2 sm:$0xff]
        %s1129 = scalar_lea.vmem [#allocation5], 288
        %v1130 = vld [vmem:[%s1129] ss:$2 sm:$0xff]
        %s1131 = scalar_lea.vmem [#allocation5], 304
        %v1132 = vld [vmem:[%s1131] ss:$2 sm:$0xff]
        %s1133 = scalar_lea.vmem [#allocation5], 320
        %v1134 = vld [vmem:[%s1133] ss:$2 sm:$0xff]
        %s1135 = scalar_lea.vmem [#allocation5], 336
        %v1136 = vld [vmem:[%s1135] ss:$2 sm:$0xff]
        %s1137 = scalar_lea.vmem [#allocation5], 352
        %v1138 = vld [vmem:[%s1137] ss:$2 sm:$0xff]
        %s1139 = scalar_lea.vmem [#allocation5], 368
        %v1140 = vld [vmem:[%s1139] ss:$2 sm:$0xff]
        %s1141 = scalar_lea.vmem [#allocation5], 384
        %v1142 = vld [vmem:[%s1141] ss:$2 sm:$0xff]
        %s1143 = scalar_lea.vmem [#allocation5], 400
        %v1144 = vld [vmem:[%s1143] ss:$2 sm:$0xff]
        %s1145 = scalar_lea.vmem [#allocation5], 416
        %v1146 = vld [vmem:[%s1145] ss:$2 sm:$0xff]
        %s1147 = scalar_lea.vmem [#allocation5], 432
        %v1148 = vld [vmem:[%s1147] ss:$2 sm:$0xff]
        %s1149 = scalar_lea.vmem [#allocation5], 448
        %v1150 = vld [vmem:[%s1149] ss:$2 sm:$0xff]
        %s1151 = scalar_lea.vmem [#allocation5], 464
        %v1152 = vld [vmem:[%s1151] ss:$2 sm:$0xff]
        %s1153 = scalar_lea.vmem [#allocation5], 480
        %v1154 = vld [vmem:[%s1153] ss:$2 sm:$0xff]
        %s1155 = scalar_lea.vmem [#allocation5], 496
        %v1156 = vld [vmem:[%s1155] ss:$2 sm:$0xff]
        %s1157 = scalar_lea.vmem [#allocation5], 1
        %v1158 = vld [vmem:[%s1157] ss:$2 sm:$0xff]
        %s1159 = scalar_lea.vmem [#allocation5], 17
        %v1160 = vld [vmem:[%s1159] ss:$2 sm:$0xff]
        %s1161 = scalar_lea.vmem [#allocation5], 33
        %v1162 = vld [vmem:[%s1161] ss:$2 sm:$0xff]
        %s1163 = scalar_lea.vmem [#allocation5], 49
        %v1164 = vld [vmem:[%s1163] ss:$2 sm:$0xff]
        %s1165 = scalar_lea.vmem [#allocation5], 65
        %v1166 = vld [vmem:[%s1165] ss:$2 sm:$0xff]
        %s1167 = scalar_lea.vmem [#allocation5], 81
        %v1168 = vld [vmem:[%s1167] ss:$2 sm:$0xff]
        %s1169 = scalar_lea.vmem [#allocation5], 97
        %v1170 = vld [vmem:[%s1169] ss:$2 sm:$0xff]
        %s1171 = scalar_lea.vmem [#allocation5], 113
        %v1172 = vld [vmem:[%s1171] ss:$2 sm:$0xff]
        %s1173 = scalar_lea.vmem [#allocation5], 129
        %v1174 = vld [vmem:[%s1173] ss:$2 sm:$0xff]
        %s1175 = scalar_lea.vmem [#allocation5], 145
        %v1176 = vld [vmem:[%s1175] ss:$2 sm:$0xff]
        %s1177 = scalar_lea.vmem [#allocation5], 161
        %v1178 = vld [vmem:[%s1177] ss:$2 sm:$0xff]
        %s1179 = scalar_lea.vmem [#allocation5], 177
        %v1180 = vld [vmem:[%s1179] ss:$2 sm:$0xff]
        %s1181 = scalar_lea.vmem [#allocation5], 193
        %v1182 = vld [vmem:[%s1181] ss:$2 sm:$0xff]
        %s1183 = scalar_lea.vmem [#allocation5], 209
        %v1184 = vld [vmem:[%s1183] ss:$2 sm:$0xff]
        %s1185 = scalar_lea.vmem [#allocation5], 225
        %v1186 = vld [vmem:[%s1185] ss:$2 sm:$0xff]
        %s1187 = scalar_lea.vmem [#allocation5], 241
        %v1188 = vld [vmem:[%s1187] ss:$2 sm:$0xff]
        %s1189 = scalar_lea.vmem [#allocation5], 257
        %v1190 = vld [vmem:[%s1189] ss:$2 sm:$0xff]
        %s1191 = scalar_lea.vmem [#allocation5], 273
        %v1192 = vld [vmem:[%s1191] ss:$2 sm:$0xff]
        %s1193 = scalar_lea.vmem [#allocation5], 289
        %v1194 = vld [vmem:[%s1193] ss:$2 sm:$0xff]
        %s1195 = scalar_lea.vmem [#allocation5], 305
        %v1196 = vld [vmem:[%s1195] ss:$2 sm:$0xff]
        %s1197 = scalar_lea.vmem [#allocation5], 321
        %v1198 = vld [vmem:[%s1197] ss:$2 sm:$0xff]
        %s1199 = scalar_lea.vmem [#allocation5], 337
        %v1200 = vld [vmem:[%s1199] ss:$2 sm:$0xff]
        %s1201 = scalar_lea.vmem [#allocation5], 353
        %v1202 = vld [vmem:[%s1201] ss:$2 sm:$0xff]
        %s1203 = scalar_lea.vmem [#allocation5], 369
        %v1204 = vld [vmem:[%s1203] ss:$2 sm:$0xff]
        %s1205 = scalar_lea.vmem [#allocation5], 385
        %v1206 = vld [vmem:[%s1205] ss:$2 sm:$0xff]
        %s1207 = scalar_lea.vmem [#allocation5], 401
        %v1208 = vld [vmem:[%s1207] ss:$2 sm:$0xff]
        %s1209 = scalar_lea.vmem [#allocation5], 417
        %v1210 = vld [vmem:[%s1209] ss:$2 sm:$0xff]
        %s1211 = scalar_lea.vmem [#allocation5], 433
        %v1212 = vld [vmem:[%s1211] ss:$2 sm:$0xff]
        %s1213 = scalar_lea.vmem [#allocation5], 449
        %v1214 = vld [vmem:[%s1213] ss:$2 sm:$0xff]
        %s1215 = scalar_lea.vmem [#allocation5], 465
        %v1216 = vld [vmem:[%s1215] ss:$2 sm:$0xff]
        %s1217 = scalar_lea.vmem [#allocation5], 481
        %v1218 = vld [vmem:[%s1217] ss:$2 sm:$0xff]
        %s1219 = scalar_lea.vmem [#allocation5], 497
        %v1220 = vld [vmem:[%s1219] ss:$2 sm:$0xff]
        %v1221 = vmax.f32 %v1094, %v1158
        %v1222 = vmax.f32 %v1096, %v1160
        %v1223 = vmax.f32 %v1098, %v1162
        %v1224 = vmax.f32 %v1100, %v1164
        %v1225 = vmax.f32 %v1102, %v1166
        %v1226 = vmax.f32 %v1104, %v1168
        %v1227 = vmax.f32 %v1106, %v1170
        %v1228 = vmax.f32 %v1108, %v1172
        %v1229 = vmax.f32 %v1110, %v1174
        %v1230 = vmax.f32 %v1112, %v1176
        %v1231 = vmax.f32 %v1114, %v1178
        %v1232 = vmax.f32 %v1116, %v1180
        %v1233 = vmax.f32 %v1118, %v1182
        %v1234 = vmax.f32 %v1120, %v1184
        %v1235 = vmax.f32 %v1122, %v1186
        %v1236 = vmax.f32 %v1124, %v1188
        %v1237 = vmax.f32 %v1126, %v1190
        %v1238 = vmax.f32 %v1128, %v1192
        %v1239 = vmax.f32 %v1130, %v1194
        %v1240 = vmax.f32 %v1132, %v1196
        %v1241 = vmax.f32 %v1134, %v1198
        %v1242 = vmax.f32 %v1136, %v1200
        %v1243 = vmax.f32 %v1138, %v1202
        %v1244 = vmax.f32 %v1140, %v1204
        %v1245 = vmax.f32 %v1142, %v1206
        %v1246 = vmax.f32 %v1144, %v1208
        %v1247 = vmax.f32 %v1146, %v1210
        %v1248 = vmax.f32 %v1148, %v1212
        %v1249 = vmax.f32 %v1150, %v1214
        %v1250 = vmax.f32 %v1152, %v1216
        %v1251 = vmax.f32 %v1154, %v1218
        %v1252 = vmax.f32 %v1156, %v1220
        %v1253 = vpack.c.bf16 %v1221, %v1221
        %v1254 = vpack.c.bf16 %v1222, %v1222
        %v1255 = vpack.c.bf16 %v1223, %v1223
        %v1256 = vpack.c.bf16 %v1224, %v1224
        %v1257 = vpack.c.bf16 %v1225, %v1225
        %v1258 = vpack.c.bf16 %v1226, %v1226
        %v1259 = vpack.c.bf16 %v1227, %v1227
        %v1260 = vpack.c.bf16 %v1228, %v1228
        %v1261 = vpack.c.bf16 %v1229, %v1229
        %v1262 = vpack.c.bf16 %v1230, %v1230
        %v1263 = vpack.c.bf16 %v1231, %v1231
        %v1264 = vpack.c.bf16 %v1232, %v1232
        %v1265 = vpack.c.bf16 %v1233, %v1233
        %v1266 = vpack.c.bf16 %v1234, %v1234
        %v1267 = vpack.c.bf16 %v1235, %v1235
        %v1268 = vpack.c.bf16 %v1236, %v1236
        %v1269 = vpack.c.bf16 %v1237, %v1237
        %v1270 = vpack.c.bf16 %v1238, %v1238
        %v1271 = vpack.c.bf16 %v1239, %v1239
        %v1272 = vpack.c.bf16 %v1240, %v1240
        %v1273 = vpack.c.bf16 %v1241, %v1241
        %v1274 = vpack.c.bf16 %v1242, %v1242
        %v1275 = vpack.c.bf16 %v1243, %v1243
        %v1276 = vpack.c.bf16 %v1244, %v1244
        %v1277 = vpack.c.bf16 %v1245, %v1245
        %v1278 = vpack.c.bf16 %v1246, %v1246
        %v1279 = vpack.c.bf16 %v1247, %v1247
        %v1280 = vpack.c.bf16 %v1248, %v1248
        %v1281 = vpack.c.bf16 %v1249, %v1249
        %v1282 = vpack.c.bf16 %v1250, %v1250
        %v1283 = vpack.c.bf16 %v1251, %v1251
        %v1284 = vpack.c.bf16 %v1252, %v1252
        %vm1317 = vcmask 1040384
        %vm1318 = vcmask 1044484
        %vm1319 = vmor %vm1317, %vm1318
        %v1320 = vrot.slane %v1253, 7
        %v1321 = vrot.slane %v1320, 4
        %v1322 = vrot.slane %v1254, 7
        %v1323 = vsel %vm1319, %v1321, %v1322
        %v1324 = vrot.slane %v1322, 4
        %v1325 = vrot.slane %v1255, 7
        %v1326 = vsel %vm1319, %v1324, %v1325
        %v1327 = vrot.slane %v1325, 4
        %v1328 = vrot.slane %v1256, 7
        %v1329 = vsel %vm1319, %v1327, %v1328
        %v1330 = vrot.slane %v1328, 4
        %v1331 = vrot.slane %v1257, 7
        %v1332 = vrot.slane %v1331, 4
        %v1333 = vrot.slane %v1258, 7
        %v1334 = vsel %vm1319, %v1332, %v1333
        %v1335 = vrot.slane %v1333, 4
        %v1336 = vrot.slane %v1259, 7
        %v1337 = vsel %vm1319, %v1335, %v1336
        %v1338 = vrot.slane %v1336, 4
        %v1339 = vrot.slane %v1260, 7
        %v1340 = vsel %vm1319, %v1338, %v1339
        %v1341 = vrot.slane %v1339, 4
        %v1342 = vrot.slane %v1261, 7
        %v1343 = vrot.slane %v1342, 4
        %v1344 = vrot.slane %v1262, 7
        %v1345 = vsel %vm1319, %v1343, %v1344
        %v1346 = vrot.slane %v1344, 4
        %v1347 = vrot.slane %v1263, 7
        %v1348 = vsel %vm1319, %v1346, %v1347
        %v1349 = vrot.slane %v1347, 4
        %v1350 = vrot.slane %v1264, 7
        %v1351 = vsel %vm1319, %v1349, %v1350
        %v1352 = vrot.slane %v1350, 4
        %v1353 = vrot.slane %v1265, 7
        %v1354 = vrot.slane %v1353, 4
        %v1355 = vrot.slane %v1266, 7
        %v1356 = vsel %vm1319, %v1354, %v1355
        %v1357 = vrot.slane %v1355, 4
        %v1358 = vrot.slane %v1267, 7
        %v1359 = vsel %vm1319, %v1357, %v1358
        %v1360 = vrot.slane %v1358, 4
        %v1361 = vrot.slane %v1268, 7
        %v1362 = vsel %vm1319, %v1360, %v1361
        %v1363 = vrot.slane %v1361, 4
        %v1364 = vrot.slane %v1269, 7
        %v1365 = vrot.slane %v1364, 4
        %v1366 = vrot.slane %v1270, 7
        %v1367 = vsel %vm1319, %v1365, %v1366
        %v1368 = vrot.slane %v1366, 4
        %v1369 = vrot.slane %v1271, 7
        %v1370 = vsel %vm1319, %v1368, %v1369
        %v1371 = vrot.slane %v1369, 4
        %v1372 = vrot.slane %v1272, 7
        %v1373 = vsel %vm1319, %v1371, %v1372
        %v1374 = vrot.slane %v1372, 4
        %v1375 = vrot.slane %v1273, 7
        %v1376 = vrot.slane %v1375, 4
        %v1377 = vrot.slane %v1274, 7
        %v1378 = vsel %vm1319, %v1376, %v1377
        %v1379 = vrot.slane %v1377, 4
        %v1380 = vrot.slane %v1275, 7
        %v1381 = vsel %vm1319, %v1379, %v1380
        %v1382 = vrot.slane %v1380, 4
        %v1383 = vrot.slane %v1276, 7
        %v1384 = vsel %vm1319, %v1382, %v1383
        %v1385 = vrot.slane %v1383, 4
        %v1386 = vrot.slane %v1277, 7
        %v1387 = vrot.slane %v1386, 4
        %v1388 = vrot.slane %v1278, 7
        %v1389 = vsel %vm1319, %v1387, %v1388
        %v1390 = vrot.slane %v1388, 4
        %v1391 = vrot.slane %v1279, 7
        %v1392 = vsel %vm1319, %v1390, %v1391
        %v1393 = vrot.slane %v1391, 4
        %v1394 = vrot.slane %v1280, 7
        %v1395 = vsel %vm1319, %v1393, %v1394
        %v1396 = vrot.slane %v1394, 4
        %v1397 = vrot.slane %v1281, 7
        %v1398 = vrot.slane %v1397, 4
        %v1399 = vrot.slane %v1282, 7
        %v1400 = vsel %vm1319, %v1398, %v1399
        %v1401 = vrot.slane %v1399, 4
        %v1402 = vrot.slane %v1283, 7
        %v1403 = vsel %vm1319, %v1401, %v1402
        %v1404 = vrot.slane %v1402, 4
        %v1405 = vrot.slane %v1284, 7
        %v1406 = vsel %vm1319, %v1404, %v1405
        %v1407 = vrot.slane %v1405, 4
        %vm1448 = vcmask 257025
        %1449 = vst.msk [vmem:[#allocation2] sm:$0xe] %vm1448, %v1320
        %vm1450 = vcmask 257024
        %1451 = vst.msk [vmem:[#allocation2 + $0x4] sm:$0xf] %vm1450, %v1323
        %1452 = vst.msk [vmem:[#allocation2 + $0x8] sm:$0xf] %vm1450, %v1326
        %1453 = vst.msk [vmem:[#allocation2 + $0xc] sm:$0xf] %vm1450, %v1329
        %1454 = vst.msk [vmem:[#allocation2 + $0x10] sm:$0x1] %vm1011, %v1330
        %1455 = vst.msk [vmem:[#allocation2 + $0x14] sm:$0xe] %vm1448, %v1331
        %1456 = vst.msk [vmem:[#allocation2 + $0x18] sm:$0xf] %vm1450, %v1334
        %1457 = vst.msk [vmem:[#allocation2 + $0x1c] sm:$0xf] %vm1450, %v1337
        %1458 = vst.msk [vmem:[#allocation2 + $0x20] sm:$0xf] %vm1450, %v1340
        %1459 = vst.msk [vmem:[#allocation2 + $0x24] sm:$0x1] %vm1011, %v1341
        %1460 = vst.msk [vmem:[#allocation2 + $0x28] sm:$0xe] %vm1448, %v1342
        %1461 = vst.msk [vmem:[#allocation2 + $0x2c] sm:$0xf] %vm1450, %v1345
        %1462 = vst.msk [vmem:[#allocation2 + $0x30] sm:$0xf] %vm1450, %v1348
        %1463 = vst.msk [vmem:[#allocation2 + $0x34] sm:$0xf] %vm1450, %v1351
        %1464 = vst.msk [vmem:[#allocation2 + $0x38] sm:$0x1] %vm1011, %v1352
        %1465 = vst.msk [vmem:[#allocation2 + $0x3c] sm:$0xe] %vm1448, %v1353
        %1466 = vst.msk [vmem:[#allocation2 + $0x40] sm:$0xf] %vm1450, %v1356
        %1467 = vst.msk [vmem:[#allocation2 + $0x44] sm:$0xf] %vm1450, %v1359
        %1468 = vst.msk [vmem:[#allocation2 + $0x48] sm:$0xf] %vm1450, %v1362
        %1469 = vst.msk [vmem:[#allocation2 + $0x4c] sm:$0x1] %vm1011, %v1363
        %1470 = vst.msk [vmem:[#allocation2 + $0x50] sm:$0xe] %vm1448, %v1364
        %1471 = vst.msk [vmem:[#allocation2 + $0x54] sm:$0xf] %vm1450, %v1367
        %1472 = vst.msk [vmem:[#allocation2 + $0x58] sm:$0xf] %vm1450, %v1370
        %1473 = vst.msk [vmem:[#allocation2 + $0x5c] sm:$0xf] %vm1450, %v1373
        %1474 = vst.msk [vmem:[#allocation2 + $0x60] sm:$0x1] %vm1011, %v1374
        %1475 = vst.msk [vmem:[#allocation2 + $0x64] sm:$0xe] %vm1448, %v1375
        %1476 = vst.msk [vmem:[#allocation2 + $0x68] sm:$0xf] %vm1450, %v1378
        %1477 = vst.msk [vmem:[#allocation2 + $0x6c] sm:$0xf] %vm1450, %v1381
        %1478 = vst.msk [vmem:[#allocation2 + $0x70] sm:$0xf] %vm1450, %v1384
        %1479 = vst.msk [vmem:[#allocation2 + $0x74] sm:$0x1] %vm1011, %v1385
        %1480 = vst.msk [vmem:[#allocation2 + $0x78] sm:$0xe] %vm1448, %v1386
        %1481 = vst.msk [vmem:[#allocation2 + $0x7c] sm:$0xf] %vm1450, %v1389
        %1482 = vst.msk [vmem:[#allocation2 + $0x80] sm:$0xf] %vm1450, %v1392
        %1483 = vst.msk [vmem:[#allocation2 + $0x84] sm:$0xf] %vm1450, %v1395
        %1484 = vst.msk [vmem:[#allocation2 + $0x88] sm:$0x1] %vm1011, %v1396
        %1485 = vst.msk [vmem:[#allocation2 + $0x8c] sm:$0xe] %vm1448, %v1397
        %1486 = vst.msk [vmem:[#allocation2 + $0x90] sm:$0xf] %vm1450, %v1400
        %1487 = vst.msk [vmem:[#allocation2 + $0x94] sm:$0xf] %vm1450, %v1403
        %1488 = vst.msk [vmem:[#allocation2 + $0x98] sm:$0xf] %vm1450, %v1406
        %1489 = vst.msk [vmem:[#allocation2 + $0x9c] sm:$0x1] %vm1011, %v1407
        %v1490 = vld [vmem:[#allocation2] sm:$0xf]
        %v1491 = vld [vmem:[#allocation2 + $0x4] sm:$0xf]
        %v1492 = vld [vmem:[#allocation2 + $0x8] sm:$0xf]
        %v1493 = vld [vmem:[#allocation2 + $0xc] sm:$0xf]
        %v1494 = vld [vmem:[#allocation2 + $0x14] sm:$0xf]
        %v1495 = vld [vmem:[#allocation2 + $0x18] sm:$0xf]
        %v1496 = vld [vmem:[#allocation2 + $0x1c] sm:$0xf]
        %v1497 = vld [vmem:[#allocation2 + $0x20] sm:$0xf]
        %v1498 = vld [vmem:[#allocation2 + $0x28] sm:$0xf]
        %v1499 = vld [vmem:[#allocation2 + $0x2c] sm:$0xf]
        %v1500 = vld [vmem:[#allocation2 + $0x30] sm:$0xf]
        %v1501 = vld [vmem:[#allocation2 + $0x34] sm:$0xf]
        %v1502 = vld [vmem:[#allocation2 + $0x3c] sm:$0xf]
        %v1503 = vld [vmem:[#allocation2 + $0x40] sm:$0xf]
        %v1504 = vld [vmem:[#allocation2 + $0x44] sm:$0xf]
        %v1505 = vld [vmem:[#allocation2 + $0x48] sm:$0xf]
        %v1506 = vld [vmem:[#allocation2 + $0x50] sm:$0xf]
        %v1507 = vld [vmem:[#allocation2 + $0x54] sm:$0xf]
        %v1508 = vld [vmem:[#allocation2 + $0x58] sm:$0xf]
        %v1509 = vld [vmem:[#allocation2 + $0x5c] sm:$0xf]
        %v1510 = vld [vmem:[#allocation2 + $0x64] sm:$0xf]
        %v1511 = vld [vmem:[#allocation2 + $0x68] sm:$0xf]
        %v1512 = vld [vmem:[#allocation2 + $0x6c] sm:$0xf]
        %v1513 = vld [vmem:[#allocation2 + $0x70] sm:$0xf]
        %v1514 = vld [vmem:[#allocation2 + $0x78] sm:$0xf]
        %v1515 = vld [vmem:[#allocation2 + $0x7c] sm:$0xf]
        %v1516 = vld [vmem:[#allocation2 + $0x80] sm:$0xf]
        %v1517 = vld [vmem:[#allocation2 + $0x84] sm:$0xf]
        %v1518 = vld [vmem:[#allocation2 + $0x8c] sm:$0xf]
        %v1519 = vld [vmem:[#allocation2 + $0x90] sm:$0xf]
        %v1520 = vld [vmem:[#allocation2 + $0x94] sm:$0xf]
        %v1521 = vld [vmem:[#allocation2 + $0x98] sm:$0xf]
        %v1522 = vld [vmem:[%s3] sm:$0xf]
        %v1523 = vld [vmem:[%s3 + $0x4] sm:$0xf]
        %v1524 = vld [vmem:[%s3 + $0x8] sm:$0xf]
        %v1525 = vld [vmem:[%s3 + $0xc] sm:$0xf]
        %v1526 = vld [vmem:[#allocation2 + $0x10] sm:$0x1]
        %v1527 = vld [vmem:[#allocation2 + $0x24] sm:$0x1]
        %v1528 = vld [vmem:[#allocation2 + $0x38] sm:$0x1]
        %v1529 = vld [vmem:[#allocation2 + $0x4c] sm:$0x1]
        %v1530 = vld [vmem:[#allocation2 + $0x60] sm:$0x1]
        %v1531 = vld [vmem:[#allocation2 + $0x74] sm:$0x1]
        %v1532 = vld [vmem:[#allocation2 + $0x88] sm:$0x1]
        %v1533 = vld [vmem:[#allocation2 + $0x9c] sm:$0x1]
        %vm1534 = vsmask.f32 3328
        %vm1535 = vsmask.f32 7440
        %vm1536 = vmor %vm1534, %vm1535
        %v1538 = vshrl.u32 %v1490, 16
        %v1540 = vrot.slane %v1538, 4
        %v1541 = vshll.u32 %v1490, 16
        %v1543 = vrot.slane %v1541, 5
        %v1544 = vor.u32 %v1540, %v1543
        %v1545 = vrot.slane %v1544, 4
        %v1547 = vshll.u32 %v1491, 16
        %v1549 = vrot.slane %v1547, 5
        %v1550 = vsel %vm1536, %v1545, %v1549
        %v1551 = vshrl.u32 %v1491, 16
        %v1553 = vrot.slane %v1551, 4
        %v1554 = vor.u32 %v1553, %v1549
        %v1555 = vrot.slane %v1554, 4
        %v1557 = vshll.u32 %v1492, 16
        %v1559 = vrot.slane %v1557, 5
        %v1560 = vsel %vm1536, %v1555, %v1559
        %v1561 = vshrl.u32 %v1492, 16
        %v1563 = vrot.slane %v1561, 4
        %v1564 = vor.u32 %v1563, %v1559
        %v1565 = vrot.slane %v1564, 4
        %v1567 = vshll.u32 %v1493, 16
        %v1569 = vrot.slane %v1567, 5
        %v1570 = vsel %vm1536, %v1565, %v1569
        %v1571 = vshrl.u32 %v1493, 16
        %v1573 = vrot.slane %v1571, 4
        %v1574 = vor.u32 %v1573, %v1569
        %v1575 = vrot.slane %v1574, 4
        %v1577 = vshll.u32 %v1526, 16
        %v1579 = vrot.slane %v1577, 5
        %v1580 = vsel %vm1536, %v1575, %v1579
        %v1582 = vshrl.u32 %v1494, 16
        %v1584 = vrot.slane %v1582, 4
        %v1585 = vshll.u32 %v1494, 16
        %v1587 = vrot.slane %v1585, 5
        %v1588 = vor.u32 %v1584, %v1587
        %v1589 = vrot.slane %v1588, 4
        %v1591 = vshll.u32 %v1495, 16
        %v1593 = vrot.slane %v1591, 5
        %v1594 = vsel %vm1536, %v1589, %v1593
        %v1595 = vshrl.u32 %v1495, 16
        %v1597 = vrot.slane %v1595, 4
        %v1598 = vor.u32 %v1597, %v1593
        %v1599 = vrot.slane %v1598, 4
        %v1601 = vshll.u32 %v1496, 16
        %v1603 = vrot.slane %v1601, 5
        %v1604 = vsel %vm1536, %v1599, %v1603
        %v1605 = vshrl.u32 %v1496, 16
        %v1607 = vrot.slane %v1605, 4
        %v1608 = vor.u32 %v1607, %v1603
        %v1609 = vrot.slane %v1608, 4
        %v1611 = vshll.u32 %v1497, 16
        %v1613 = vrot.slane %v1611, 5
        %v1614 = vsel %vm1536, %v1609, %v1613
        %v1615 = vshrl.u32 %v1497, 16
        %v1617 = vrot.slane %v1615, 4
        %v1618 = vor.u32 %v1617, %v1613
        %v1619 = vrot.slane %v1618, 4
        %v1621 = vshll.u32 %v1527, 16
        %v1623 = vrot.slane %v1621, 5
        %v1624 = vsel %vm1536, %v1619, %v1623
        %v1626 = vshrl.u32 %v1498, 16
        %v1628 = vrot.slane %v1626, 4
        %v1629 = vshll.u32 %v1498, 16
        %v1631 = vrot.slane %v1629, 5
        %v1632 = vor.u32 %v1628, %v1631
        %v1633 = vrot.slane %v1632, 4
        %v1635 = vshll.u32 %v1499, 16
        %v1637 = vrot.slane %v1635, 5
        %v1638 = vsel %vm1536, %v1633, %v1637
        %v1639 = vshrl.u32 %v1499, 16
        %v1641 = vrot.slane %v1639, 4
        %v1642 = vor.u32 %v1641, %v1637
        %v1643 = vrot.slane %v1642, 4
        %v1645 = vshll.u32 %v1500, 16
        %v1647 = vrot.slane %v1645, 5
        %v1648 = vsel %vm1536, %v1643, %v1647
        %v1649 = vshrl.u32 %v1500, 16
        %v1651 = vrot.slane %v1649, 4
        %v1652 = vor.u32 %v1651, %v1647
        %v1653 = vrot.slane %v1652, 4
        %v1655 = vshll.u32 %v1501, 16
        %v1657 = vrot.slane %v1655, 5
        %v1658 = vsel %vm1536, %v1653, %v1657
        %v1659 = vshrl.u32 %v1501, 16
        %v1661 = vrot.slane %v1659, 4
        %v1662 = vor.u32 %v1661, %v1657
        %v1663 = vrot.slane %v1662, 4
        %v1665 = vshll.u32 %v1528, 16
        %v1667 = vrot.slane %v1665, 5
        %v1668 = vsel %vm1536, %v1663, %v1667
        %v1670 = vshrl.u32 %v1502, 16
        %v1672 = vrot.slane %v1670, 4
        %v1673 = vshll.u32 %v1502, 16
        %v1675 = vrot.slane %v1673, 5
        %v1676 = vor.u32 %v1672, %v1675
        %v1677 = vrot.slane %v1676, 4
        %v1679 = vshll.u32 %v1503, 16
        %v1681 = vrot.slane %v1679, 5
        %v1682 = vsel %vm1536, %v1677, %v1681
        %v1683 = vshrl.u32 %v1503, 16
        %v1685 = vrot.slane %v1683, 4
        %v1686 = vor.u32 %v1685, %v1681
        %v1687 = vrot.slane %v1686, 4
        %v1689 = vshll.u32 %v1504, 16
        %v1691 = vrot.slane %v1689, 5
        %v1692 = vsel %vm1536, %v1687, %v1691
        %v1693 = vshrl.u32 %v1504, 16
        %v1695 = vrot.slane %v1693, 4
        %v1696 = vor.u32 %v1695, %v1691
        %v1697 = vrot.slane %v1696, 4
        %v1699 = vshll.u32 %v1505, 16
        %v1701 = vrot.slane %v1699, 5
        %v1702 = vsel %vm1536, %v1697, %v1701
        %v1703 = vshrl.u32 %v1505, 16
        %v1705 = vrot.slane %v1703, 4
        %v1706 = vor.u32 %v1705, %v1701
        %v1707 = vrot.slane %v1706, 4
        %v1709 = vshll.u32 %v1529, 16
        %v1711 = vrot.slane %v1709, 5
        %v1712 = vsel %vm1536, %v1707, %v1711
        %v1714 = vshrl.u32 %v1506, 16
        %v1716 = vrot.slane %v1714, 4
        %v1717 = vshll.u32 %v1506, 16
        %v1719 = vrot.slane %v1717, 5
        %v1720 = vor.u32 %v1716, %v1719
        %v1721 = vrot.slane %v1720, 4
        %v1723 = vshll.u32 %v1507, 16
        %v1725 = vrot.slane %v1723, 5
        %v1726 = vsel %vm1536, %v1721, %v1725
        %v1727 = vshrl.u32 %v1507, 16
        %v1729 = vrot.slane %v1727, 4
        %v1730 = vor.u32 %v1729, %v1725
        %v1731 = vrot.slane %v1730, 4
        %v1733 = vshll.u32 %v1508, 16
        %v1735 = vrot.slane %v1733, 5
        %v1736 = vsel %vm1536, %v1731, %v1735
        %v1737 = vshrl.u32 %v1508, 16
        %v1739 = vrot.slane %v1737, 4
        %v1740 = vor.u32 %v1739, %v1735
        %v1741 = vrot.slane %v1740, 4
        %v1743 = vshll.u32 %v1509, 16
        %v1745 = vrot.slane %v1743, 5
        %v1746 = vsel %vm1536, %v1741, %v1745
        %v1747 = vshrl.u32 %v1509, 16
        %v1749 = vrot.slane %v1747, 4
        %v1750 = vor.u32 %v1749, %v1745
        %v1751 = vrot.slane %v1750, 4
        %v1753 = vshll.u32 %v1530, 16
        %v1755 = vrot.slane %v1753, 5
        %v1756 = vsel %vm1536, %v1751, %v1755
        %v1758 = vshrl.u32 %v1510, 16
        %v1760 = vrot.slane %v1758, 4
        %v1761 = vshll.u32 %v1510, 16
        %v1763 = vrot.slane %v1761, 5
        %v1764 = vor.u32 %v1760, %v1763
        %v1765 = vrot.slane %v1764, 4
        %v1767 = vshll.u32 %v1511, 16
        %v1769 = vrot.slane %v1767, 5
        %v1770 = vsel %vm1536, %v1765, %v1769
        %v1771 = vshrl.u32 %v1511, 16
        %v1773 = vrot.slane %v1771, 4
        %v1774 = vor.u32 %v1773, %v1769
        %v1775 = vrot.slane %v1774, 4
        %v1777 = vshll.u32 %v1512, 16
        %v1779 = vrot.slane %v1777, 5
        %v1780 = vsel %vm1536, %v1775, %v1779
        %v1781 = vshrl.u32 %v1512, 16
        %v1783 = vrot.slane %v1781, 4
        %v1784 = vor.u32 %v1783, %v1779
        %v1785 = vrot.slane %v1784, 4
        %v1787 = vshll.u32 %v1513, 16
        %v1789 = vrot.slane %v1787, 5
        %v1790 = vsel %vm1536, %v1785, %v1789
        %v1791 = vshrl.u32 %v1513, 16
        %v1793 = vrot.slane %v1791, 4
        %v1794 = vor.u32 %v1793, %v1789
        %v1795 = vrot.slane %v1794, 4
        %v1797 = vshll.u32 %v1531, 16
        %v1799 = vrot.slane %v1797, 5
        %v1800 = vsel %vm1536, %v1795, %v1799
        %v1802 = vshrl.u32 %v1514, 16
        %v1804 = vrot.slane %v1802, 4
        %v1805 = vshll.u32 %v1514, 16
        %v1807 = vrot.slane %v1805, 5
        %v1808 = vor.u32 %v1804, %v1807
        %v1809 = vrot.slane %v1808, 4
        %v1811 = vshll.u32 %v1515, 16
        %v1813 = vrot.slane %v1811, 5
        %v1814 = vsel %vm1536, %v1809, %v1813
        %v1815 = vshrl.u32 %v1515, 16
        %v1817 = vrot.slane %v1815, 4
        %v1818 = vor.u32 %v1817, %v1813
        %v1819 = vrot.slane %v1818, 4
        %v1821 = vshll.u32 %v1516, 16
        %v1823 = vrot.slane %v1821, 5
        %v1824 = vsel %vm1536, %v1819, %v1823
        %v1825 = vshrl.u32 %v1516, 16
        %v1827 = vrot.slane %v1825, 4
        %v1828 = vor.u32 %v1827, %v1823
        %v1829 = vrot.slane %v1828, 4
        %v1831 = vshll.u32 %v1517, 16
        %v1833 = vrot.slane %v1831, 5
        %v1834 = vsel %vm1536, %v1829, %v1833
        %v1835 = vshrl.u32 %v1517, 16
        %v1837 = vrot.slane %v1835, 4
        %v1838 = vor.u32 %v1837, %v1833
        %v1839 = vrot.slane %v1838, 4
        %v1841 = vshll.u32 %v1532, 16
        %v1843 = vrot.slane %v1841, 5
        %v1844 = vsel %vm1536, %v1839, %v1843
        %v1846 = vshrl.u32 %v1518, 16
        %v1848 = vrot.slane %v1846, 4
        %v1849 = vshll.u32 %v1518, 16
        %v1851 = vrot.slane %v1849, 5
        %v1852 = vor.u32 %v1848, %v1851
        %v1853 = vrot.slane %v1852, 4
        %v1855 = vshll.u32 %v1519, 16
        %v1857 = vrot.slane %v1855, 5
        %v1858 = vsel %vm1536, %v1853, %v1857
        %v1859 = vshrl.u32 %v1519, 16
        %v1861 = vrot.slane %v1859, 4
        %v1862 = vor.u32 %v1861, %v1857
        %v1863 = vrot.slane %v1862, 4
        %v1865 = vshll.u32 %v1520, 16
        %v1867 = vrot.slane %v1865, 5
        %v1868 = vsel %vm1536, %v1863, %v1867
        %v1869 = vshrl.u32 %v1520, 16
        %v1871 = vrot.slane %v1869, 4
        %v1872 = vor.u32 %v1871, %v1867
        %v1873 = vrot.slane %v1872, 4
        %v1875 = vshll.u32 %v1521, 16
        %v1877 = vrot.slane %v1875, 5
        %v1878 = vsel %vm1536, %v1873, %v1877
        %v1879 = vshrl.u32 %v1521, 16
        %v1881 = vrot.slane %v1879, 4
        %v1882 = vor.u32 %v1881, %v1877
        %v1883 = vrot.slane %v1882, 4
        %v1885 = vshll.u32 %v1533, 16
        %v1887 = vrot.slane %v1885, 5
        %v1888 = vsel %vm1536, %v1883, %v1887
        %s1889 = scalar_lea.vmem %s3, 16
        %v1890 = vld [vmem:[%s1889] sm:$0xf]
        %v1891 = vld [vmem:[%s1889 + $0x4] sm:$0xf]
        %v1892 = vld [vmem:[%s1889 + $0x8] sm:$0xf]
        %v1893 = vld [vmem:[%s1889 + $0xc] sm:$0xf]
        %v1894 = vunpack.c.l.b16 %v1550
        %v1895 = vunpack.c.l.b16 %v1560
        %v1896 = vunpack.c.l.b16 %v1570
        %v1897 = vunpack.c.l.b16 %v1580
        %v1898 = vunpack.c.l.b16 %v1594
        %v1899 = vunpack.c.l.b16 %v1604
        %v1900 = vunpack.c.l.b16 %v1614
        %v1901 = vunpack.c.l.b16 %v1624
        %v1902 = vunpack.c.l.b16 %v1638
        %v1903 = vunpack.c.l.b16 %v1648
        %v1904 = vunpack.c.l.b16 %v1658
        %v1905 = vunpack.c.l.b16 %v1668
        %v1906 = vunpack.c.l.b16 %v1682
        %v1907 = vunpack.c.l.b16 %v1692
        %v1908 = vunpack.c.l.b16 %v1702
        %v1909 = vunpack.c.l.b16 %v1712
        %v1910 = vunpack.c.l.b16 %v1726
        %v1911 = vunpack.c.l.b16 %v1736
        %v1912 = vunpack.c.l.b16 %v1746
        %v1913 = vunpack.c.l.b16 %v1756
        %v1914 = vunpack.c.l.b16 %v1770
        %v1915 = vunpack.c.l.b16 %v1780
        %v1916 = vunpack.c.l.b16 %v1790
        %v1917 = vunpack.c.l.b16 %v1800
        %v1918 = vunpack.c.l.b16 %v1814
        %v1919 = vunpack.c.l.b16 %v1824
        %v1920 = vunpack.c.l.b16 %v1834
        %v1921 = vunpack.c.l.b16 %v1844
        %v1922 = vunpack.c.l.b16 %v1858
        %v1923 = vunpack.c.l.b16 %v1868
        %v1924 = vunpack.c.l.b16 %v1878
        %v1925 = vunpack.c.l.b16 %v1888
        %v1926 = vpack.c.b16 %v1895, %v1894
        %v1927 = vpack.c.b16 %v1897, %v1896
        %v1928 = vpack.c.b16 %v1899, %v1898
        %v1929 = vpack.c.b16 %v1901, %v1900
        %v1930 = vpack.c.b16 %v1903, %v1902
        %v1931 = vpack.c.b16 %v1905, %v1904
        %v1932 = vpack.c.b16 %v1907, %v1906
        %v1933 = vpack.c.b16 %v1909, %v1908
        %v1934 = vpack.c.b16 %v1911, %v1910
        %v1935 = vpack.c.b16 %v1913, %v1912
        %v1936 = vpack.c.b16 %v1915, %v1914
        %v1937 = vpack.c.b16 %v1917, %v1916
        %v1938 = vpack.c.b16 %v1919, %v1918
        %v1939 = vpack.c.b16 %v1921, %v1920
        %v1940 = vpack.c.b16 %v1923, %v1922
        %v1941 = vpack.c.b16 %v1925, %v1924
        %v1946 = vunpack.c.l.b16 %v1890
        %v1947 = vunpack.c.l.b16 %v1891
        %v1948 = vunpack.c.l.b16 %v1892
        %v1949 = vunpack.c.l.b16 %v1893
        %v1950 = vpack.c.b16 %v1947, %v1946
        %v1951 = vpack.c.b16 %v1949, %v1948
        %v1955 = vsel %vm1029, %v1926, 0
        %v1958 = vsel %vm1029, %v1927, 0
        %v1961 = vsel %vm1029, %v1928, 0
        %v1964 = vsel %vm1029, %v1929, 0
        %v1967 = vsel %vm1029, %v1930, 0
        %v1970 = vsel %vm1029, %v1931, 0
        %v1973 = vsel %vm1029, %v1932, 0
        %v1976 = vsel %vm1029, %v1933, 0
        %v1979 = vsel %vm1029, %v1934, 0
        %v1982 = vsel %vm1029, %v1935, 0
        %v1985 = vsel %vm1029, %v1936, 0
        %v1988 = vsel %vm1029, %v1937, 0
        %v1991 = vsel %vm1029, %v1938, 0
        %v1994 = vsel %vm1029, %v1939, 0
        %v1997 = vsel %vm1029, %v1940, 0
        %v2000 = vsel %vm1029, %v1941, 0
        %2002 = vmatpush.bf16.msra.mxu0 0
        %2003 = vmatpush.bf16.msra.mxu0 0
        %2004 = vmatpush.bf16.msra.mxu0 0
        %2005 = vmatpush.bf16.msra.mxu0 0
        %2006 = vmatpush.bf16.msra.mxu0 0
        %2007 = vmatpush.bf16.msra.mxu0 0
        %2008 = vmatpush.bf16.msra.mxu0 %v1951
        %2009 = vmatpush.bf16.msra.mxu0 %v1950
        %2010 = vmatmul.bf16.gmra.mxu0 %v1955
        %v2011 = vpop.f32.mrf.mxu0
        %v2012 = vadd.f32 0.0, %v2011
        %v2013 = vpop.f32.mrf.mxu0
        %v2014 = vadd.f32 0.0, %v2013
        %2015 = vmatmul.bf16.gmra.mxu0 %v1958
        %v2016 = vpop.f32.mrf.mxu0
        %v2017 = vadd.f32 0.0, %v2016
        %v2018 = vpop.f32.mrf.mxu0
        %v2019 = vadd.f32 0.0, %v2018
        %2020 = vmatmul.bf16.gmra.mxu0 %v1961
        %v2021 = vpop.f32.mrf.mxu0
        %v2022 = vadd.f32 0.0, %v2021
        %v2023 = vpop.f32.mrf.mxu0
        %v2024 = vadd.f32 0.0, %v2023
        %2025 = vmatmul.bf16.gmra.mxu0 %v1964
        %v2026 = vpop.f32.mrf.mxu0
        %v2027 = vadd.f32 0.0, %v2026
        %v2028 = vpop.f32.mrf.mxu0
        %v2029 = vadd.f32 0.0, %v2028
        %2030 = vmatmul.bf16.gmra.mxu0 %v1967
        %v2031 = vpop.f32.mrf.mxu0
        %v2032 = vadd.f32 0.0, %v2031
        %v2033 = vpop.f32.mrf.mxu0
        %v2034 = vadd.f32 0.0, %v2033
        %2035 = vmatmul.bf16.gmra.mxu0 %v1970
        %v2036 = vpop.f32.mrf.mxu0
        %v2037 = vadd.f32 0.0, %v2036
        %v2038 = vpop.f32.mrf.mxu0
        %v2039 = vadd.f32 0.0, %v2038
        %2040 = vmatmul.bf16.gmra.mxu0 %v1973
        %v2041 = vpop.f32.mrf.mxu0
        %v2042 = vadd.f32 0.0, %v2041
        %v2043 = vpop.f32.mrf.mxu0
        %v2044 = vadd.f32 0.0, %v2043
        %2045 = vmatmul.bf16.gmra.mxu0 %v1976
        %v2046 = vpop.f32.mrf.mxu0
        %v2047 = vadd.f32 0.0, %v2046
        %v2048 = vpop.f32.mrf.mxu0
        %v2049 = vadd.f32 0.0, %v2048
        %2050 = vmatmul.bf16.gmra.mxu0 %v1979
        %v2051 = vpop.f32.mrf.mxu0
        %v2052 = vadd.f32 0.0, %v2051
        %v2053 = vpop.f32.mrf.mxu0
        %v2054 = vadd.f32 0.0, %v2053
        %2055 = vmatmul.bf16.gmra.mxu0 %v1982
        %v2056 = vpop.f32.mrf.mxu0
        %v2057 = vadd.f32 0.0, %v2056
        %v2058 = vpop.f32.mrf.mxu0
        %v2059 = vadd.f32 0.0, %v2058
        %2060 = vmatmul.bf16.gmra.mxu0 %v1985
        %v2061 = vpop.f32.mrf.mxu0
        %v2062 = vadd.f32 0.0, %v2061
        %v2063 = vpop.f32.mrf.mxu0
        %v2064 = vadd.f32 0.0, %v2063
        %2065 = vmatmul.bf16.gmra.mxu0 %v1988
        %v2066 = vpop.f32.mrf.mxu0
        %v2067 = vadd.f32 0.0, %v2066
        %v2068 = vpop.f32.mrf.mxu0
        %v2069 = vadd.f32 0.0, %v2068
        %2070 = vmatmul.bf16.gmra.mxu0 %v1991
        %v2071 = vpop.f32.mrf.mxu0
        %v2072 = vadd.f32 0.0, %v2071
        %v2073 = vpop.f32.mrf.mxu0
        %v2074 = vadd.f32 0.0, %v2073
        %2075 = vmatmul.bf16.gmra.mxu0 %v1994
        %v2076 = vpop.f32.mrf.mxu0
        %v2077 = vadd.f32 0.0, %v2076
        %v2078 = vpop.f32.mrf.mxu0
        %v2079 = vadd.f32 0.0, %v2078
        %2080 = vmatmul.bf16.gmra.mxu0 %v1997
        %v2081 = vpop.f32.mrf.mxu0
        %v2082 = vadd.f32 0.0, %v2081
        %v2083 = vpop.f32.mrf.mxu0
        %v2084 = vadd.f32 0.0, %v2083
        %2085 = vmatmul.bf16.gmra.mxu0 %v2000
        %v2086 = vpop.f32.mrf.mxu0
        %v2087 = vadd.f32 0.0, %v2086
        %v2088 = vpop.f32.mrf.mxu0
        %v2089 = vadd.f32 0.0, %v2088
        %2090 = vdwg.mxu0
        %v2123 = vunpack.c.l.b16 %v1490
        %v2124 = vunpack.c.l.b16 %v1491
        %v2125 = vunpack.c.l.b16 %v1492
        %v2126 = vunpack.c.l.b16 %v1493
        %v2127 = vunpack.c.l.b16 %v1494
        %v2128 = vunpack.c.l.b16 %v1495
        %v2129 = vunpack.c.l.b16 %v1496
        %v2130 = vunpack.c.l.b16 %v1497
        %v2131 = vunpack.c.l.b16 %v1498
        %v2132 = vunpack.c.l.b16 %v1499
        %v2133 = vunpack.c.l.b16 %v1500
        %v2134 = vunpack.c.l.b16 %v1501
        %v2135 = vunpack.c.l.b16 %v1502
        %v2136 = vunpack.c.l.b16 %v1503
        %v2137 = vunpack.c.l.b16 %v1504
        %v2138 = vunpack.c.l.b16 %v1505
        %v2139 = vunpack.c.l.b16 %v1506
        %v2140 = vunpack.c.l.b16 %v1507
        %v2141 = vunpack.c.l.b16 %v1508
        %v2142 = vunpack.c.l.b16 %v1509
        %v2143 = vunpack.c.l.b16 %v1510
        %v2144 = vunpack.c.l.b16 %v1511
        %v2145 = vunpack.c.l.b16 %v1512
        %v2146 = vunpack.c.l.b16 %v1513
        %v2147 = vunpack.c.l.b16 %v1514
        %v2148 = vunpack.c.l.b16 %v1515
        %v2149 = vunpack.c.l.b16 %v1516
        %v2150 = vunpack.c.l.b16 %v1517
        %v2151 = vunpack.c.l.b16 %v1518
        %v2152 = vunpack.c.l.b16 %v1519
        %v2153 = vunpack.c.l.b16 %v1520
        %v2154 = vunpack.c.l.b16 %v1521
        %v2155 = vpack.c.b16 %v2124, %v2123
        %v2156 = vpack.c.b16 %v2126, %v2125
        %v2157 = vpack.c.b16 %v2128, %v2127
        %v2158 = vpack.c.b16 %v2130, %v2129
        %v2159 = vpack.c.b16 %v2132, %v2131
        %v2160 = vpack.c.b16 %v2134, %v2133
        %v2161 = vpack.c.b16 %v2136, %v2135
        %v2162 = vpack.c.b16 %v2138, %v2137
        %v2163 = vpack.c.b16 %v2140, %v2139
        %v2164 = vpack.c.b16 %v2142, %v2141
        %v2165 = vpack.c.b16 %v2144, %v2143
        %v2166 = vpack.c.b16 %v2146, %v2145
        %v2167 = vpack.c.b16 %v2148, %v2147
        %v2168 = vpack.c.b16 %v2150, %v2149
        %v2169 = vpack.c.b16 %v2152, %v2151
        %v2170 = vpack.c.b16 %v2154, %v2153
        %v2175 = vunpack.c.l.b16 %v1522
        %v2176 = vunpack.c.l.b16 %v1523
        %v2177 = vunpack.c.l.b16 %v1524
        %v2178 = vunpack.c.l.b16 %v1525
        %v2179 = vpack.c.b16 %v2176, %v2175
        %v2180 = vpack.c.b16 %v2178, %v2177
        %v2184 = vsel %vm1029, %v2155, 0
        %v2187 = vsel %vm1029, %v2156, 0
        %v2190 = vsel %vm1029, %v2157, 0
        %v2193 = vsel %vm1029, %v2158, 0
        %v2196 = vsel %vm1029, %v2159, 0
        %v2199 = vsel %vm1029, %v2160, 0
        %v2202 = vsel %vm1029, %v2161, 0
        %v2205 = vsel %vm1029, %v2162, 0
        %v2208 = vsel %vm1029, %v2163, 0
        %v2211 = vsel %vm1029, %v2164, 0
        %v2214 = vsel %vm1029, %v2165, 0
        %v2217 = vsel %vm1029, %v2166, 0
        %v2220 = vsel %vm1029, %v2167, 0
        %v2223 = vsel %vm1029, %v2168, 0
        %v2226 = vsel %vm1029, %v2169, 0
        %v2229 = vsel %vm1029, %v2170, 0
        %2231 = vmatpush.bf16.msra.mxu0 0
        %2232 = vmatpush.bf16.msra.mxu0 0
        %2233 = vmatpush.bf16.msra.mxu0 0
        %2234 = vmatpush.bf16.msra.mxu0 0
        %2235 = vmatpush.bf16.msra.mxu0 0
        %2236 = vmatpush.bf16.msra.mxu0 0
        %2237 = vmatpush.bf16.msra.mxu0 %v2180
        %2238 = vmatpush.bf16.msra.mxu0 %v2179
        %2239 = vmatmul.bf16.gmra.mxu0 %v2184
        %v2240 = vpop.f32.mrf.mxu0
        %v2241 = vadd.f32 %v2012, %v2240
        %v2242 = vpop.f32.mrf.mxu0
        %v2243 = vadd.f32 %v2014, %v2242
        %2244 = vmatmul.bf16.gmra.mxu0 %v2187
        %v2245 = vpop.f32.mrf.mxu0
        %v2246 = vadd.f32 %v2017, %v2245
        %v2247 = vpop.f32.mrf.mxu0
        %v2248 = vadd.f32 %v2019, %v2247
        %2249 = vmatmul.bf16.gmra.mxu0 %v2190
        %v2250 = vpop.f32.mrf.mxu0
        %v2251 = vadd.f32 %v2022, %v2250
        %v2252 = vpop.f32.mrf.mxu0
        %v2253 = vadd.f32 %v2024, %v2252
        %2254 = vmatmul.bf16.gmra.mxu0 %v2193
        %v2255 = vpop.f32.mrf.mxu0
        %v2256 = vadd.f32 %v2027, %v2255
        %v2257 = vpop.f32.mrf.mxu0
        %v2258 = vadd.f32 %v2029, %v2257
        %2259 = vmatmul.bf16.gmra.mxu0 %v2196
        %v2260 = vpop.f32.mrf.mxu0
        %v2261 = vadd.f32 %v2032, %v2260
        %v2262 = vpop.f32.mrf.mxu0
        %v2263 = vadd.f32 %v2034, %v2262
        %2264 = vmatmul.bf16.gmra.mxu0 %v2199
        %v2265 = vpop.f32.mrf.mxu0
        %v2266 = vadd.f32 %v2037, %v2265
        %v2267 = vpop.f32.mrf.mxu0
        %v2268 = vadd.f32 %v2039, %v2267
        %2269 = vmatmul.bf16.gmra.mxu0 %v2202
        %v2270 = vpop.f32.mrf.mxu0
        %v2271 = vadd.f32 %v2042, %v2270
        %v2272 = vpop.f32.mrf.mxu0
        %v2273 = vadd.f32 %v2044, %v2272
        %2274 = vmatmul.bf16.gmra.mxu0 %v2205
        %v2275 = vpop.f32.mrf.mxu0
        %v2276 = vadd.f32 %v2047, %v2275
        %v2277 = vpop.f32.mrf.mxu0
        %v2278 = vadd.f32 %v2049, %v2277
        %2279 = vmatmul.bf16.gmra.mxu0 %v2208
        %v2280 = vpop.f32.mrf.mxu0
        %v2281 = vadd.f32 %v2052, %v2280
        %v2282 = vpop.f32.mrf.mxu0
        %v2283 = vadd.f32 %v2054, %v2282
        %2284 = vmatmul.bf16.gmra.mxu0 %v2211
        %v2285 = vpop.f32.mrf.mxu0
        %v2286 = vadd.f32 %v2057, %v2285
        %v2287 = vpop.f32.mrf.mxu0
        %v2288 = vadd.f32 %v2059, %v2287
        %2289 = vmatmul.bf16.gmra.mxu0 %v2214
        %v2290 = vpop.f32.mrf.mxu0
        %v2291 = vadd.f32 %v2062, %v2290
        %v2292 = vpop.f32.mrf.mxu0
        %v2293 = vadd.f32 %v2064, %v2292
        %2294 = vmatmul.bf16.gmra.mxu0 %v2217
        %v2295 = vpop.f32.mrf.mxu0
        %v2296 = vadd.f32 %v2067, %v2295
        %v2297 = vpop.f32.mrf.mxu0
        %v2298 = vadd.f32 %v2069, %v2297
        %2299 = vmatmul.bf16.gmra.mxu0 %v2220
        %v2300 = vpop.f32.mrf.mxu0
        %v2301 = vadd.f32 %v2072, %v2300
        %v2302 = vpop.f32.mrf.mxu0
        %v2303 = vadd.f32 %v2074, %v2302
        %2304 = vmatmul.bf16.gmra.mxu0 %v2223
        %v2305 = vpop.f32.mrf.mxu0
        %v2306 = vadd.f32 %v2077, %v2305
        %v2307 = vpop.f32.mrf.mxu0
        %v2308 = vadd.f32 %v2079, %v2307
        %2309 = vmatmul.bf16.gmra.mxu0 %v2226
        %v2310 = vpop.f32.mrf.mxu0
        %v2311 = vadd.f32 %v2082, %v2310
        %v2312 = vpop.f32.mrf.mxu0
        %v2313 = vadd.f32 %v2084, %v2312
        %2314 = vmatmul.bf16.gmra.mxu0 %v2229
        %v2315 = vpop.f32.mrf.mxu0
        %v2316 = vadd.f32 %v2087, %v2315
        %v2317 = vpop.f32.mrf.mxu0
        %v2318 = vadd.f32 %v2089, %v2317
        %2319 = vdwg.mxu0
        %v2320 = vld [vmem:[#allocation2] sm:$0xe]
        %v2321 = vld [vmem:[#allocation2 + $0x14] sm:$0xe]
        %v2322 = vld [vmem:[#allocation2 + $0x28] sm:$0xe]
        %v2323 = vld [vmem:[#allocation2 + $0x3c] sm:$0xe]
        %v2324 = vld [vmem:[#allocation2 + $0x50] sm:$0xe]
        %v2325 = vld [vmem:[#allocation2 + $0x64] sm:$0xe]
        %v2326 = vld [vmem:[#allocation2 + $0x78] sm:$0xe]
        %v2327 = vld [vmem:[#allocation2 + $0x8c] sm:$0xe]
        %vm2344 = vcmask 1042432
        %vm2345 = vcmask 1046532
        %vm2346 = vmor %vm2344, %vm2345
        %v2347 = vrot.slane %v2320, 5
        %v2348 = vrot.slane %v2347, 4
        %v2349 = vrot.slane %v1491, 5
        %v2350 = vsel %vm2346, %v2348, %v2349
        %v2351 = vrot.slane %v2349, 4
        %v2352 = vrot.slane %v1492, 5
        %v2353 = vsel %vm2346, %v2351, %v2352
        %v2354 = vrot.slane %v2352, 4
        %v2355 = vrot.slane %v1493, 5
        %v2356 = vsel %vm2346, %v2354, %v2355
        %v2357 = vrot.slane %v2355, 4
        %v2358 = vrot.slane %v1526, 5
        %v2359 = vsel %vm2346, %v2357, %v2358
        %v2360 = vrot.slane %v2321, 5
        %v2361 = vrot.slane %v2360, 4
        %v2362 = vrot.slane %v1495, 5
        %v2363 = vsel %vm2346, %v2361, %v2362
        %v2364 = vrot.slane %v2362, 4
        %v2365 = vrot.slane %v1496, 5
        %v2366 = vsel %vm2346, %v2364, %v2365
        %v2367 = vrot.slane %v2365, 4
        %v2368 = vrot.slane %v1497, 5
        %v2369 = vsel %vm2346, %v2367, %v2368
        %v2370 = vrot.slane %v2368, 4
        %v2371 = vrot.slane %v1527, 5
        %v2372 = vsel %vm2346, %v2370, %v2371
        %v2373 = vrot.slane %v2322, 5
        %v2374 = vrot.slane %v2373, 4
        %v2375 = vrot.slane %v1499, 5
        %v2376 = vsel %vm2346, %v2374, %v2375
        %v2377 = vrot.slane %v2375, 4
        %v2378 = vrot.slane %v1500, 5
        %v2379 = vsel %vm2346, %v2377, %v2378
        %v2380 = vrot.slane %v2378, 4
        %v2381 = vrot.slane %v1501, 5
        %v2382 = vsel %vm2346, %v2380, %v2381
        %v2383 = vrot.slane %v2381, 4
        %v2384 = vrot.slane %v1528, 5
        %v2385 = vsel %vm2346, %v2383, %v2384
        %v2386 = vrot.slane %v2323, 5
        %v2387 = vrot.slane %v2386, 4
        %v2388 = vrot.slane %v1503, 5
        %v2389 = vsel %vm2346, %v2387, %v2388
        %v2390 = vrot.slane %v2388, 4
        %v2391 = vrot.slane %v1504, 5
        %v2392 = vsel %vm2346, %v2390, %v2391
        %v2393 = vrot.slane %v2391, 4
        %v2394 = vrot.slane %v1505, 5
        %v2395 = vsel %vm2346, %v2393, %v2394
        %v2396 = vrot.slane %v2394, 4
        %v2397 = vrot.slane %v1529, 5
        %v2398 = vsel %vm2346, %v2396, %v2397
        %v2399 = vrot.slane %v2324, 5
        %v2400 = vrot.slane %v2399, 4
        %v2401 = vrot.slane %v1507, 5
        %v2402 = vsel %vm2346, %v2400, %v2401
        %v2403 = vrot.slane %v2401, 4
        %v2404 = vrot.slane %v1508, 5
        %v2405 = vsel %vm2346, %v2403, %v2404
        %v2406 = vrot.slane %v2404, 4
        %v2407 = vrot.slane %v1509, 5
        %v2408 = vsel %vm2346, %v2406, %v2407
        %v2409 = vrot.slane %v2407, 4
        %v2410 = vrot.slane %v1530, 5
        %v2411 = vsel %vm2346, %v2409, %v2410
        %v2412 = vrot.slane %v2325, 5
        %v2413 = vrot.slane %v2412, 4
        %v2414 = vrot.slane %v1511, 5
        %v2415 = vsel %vm2346, %v2413, %v2414
        %v2416 = vrot.slane %v2414, 4
        %v2417 = vrot.slane %v1512, 5
        %v2418 = vsel %vm2346, %v2416, %v2417
        %v2419 = vrot.slane %v2417, 4
        %v2420 = vrot.slane %v1513, 5
        %v2421 = vsel %vm2346, %v2419, %v2420
        %v2422 = vrot.slane %v2420, 4
        %v2423 = vrot.slane %v1531, 5
        %v2424 = vsel %vm2346, %v2422, %v2423
        %v2425 = vrot.slane %v2326, 5
        %v2426 = vrot.slane %v2425, 4
        %v2427 = vrot.slane %v1515, 5
        %v2428 = vsel %vm2346, %v2426, %v2427
        %v2429 = vrot.slane %v2427, 4
        %v2430 = vrot.slane %v1516, 5
        %v2431 = vsel %vm2346, %v2429, %v2430
        %v2432 = vrot.slane %v2430, 4
        %v2433 = vrot.slane %v1517, 5
        %v2434 = vsel %vm2346, %v2432, %v2433
        %v2435 = vrot.slane %v2433, 4
        %v2436 = vrot.slane %v1532, 5
        %v2437 = vsel %vm2346, %v2435, %v2436
        %v2438 = vrot.slane %v2327, 5
        %v2439 = vrot.slane %v2438, 4
        %v2440 = vrot.slane %v1519, 5
        %v2441 = vsel %vm2346, %v2439, %v2440
        %v2442 = vrot.slane %v2440, 4
        %v2443 = vrot.slane %v1520, 5
        %v2444 = vsel %vm2346, %v2442, %v2443
        %v2445 = vrot.slane %v2443, 4
        %v2446 = vrot.slane %v1521, 5
        %v2447 = vsel %vm2346, %v2445, %v2446
        %v2448 = vrot.slane %v2446, 4
        %v2449 = vrot.slane %v1533, 5
        %v2450 = vsel %vm2346, %v2448, %v2449
        %s2451 = scalar_lea.vmem %s3, 32
        %v2452 = vld [vmem:[%s2451] sm:$0xf]
        %v2453 = vld [vmem:[%s2451 + $0x4] sm:$0xf]
        %v2454 = vld [vmem:[%s2451 + $0x8] sm:$0xf]
        %v2455 = vld [vmem:[%s2451 + $0xc] sm:$0xf]
        %v2456 = vunpack.c.l.b16 %v2350
        %v2457 = vunpack.c.l.b16 %v2353
        %v2458 = vunpack.c.l.b16 %v2356
        %v2459 = vunpack.c.l.b16 %v2359
        %v2460 = vunpack.c.l.b16 %v2363
        %v2461 = vunpack.c.l.b16 %v2366
        %v2462 = vunpack.c.l.b16 %v2369
        %v2463 = vunpack.c.l.b16 %v2372
        %v2464 = vunpack.c.l.b16 %v2376
        %v2465 = vunpack.c.l.b16 %v2379
        %v2466 = vunpack.c.l.b16 %v2382
        %v2467 = vunpack.c.l.b16 %v2385
        %v2468 = vunpack.c.l.b16 %v2389
        %v2469 = vunpack.c.l.b16 %v2392
        %v2470 = vunpack.c.l.b16 %v2395
        %v2471 = vunpack.c.l.b16 %v2398
        %v2472 = vunpack.c.l.b16 %v2402
        %v2473 = vunpack.c.l.b16 %v2405
        %v2474 = vunpack.c.l.b16 %v2408
        %v2475 = vunpack.c.l.b16 %v2411
        %v2476 = vunpack.c.l.b16 %v2415
        %v2477 = vunpack.c.l.b16 %v2418
        %v2478 = vunpack.c.l.b16 %v2421
        %v2479 = vunpack.c.l.b16 %v2424
        %v2480 = vunpack.c.l.b16 %v2428
        %v2481 = vunpack.c.l.b16 %v2431
        %v2482 = vunpack.c.l.b16 %v2434
        %v2483 = vunpack.c.l.b16 %v2437
        %v2484 = vunpack.c.l.b16 %v2441
        %v2485 = vunpack.c.l.b16 %v2444
        %v2486 = vunpack.c.l.b16 %v2447
        %v2487 = vunpack.c.l.b16 %v2450
        %v2488 = vpack.c.b16 %v2457, %v2456
        %v2489 = vpack.c.b16 %v2459, %v2458
        %v2490 = vpack.c.b16 %v2461, %v2460
        %v2491 = vpack.c.b16 %v2463, %v2462
        %v2492 = vpack.c.b16 %v2465, %v2464
        %v2493 = vpack.c.b16 %v2467, %v2466
        %v2494 = vpack.c.b16 %v2469, %v2468
        %v2495 = vpack.c.b16 %v2471, %v2470
        %v2496 = vpack.c.b16 %v2473, %v2472
        %v2497 = vpack.c.b16 %v2475, %v2474
        %v2498 = vpack.c.b16 %v2477, %v2476
        %v2499 = vpack.c.b16 %v2479, %v2478
        %v2500 = vpack.c.b16 %v2481, %v2480
        %v2501 = vpack.c.b16 %v2483, %v2482
        %v2502 = vpack.c.b16 %v2485, %v2484
        %v2503 = vpack.c.b16 %v2487, %v2486
        %v2508 = vunpack.c.l.b16 %v2452
        %v2509 = vunpack.c.l.b16 %v2453
        %v2510 = vunpack.c.l.b16 %v2454
        %v2511 = vunpack.c.l.b16 %v2455
        %v2512 = vpack.c.b16 %v2509, %v2508
        %v2513 = vpack.c.b16 %v2511, %v2510
        %v2517 = vsel %vm1029, %v2488, 0
        %v2520 = vsel %vm1029, %v2489, 0
        %v2523 = vsel %vm1029, %v2490, 0
        %v2526 = vsel %vm1029, %v2491, 0
        %v2529 = vsel %vm1029, %v2492, 0
        %v2532 = vsel %vm1029, %v2493, 0
        %v2535 = vsel %vm1029, %v2494, 0
        %v2538 = vsel %vm1029, %v2495, 0
        %v2541 = vsel %vm1029, %v2496, 0
        %v2544 = vsel %vm1029, %v2497, 0
        %v2547 = vsel %vm1029, %v2498, 0
        %v2550 = vsel %vm1029, %v2499, 0
        %v2553 = vsel %vm1029, %v2500, 0
        %v2556 = vsel %vm1029, %v2501, 0
        %v2559 = vsel %vm1029, %v2502, 0
        %v2562 = vsel %vm1029, %v2503, 0
        %2564 = vmatpush.bf16.msra.mxu0 0
        %2565 = vmatpush.bf16.msra.mxu0 0
        %2566 = vmatpush.bf16.msra.mxu0 0
        %2567 = vmatpush.bf16.msra.mxu0 0
        %2568 = vmatpush.bf16.msra.mxu0 0
        %2569 = vmatpush.bf16.msra.mxu0 0
        %2570 = vmatpush.bf16.msra.mxu0 %v2513
        %2571 = vmatpush.bf16.msra.mxu0 %v2512
        %2572 = vmatmul.bf16.gmra.mxu0 %v2517
        %v2573 = vpop.f32.mrf.mxu0
        %v2574 = vadd.f32 0.0, %v2573
        %v2575 = vpop.f32.mrf.mxu0
        %v2576 = vadd.f32 0.0, %v2575
        %2577 = vmatmul.bf16.gmra.mxu0 %v2520
        %v2578 = vpop.f32.mrf.mxu0
        %v2579 = vadd.f32 0.0, %v2578
        %v2580 = vpop.f32.mrf.mxu0
        %v2581 = vadd.f32 0.0, %v2580
        %2582 = vmatmul.bf16.gmra.mxu0 %v2523
        %v2583 = vpop.f32.mrf.mxu0
        %v2584 = vadd.f32 0.0, %v2583
        %v2585 = vpop.f32.mrf.mxu0
        %v2586 = vadd.f32 0.0, %v2585
        %2587 = vmatmul.bf16.gmra.mxu0 %v2526
        %v2588 = vpop.f32.mrf.mxu0
        %v2589 = vadd.f32 0.0, %v2588
        %v2590 = vpop.f32.mrf.mxu0
        %v2591 = vadd.f32 0.0, %v2590
        %2592 = vmatmul.bf16.gmra.mxu0 %v2529
        %v2593 = vpop.f32.mrf.mxu0
        %v2594 = vadd.f32 0.0, %v2593
        %v2595 = vpop.f32.mrf.mxu0
        %v2596 = vadd.f32 0.0, %v2595
        %2597 = vmatmul.bf16.gmra.mxu0 %v2532
        %v2598 = vpop.f32.mrf.mxu0
        %v2599 = vadd.f32 0.0, %v2598
        %v2600 = vpop.f32.mrf.mxu0
        %v2601 = vadd.f32 0.0, %v2600
        %2602 = vmatmul.bf16.gmra.mxu0 %v2535
        %v2603 = vpop.f32.mrf.mxu0
        %v2604 = vadd.f32 0.0, %v2603
        %v2605 = vpop.f32.mrf.mxu0
        %v2606 = vadd.f32 0.0, %v2605
        %2607 = vmatmul.bf16.gmra.mxu0 %v2538
        %v2608 = vpop.f32.mrf.mxu0
        %v2609 = vadd.f32 0.0, %v2608
        %v2610 = vpop.f32.mrf.mxu0
        %v2611 = vadd.f32 0.0, %v2610
        %2612 = vmatmul.bf16.gmra.mxu0 %v2541
        %v2613 = vpop.f32.mrf.mxu0
        %v2614 = vadd.f32 0.0, %v2613
        %v2615 = vpop.f32.mrf.mxu0
        %v2616 = vadd.f32 0.0, %v2615
        %2617 = vmatmul.bf16.gmra.mxu0 %v2544
        %v2618 = vpop.f32.mrf.mxu0
        %v2619 = vadd.f32 0.0, %v2618
        %v2620 = vpop.f32.mrf.mxu0
        %v2621 = vadd.f32 0.0, %v2620
        %2622 = vmatmul.bf16.gmra.mxu0 %v2547
        %v2623 = vpop.f32.mrf.mxu0
        %v2624 = vadd.f32 0.0, %v2623
        %v2625 = vpop.f32.mrf.mxu0
        %v2626 = vadd.f32 0.0, %v2625
        %2627 = vmatmul.bf16.gmra.mxu0 %v2550
        %v2628 = vpop.f32.mrf.mxu0
        %v2629 = vadd.f32 0.0, %v2628
        %v2630 = vpop.f32.mrf.mxu0
        %v2631 = vadd.f32 0.0, %v2630
        %2632 = vmatmul.bf16.gmra.mxu0 %v2553
        %v2633 = vpop.f32.mrf.mxu0
        %v2634 = vadd.f32 0.0, %v2633
        %v2635 = vpop.f32.mrf.mxu0
        %v2636 = vadd.f32 0.0, %v2635
        %2637 = vmatmul.bf16.gmra.mxu0 %v2556
        %v2638 = vpop.f32.mrf.mxu0
        %v2639 = vadd.f32 0.0, %v2638
        %v2640 = vpop.f32.mrf.mxu0
        %v2641 = vadd.f32 0.0, %v2640
        %2642 = vmatmul.bf16.gmra.mxu0 %v2559
        %v2643 = vpop.f32.mrf.mxu0
        %v2644 = vadd.f32 0.0, %v2643
        %v2645 = vpop.f32.mrf.mxu0
        %v2646 = vadd.f32 0.0, %v2645
        %2647 = vmatmul.bf16.gmra.mxu0 %v2562
        %v2648 = vpop.f32.mrf.mxu0
        %v2649 = vadd.f32 0.0, %v2648
        %v2650 = vpop.f32.mrf.mxu0
        %v2651 = vadd.f32 0.0, %v2650
        %2652 = vdwg.mxu0
        %v2653 = vadd.f32 %v2241, %v2574
        %v2654 = vadd.f32 %v2243, %v2576
        %v2655 = vadd.f32 %v2246, %v2579
        %v2656 = vadd.f32 %v2248, %v2581
        %v2657 = vadd.f32 %v2251, %v2584
        %v2658 = vadd.f32 %v2253, %v2586
        %v2659 = vadd.f32 %v2256, %v2589
        %v2660 = vadd.f32 %v2258, %v2591
        %v2661 = vadd.f32 %v2261, %v2594
        %v2662 = vadd.f32 %v2263, %v2596
        %v2663 = vadd.f32 %v2266, %v2599
        %v2664 = vadd.f32 %v2268, %v2601
        %v2665 = vadd.f32 %v2271, %v2604
        %v2666 = vadd.f32 %v2273, %v2606
        %v2667 = vadd.f32 %v2276, %v2609
        %v2668 = vadd.f32 %v2278, %v2611
        %v2669 = vadd.f32 %v2281, %v2614
        %v2670 = vadd.f32 %v2283, %v2616
        %v2671 = vadd.f32 %v2286, %v2619
        %v2672 = vadd.f32 %v2288, %v2621
        %v2673 = vadd.f32 %v2291, %v2624
        %v2674 = vadd.f32 %v2293, %v2626
        %v2675 = vadd.f32 %v2296, %v2629
        %v2676 = vadd.f32 %v2298, %v2631
        %v2677 = vadd.f32 %v2301, %v2634
        %v2678 = vadd.f32 %v2303, %v2636
        %v2679 = vadd.f32 %v2306, %v2639
        %v2680 = vadd.f32 %v2308, %v2641
        %v2681 = vadd.f32 %v2311, %v2644
        %v2682 = vadd.f32 %v2313, %v2646
        %v2683 = vadd.f32 %v2316, %v2649
        %v2684 = vadd.f32 %v2318, %v2651
        %v2685 = vld [vmem:[#allocation2 + $0x10] sm:$0x3]
        %v2686 = vld [vmem:[#allocation2 + $0x24] sm:$0x3]
        %v2687 = vld [vmem:[#allocation2 + $0x38] sm:$0x3]
        %v2688 = vld [vmem:[#allocation2 + $0x4c] sm:$0x3]
        %v2689 = vld [vmem:[#allocation2 + $0x60] sm:$0x3]
        %v2690 = vld [vmem:[#allocation2 + $0x74] sm:$0x3]
        %v2691 = vld [vmem:[#allocation2 + $0x88] sm:$0x3]
        %v2692 = vld [vmem:[#allocation2 + $0x9c] sm:$0x3]
        %vm2693 = vsmask.f32 2304
        %vm2694 = vsmask.f32 6416
        %vm2695 = vmor %vm2693, %vm2694
        %v2697 = vshrl.u32 %v2320, 16
        %v2699 = vrot.slane %v2697, 5
        %v2700 = vshll.u32 %v2320, 16
        %v2702 = vrot.slane %v2700, 6
        %v2703 = vor.u32 %v2699, %v2702
        %v2704 = vrot.slane %v2703, 4
        %v2705 = vrot.slane %v1551, 5
        %v2706 = vrot.slane %v1547, 6
        %v2707 = vor.u32 %v2705, %v2706
        %v2708 = vsel %vm2695, %v2704, %v2707
        %v2709 = vrot.slane %v2707, 4
        %v2710 = vrot.slane %v1561, 5
        %v2711 = vrot.slane %v1557, 6
        %v2712 = vor.u32 %v2710, %v2711
        %v2713 = vsel %vm2695, %v2709, %v2712
        %v2714 = vrot.slane %v2712, 4
        %v2715 = vrot.slane %v1571, 5
        %v2716 = vrot.slane %v1567, 6
        %v2717 = vor.u32 %v2715, %v2716
        %v2718 = vsel %vm2695, %v2714, %v2717
        %v2719 = vrot.slane %v2717, 4
        %v2721 = vshrl.u32 %v2685, 16
        %v2723 = vrot.slane %v2721, 5
        %v2724 = vshll.u32 %v2685, 16
        %v2726 = vrot.slane %v2724, 6
        %v2727 = vor.u32 %v2723, %v2726
        %v2728 = vsel %vm2695, %v2719, %v2727
        %v2730 = vshrl.u32 %v2321, 16
        %v2732 = vrot.slane %v2730, 5
        %v2733 = vshll.u32 %v2321, 16
        %v2735 = vrot.slane %v2733, 6
        %v2736 = vor.u32 %v2732, %v2735
        %v2737 = vrot.slane %v2736, 4
        %v2738 = vrot.slane %v1595, 5
        %v2739 = vrot.slane %v1591, 6
        %v2740 = vor.u32 %v2738, %v2739
        %v2741 = vsel %vm2695, %v2737, %v2740
        %v2742 = vrot.slane %v2740, 4
        %v2743 = vrot.slane %v1605, 5
        %v2744 = vrot.slane %v1601, 6
        %v2745 = vor.u32 %v2743, %v2744
        %v2746 = vsel %vm2695, %v2742, %v2745
        %v2747 = vrot.slane %v2745, 4
        %v2748 = vrot.slane %v1615, 5
        %v2749 = vrot.slane %v1611, 6
        %v2750 = vor.u32 %v2748, %v2749
        %v2751 = vsel %vm2695, %v2747, %v2750
        %v2752 = vrot.slane %v2750, 4
        %v2754 = vshrl.u32 %v2686, 16
        %v2756 = vrot.slane %v2754, 5
        %v2757 = vshll.u32 %v2686, 16
        %v2759 = vrot.slane %v2757, 6
        %v2760 = vor.u32 %v2756, %v2759
        %v2761 = vsel %vm2695, %v2752, %v2760
        %v2763 = vshrl.u32 %v2322, 16
        %v2765 = vrot.slane %v2763, 5
        %v2766 = vshll.u32 %v2322, 16
        %v2768 = vrot.slane %v2766, 6
        %v2769 = vor.u32 %v2765, %v2768
        %v2770 = vrot.slane %v2769, 4
        %v2771 = vrot.slane %v1639, 5
        %v2772 = vrot.slane %v1635, 6
        %v2773 = vor.u32 %v2771, %v2772
        %v2774 = vsel %vm2695, %v2770, %v2773
        %v2775 = vrot.slane %v2773, 4
        %v2776 = vrot.slane %v1649, 5
        %v2777 = vrot.slane %v1645, 6
        %v2778 = vor.u32 %v2776, %v2777
        %v2779 = vsel %vm2695, %v2775, %v2778
        %v2780 = vrot.slane %v2778, 4
        %v2781 = vrot.slane %v1659, 5
        %v2782 = vrot.slane %v1655, 6
        %v2783 = vor.u32 %v2781, %v2782
        %v2784 = vsel %vm2695, %v2780, %v2783
        %v2785 = vrot.slane %v2783, 4
        %v2787 = vshrl.u32 %v2687, 16
        %v2789 = vrot.slane %v2787, 5
        %v2790 = vshll.u32 %v2687, 16
        %v2792 = vrot.slane %v2790, 6
        %v2793 = vor.u32 %v2789, %v2792
        %v2794 = vsel %vm2695, %v2785, %v2793
        %v2796 = vshrl.u32 %v2323, 16
        %v2798 = vrot.slane %v2796, 5
        %v2799 = vshll.u32 %v2323, 16
        %v2801 = vrot.slane %v2799, 6
        %v2802 = vor.u32 %v2798, %v2801
        %v2803 = vrot.slane %v2802, 4
        %v2804 = vrot.slane %v1683, 5
        %v2805 = vrot.slane %v1679, 6
        %v2806 = vor.u32 %v2804, %v2805
        %v2807 = vsel %vm2695, %v2803, %v2806
        %v2808 = vrot.slane %v2806, 4
        %v2809 = vrot.slane %v1693, 5
        %v2810 = vrot.slane %v1689, 6
        %v2811 = vor.u32 %v2809, %v2810
        %v2812 = vsel %vm2695, %v2808, %v2811
        %v2813 = vrot.slane %v2811, 4
        %v2814 = vrot.slane %v1703, 5
        %v2815 = vrot.slane %v1699, 6
        %v2816 = vor.u32 %v2814, %v2815
        %v2817 = vsel %vm2695, %v2813, %v2816
        %v2818 = vrot.slane %v2816, 4
        %v2820 = vshrl.u32 %v2688, 16
        %v2822 = vrot.slane %v2820, 5
        %v2823 = vshll.u32 %v2688, 16
        %v2825 = vrot.slane %v2823, 6
        %v2826 = vor.u32 %v2822, %v2825
        %v2827 = vsel %vm2695, %v2818, %v2826
        %v2829 = vshrl.u32 %v2324, 16
        %v2831 = vrot.slane %v2829, 5
        %v2832 = vshll.u32 %v2324, 16
        %v2834 = vrot.slane %v2832, 6
        %v2835 = vor.u32 %v2831, %v2834
        %v2836 = vrot.slane %v2835, 4
        %v2837 = vrot.slane %v1727, 5
        %v2838 = vrot.slane %v1723, 6
        %v2839 = vor.u32 %v2837, %v2838
        %v2840 = vsel %vm2695, %v2836, %v2839
        %v2841 = vrot.slane %v2839, 4
        %v2842 = vrot.slane %v1737, 5
        %v2843 = vrot.slane %v1733, 6
        %v2844 = vor.u32 %v2842, %v2843
        %v2845 = vsel %vm2695, %v2841, %v2844
        %v2846 = vrot.slane %v2844, 4
        %v2847 = vrot.slane %v1747, 5
        %v2848 = vrot.slane %v1743, 6
        %v2849 = vor.u32 %v2847, %v2848
        %v2850 = vsel %vm2695, %v2846, %v2849
        %v2851 = vrot.slane %v2849, 4
        %v2853 = vshrl.u32 %v2689, 16
        %v2855 = vrot.slane %v2853, 5
        %v2856 = vshll.u32 %v2689, 16
        %v2858 = vrot.slane %v2856, 6
        %v2859 = vor.u32 %v2855, %v2858
        %v2860 = vsel %vm2695, %v2851, %v2859
        %v2862 = vshrl.u32 %v2325, 16
        %v2864 = vrot.slane %v2862, 5
        %v2865 = vshll.u32 %v2325, 16
        %v2867 = vrot.slane %v2865, 6
        %v2868 = vor.u32 %v2864, %v2867
        %v2869 = vrot.slane %v2868, 4
        %v2870 = vrot.slane %v1771, 5
        %v2871 = vrot.slane %v1767, 6
        %v2872 = vor.u32 %v2870, %v2871
        %v2873 = vsel %vm2695, %v2869, %v2872
        %v2874 = vrot.slane %v2872, 4
        %v2875 = vrot.slane %v1781, 5
        %v2876 = vrot.slane %v1777, 6
        %v2877 = vor.u32 %v2875, %v2876
        %v2878 = vsel %vm2695, %v2874, %v2877
        %v2879 = vrot.slane %v2877, 4
        %v2880 = vrot.slane %v1791, 5
        %v2881 = vrot.slane %v1787, 6
        %v2882 = vor.u32 %v2880, %v2881
        %v2883 = vsel %vm2695, %v2879, %v2882
        %v2884 = vrot.slane %v2882, 4
        %v2886 = vshrl.u32 %v2690, 16
        %v2888 = vrot.slane %v2886, 5
        %v2889 = vshll.u32 %v2690, 16
        %v2891 = vrot.slane %v2889, 6
        %v2892 = vor.u32 %v2888, %v2891
        %v2893 = vsel %vm2695, %v2884, %v2892
        %v2895 = vshrl.u32 %v2326, 16
        %v2897 = vrot.slane %v2895, 5
        %v2898 = vshll.u32 %v2326, 16
        %v2900 = vrot.slane %v2898, 6
        %v2901 = vor.u32 %v2897, %v2900
        %v2902 = vrot.slane %v2901, 4
        %v2903 = vrot.slane %v1815, 5
        %v2904 = vrot.slane %v1811, 6
        %v2905 = vor.u32 %v2903, %v2904
        %v2906 = vsel %vm2695, %v2902, %v2905
        %v2907 = vrot.slane %v2905, 4
        %v2908 = vrot.slane %v1825, 5
        %v2909 = vrot.slane %v1821, 6
        %v2910 = vor.u32 %v2908, %v2909
        %v2911 = vsel %vm2695, %v2907, %v2910
        %v2912 = vrot.slane %v2910, 4
        %v2913 = vrot.slane %v1835, 5
        %v2914 = vrot.slane %v1831, 6
        %v2915 = vor.u32 %v2913, %v2914
        %v2916 = vsel %vm2695, %v2912, %v2915
        %v2917 = vrot.slane %v2915, 4
        %v2919 = vshrl.u32 %v2691, 16
        %v2921 = vrot.slane %v2919, 5
        %v2922 = vshll.u32 %v2691, 16
        %v2924 = vrot.slane %v2922, 6
        %v2925 = vor.u32 %v2921, %v2924
        %v2926 = vsel %vm2695, %v2917, %v2925
        %v2928 = vshrl.u32 %v2327, 16
        %v2930 = vrot.slane %v2928, 5
        %v2931 = vshll.u32 %v2327, 16
        %v2933 = vrot.slane %v2931, 6
        %v2934 = vor.u32 %v2930, %v2933
        %v2935 = vrot.slane %v2934, 4
        %v2936 = vrot.slane %v1859, 5
        %v2937 = vrot.slane %v1855, 6
        %v2938 = vor.u32 %v2936, %v2937
        %v2939 = vsel %vm2695, %v2935, %v2938
        %v2940 = vrot.slane %v2938, 4
        %v2941 = vrot.slane %v1869, 5
        %v2942 = vrot.slane %v1865, 6
        %v2943 = vor.u32 %v2941, %v2942
        %v2944 = vsel %vm2695, %v2940, %v2943
        %v2945 = vrot.slane %v2943, 4
        %v2946 = vrot.slane %v1879, 5
        %v2947 = vrot.slane %v1875, 6
        %v2948 = vor.u32 %v2946, %v2947
        %v2949 = vsel %vm2695, %v2945, %v2948
        %v2950 = vrot.slane %v2948, 4
        %v2952 = vshrl.u32 %v2692, 16
        %v2954 = vrot.slane %v2952, 5
        %v2955 = vshll.u32 %v2692, 16
        %v2957 = vrot.slane %v2955, 6
        %v2958 = vor.u32 %v2954, %v2957
        %v2959 = vsel %vm2695, %v2950, %v2958
        %s2960 = scalar_lea.vmem %s3, 48
        %v2961 = vld [vmem:[%s2960] sm:$0xf]
        %v2962 = vld [vmem:[%s2960 + $0x4] sm:$0xf]
        %v2963 = vld [vmem:[%s2960 + $0x8] sm:$0xf]
        %v2964 = vld [vmem:[%s2960 + $0xc] sm:$0xf]
        %v2965 = vunpack.c.l.b16 %v2708
        %v2966 = vunpack.c.l.b16 %v2713
        %v2967 = vunpack.c.l.b16 %v2718
        %v2968 = vunpack.c.l.b16 %v2728
        %v2969 = vunpack.c.l.b16 %v2741
        %v2970 = vunpack.c.l.b16 %v2746
        %v2971 = vunpack.c.l.b16 %v2751
        %v2972 = vunpack.c.l.b16 %v2761
        %v2973 = vunpack.c.l.b16 %v2774
        %v2974 = vunpack.c.l.b16 %v2779
        %v2975 = vunpack.c.l.b16 %v2784
        %v2976 = vunpack.c.l.b16 %v2794
        %v2977 = vunpack.c.l.b16 %v2807
        %v2978 = vunpack.c.l.b16 %v2812
        %v2979 = vunpack.c.l.b16 %v2817
        %v2980 = vunpack.c.l.b16 %v2827
        %v2981 = vunpack.c.l.b16 %v2840
        %v2982 = vunpack.c.l.b16 %v2845
        %v2983 = vunpack.c.l.b16 %v2850
        %v2984 = vunpack.c.l.b16 %v2860
        %v2985 = vunpack.c.l.b16 %v2873
        %v2986 = vunpack.c.l.b16 %v2878
        %v2987 = vunpack.c.l.b16 %v2883
        %v2988 = vunpack.c.l.b16 %v2893
        %v2989 = vunpack.c.l.b16 %v2906
        %v2990 = vunpack.c.l.b16 %v2911
        %v2991 = vunpack.c.l.b16 %v2916
        %v2992 = vunpack.c.l.b16 %v2926
        %v2993 = vunpack.c.l.b16 %v2939
        %v2994 = vunpack.c.l.b16 %v2944
        %v2995 = vunpack.c.l.b16 %v2949
        %v2996 = vunpack.c.l.b16 %v2959
        %v2997 = vpack.c.b16 %v2966, %v2965
        %v2998 = vpack.c.b16 %v2968, %v2967
        %v2999 = vpack.c.b16 %v2970, %v2969
        %v3000 = vpack.c.b16 %v2972, %v2971
        %v3001 = vpack.c.b16 %v2974, %v2973
        %v3002 = vpack.c.b16 %v2976, %v2975
        %v3003 = vpack.c.b16 %v2978, %v2977
        %v3004 = vpack.c.b16 %v2980, %v2979
        %v3005 = vpack.c.b16 %v2982, %v2981
        %v3006 = vpack.c.b16 %v2984, %v2983
        %v3007 = vpack.c.b16 %v2986, %v2985
        %v3008 = vpack.c.b16 %v2988, %v2987
        %v3009 = vpack.c.b16 %v2990, %v2989
        %v3010 = vpack.c.b16 %v2992, %v2991
        %v3011 = vpack.c.b16 %v2994, %v2993
        %v3012 = vpack.c.b16 %v2996, %v2995
        %v3017 = vunpack.c.l.b16 %v2961
        %v3018 = vunpack.c.l.b16 %v2962
        %v3019 = vunpack.c.l.b16 %v2963
        %v3020 = vunpack.c.l.b16 %v2964
        %v3021 = vpack.c.b16 %v3018, %v3017
        %v3022 = vpack.c.b16 %v3020, %v3019
        %v3026 = vsel %vm1029, %v2997, 0
        %v3029 = vsel %vm1029, %v2998, 0
        %v3032 = vsel %vm1029, %v2999, 0
        %v3035 = vsel %vm1029, %v3000, 0
        %v3038 = vsel %vm1029, %v3001, 0
        %v3041 = vsel %vm1029, %v3002, 0
        %v3044 = vsel %vm1029, %v3003, 0
        %v3047 = vsel %vm1029, %v3004, 0
        %v3050 = vsel %vm1029, %v3005, 0
        %v3053 = vsel %vm1029, %v3006, 0
        %v3056 = vsel %vm1029, %v3007, 0
        %v3059 = vsel %vm1029, %v3008, 0
        %v3062 = vsel %vm1029, %v3009, 0
        %v3065 = vsel %vm1029, %v3010, 0
        %v3068 = vsel %vm1029, %v3011, 0
        %v3071 = vsel %vm1029, %v3012, 0
        %3073 = vmatpush.bf16.msra.mxu0 0
        %3074 = vmatpush.bf16.msra.mxu0 0
        %3075 = vmatpush.bf16.msra.mxu0 0
        %3076 = vmatpush.bf16.msra.mxu0 0
        %3077 = vmatpush.bf16.msra.mxu0 0
        %3078 = vmatpush.bf16.msra.mxu0 0
        %3079 = vmatpush.bf16.msra.mxu0 %v3022
        %3080 = vmatpush.bf16.msra.mxu0 %v3021
        %3081 = vmatmul.bf16.gmra.mxu0 %v3026
        %v3082 = vpop.f32.mrf.mxu0
        %v3083 = vadd.f32 0.0, %v3082
        %v3084 = vpop.f32.mrf.mxu0
        %v3085 = vadd.f32 0.0, %v3084
        %3086 = vmatmul.bf16.gmra.mxu0 %v3029
        %v3087 = vpop.f32.mrf.mxu0
        %v3088 = vadd.f32 0.0, %v3087
        %v3089 = vpop.f32.mrf.mxu0
        %v3090 = vadd.f32 0.0, %v3089
        %3091 = vmatmul.bf16.gmra.mxu0 %v3032
        %v3092 = vpop.f32.mrf.mxu0
        %v3093 = vadd.f32 0.0, %v3092
        %v3094 = vpop.f32.mrf.mxu0
        %v3095 = vadd.f32 0.0, %v3094
        %3096 = vmatmul.bf16.gmra.mxu0 %v3035
        %v3097 = vpop.f32.mrf.mxu0
        %v3098 = vadd.f32 0.0, %v3097
        %v3099 = vpop.f32.mrf.mxu0
        %v3100 = vadd.f32 0.0, %v3099
        %3101 = vmatmul.bf16.gmra.mxu0 %v3038
        %v3102 = vpop.f32.mrf.mxu0
        %v3103 = vadd.f32 0.0, %v3102
        %v3104 = vpop.f32.mrf.mxu0
        %v3105 = vadd.f32 0.0, %v3104
        %3106 = vmatmul.bf16.gmra.mxu0 %v3041
        %v3107 = vpop.f32.mrf.mxu0
        %v3108 = vadd.f32 0.0, %v3107
        %v3109 = vpop.f32.mrf.mxu0
        %v3110 = vadd.f32 0.0, %v3109
        %3111 = vmatmul.bf16.gmra.mxu0 %v3044
        %v3112 = vpop.f32.mrf.mxu0
        %v3113 = vadd.f32 0.0, %v3112
        %v3114 = vpop.f32.mrf.mxu0
        %v3115 = vadd.f32 0.0, %v3114
        %3116 = vmatmul.bf16.gmra.mxu0 %v3047
        %v3117 = vpop.f32.mrf.mxu0
        %v3118 = vadd.f32 0.0, %v3117
        %v3119 = vpop.f32.mrf.mxu0
        %v3120 = vadd.f32 0.0, %v3119
        %3121 = vmatmul.bf16.gmra.mxu0 %v3050
        %v3122 = vpop.f32.mrf.mxu0
        %v3123 = vadd.f32 0.0, %v3122
        %v3124 = vpop.f32.mrf.mxu0
        %v3125 = vadd.f32 0.0, %v3124
        %3126 = vmatmul.bf16.gmra.mxu0 %v3053
        %v3127 = vpop.f32.mrf.mxu0
        %v3128 = vadd.f32 0.0, %v3127
        %v3129 = vpop.f32.mrf.mxu0
        %v3130 = vadd.f32 0.0, %v3129
        %3131 = vmatmul.bf16.gmra.mxu0 %v3056
        %v3132 = vpop.f32.mrf.mxu0
        %v3133 = vadd.f32 0.0, %v3132
        %v3134 = vpop.f32.mrf.mxu0
        %v3135 = vadd.f32 0.0, %v3134
        %3136 = vmatmul.bf16.gmra.mxu0 %v3059
        %v3137 = vpop.f32.mrf.mxu0
        %v3138 = vadd.f32 0.0, %v3137
        %v3139 = vpop.f32.mrf.mxu0
        %v3140 = vadd.f32 0.0, %v3139
        %3141 = vmatmul.bf16.gmra.mxu0 %v3062
        %v3142 = vpop.f32.mrf.mxu0
        %v3143 = vadd.f32 0.0, %v3142
        %v3144 = vpop.f32.mrf.mxu0
        %v3145 = vadd.f32 0.0, %v3144
        %3146 = vmatmul.bf16.gmra.mxu0 %v3065
        %v3147 = vpop.f32.mrf.mxu0
        %v3148 = vadd.f32 0.0, %v3147
        %v3149 = vpop.f32.mrf.mxu0
        %v3150 = vadd.f32 0.0, %v3149
        %3151 = vmatmul.bf16.gmra.mxu0 %v3068
        %v3152 = vpop.f32.mrf.mxu0
        %v3153 = vadd.f32 0.0, %v3152
        %v3154 = vpop.f32.mrf.mxu0
        %v3155 = vadd.f32 0.0, %v3154
        %3156 = vmatmul.bf16.gmra.mxu0 %v3071
        %v3157 = vpop.f32.mrf.mxu0
        %v3158 = vadd.f32 0.0, %v3157
        %v3159 = vpop.f32.mrf.mxu0
        %v3160 = vadd.f32 0.0, %v3159
        %3161 = vdwg.mxu0
        %v3162 = vadd.f32 %v2653, %v3083
        %v3163 = vadd.f32 %v2654, %v3085
        %v3164 = vadd.f32 %v2655, %v3088
        %v3165 = vadd.f32 %v2656, %v3090
        %v3166 = vadd.f32 %v2657, %v3093
        %v3167 = vadd.f32 %v2658, %v3095
        %v3168 = vadd.f32 %v2659, %v3098
        %v3169 = vadd.f32 %v2660, %v3100
        %v3170 = vadd.f32 %v2661, %v3103
        %v3171 = vadd.f32 %v2662, %v3105
        %v3172 = vadd.f32 %v2663, %v3108
        %v3173 = vadd.f32 %v2664, %v3110
        %v3174 = vadd.f32 %v2665, %v3113
        %v3175 = vadd.f32 %v2666, %v3115
        %v3176 = vadd.f32 %v2667, %v3118
        %v3177 = vadd.f32 %v2668, %v3120
        %v3178 = vadd.f32 %v2669, %v3123
        %v3179 = vadd.f32 %v2670, %v3125
        %v3180 = vadd.f32 %v2671, %v3128
        %v3181 = vadd.f32 %v2672, %v3130
        %v3182 = vadd.f32 %v2673, %v3133
        %v3183 = vadd.f32 %v2674, %v3135
        %v3184 = vadd.f32 %v2675, %v3138
        %v3185 = vadd.f32 %v2676, %v3140
        %v3186 = vadd.f32 %v2677, %v3143
        %v3187 = vadd.f32 %v2678, %v3145
        %v3188 = vadd.f32 %v2679, %v3148
        %v3189 = vadd.f32 %v2680, %v3150
        %v3190 = vadd.f32 %v2681, %v3153
        %v3191 = vadd.f32 %v2682, %v3155
        %v3192 = vadd.f32 %v2683, %v3158
        %v3193 = vadd.f32 %v2684, %v3160
        %v3194 = vld [vmem:[#allocation2] sm:$0xc]
        %v3195 = vld [vmem:[#allocation2 + $0x14] sm:$0xc]
        %v3196 = vld [vmem:[#allocation2 + $0x28] sm:$0xc]
        %v3197 = vld [vmem:[#allocation2 + $0x3c] sm:$0xc]
        %v3198 = vld [vmem:[#allocation2 + $0x50] sm:$0xc]
        %v3199 = vld [vmem:[#allocation2 + $0x64] sm:$0xc]
        %v3200 = vld [vmem:[#allocation2 + $0x78] sm:$0xc]
        %v3201 = vld [vmem:[#allocation2 + $0x8c] sm:$0xc]
        %vm3218 = vcmask 1041408
        %vm3219 = vcmask 1045508
        %vm3220 = vmor %vm3218, %vm3219
        %v3221 = vrot.slane %v3194, 6
        %v3222 = vrot.slane %v3221, 4
        %v3223 = vrot.slane %v1491, 6
        %v3224 = vsel %vm3220, %v3222, %v3223
        %v3225 = vrot.slane %v3223, 4
        %v3226 = vrot.slane %v1492, 6
        %v3227 = vsel %vm3220, %v3225, %v3226
        %v3228 = vrot.slane %v3226, 4
        %v3229 = vrot.slane %v1493, 6
        %v3230 = vsel %vm3220, %v3228, %v3229
        %v3231 = vrot.slane %v3229, 4
        %v3232 = vrot.slane %v2685, 6
        %v3233 = vsel %vm3220, %v3231, %v3232
        %v3234 = vrot.slane %v3195, 6
        %v3235 = vrot.slane %v3234, 4
        %v3236 = vrot.slane %v1495, 6
        %v3237 = vsel %vm3220, %v3235, %v3236
        %v3238 = vrot.slane %v3236, 4
        %v3239 = vrot.slane %v1496, 6
        %v3240 = vsel %vm3220, %v3238, %v3239
        %v3241 = vrot.slane %v3239, 4
        %v3242 = vrot.slane %v1497, 6
        %v3243 = vsel %vm3220, %v3241, %v3242
        %v3244 = vrot.slane %v3242, 4
        %v3245 = vrot.slane %v2686, 6
        %v3246 = vsel %vm3220, %v3244, %v3245
        %v3247 = vrot.slane %v3196, 6
        %v3248 = vrot.slane %v3247, 4
        %v3249 = vrot.slane %v1499, 6
        %v3250 = vsel %vm3220, %v3248, %v3249
        %v3251 = vrot.slane %v3249, 4
        %v3252 = vrot.slane %v1500, 6
        %v3253 = vsel %vm3220, %v3251, %v3252
        %v3254 = vrot.slane %v3252, 4
        %v3255 = vrot.slane %v1501, 6
        %v3256 = vsel %vm3220, %v3254, %v3255
        %v3257 = vrot.slane %v3255, 4
        %v3258 = vrot.slane %v2687, 6
        %v3259 = vsel %vm3220, %v3257, %v3258
        %v3260 = vrot.slane %v3197, 6
        %v3261 = vrot.slane %v3260, 4
        %v3262 = vrot.slane %v1503, 6
        %v3263 = vsel %vm3220, %v3261, %v3262
        %v3264 = vrot.slane %v3262, 4
        %v3265 = vrot.slane %v1504, 6
        %v3266 = vsel %vm3220, %v3264, %v3265
        %v3267 = vrot.slane %v3265, 4
        %v3268 = vrot.slane %v1505, 6
        %v3269 = vsel %vm3220, %v3267, %v3268
        %v3270 = vrot.slane %v3268, 4
        %v3271 = vrot.slane %v2688, 6
        %v3272 = vsel %vm3220, %v3270, %v3271
        %v3273 = vrot.slane %v3198, 6
        %v3274 = vrot.slane %v3273, 4
        %v3275 = vrot.slane %v1507, 6
        %v3276 = vsel %vm3220, %v3274, %v3275
        %v3277 = vrot.slane %v3275, 4
        %v3278 = vrot.slane %v1508, 6
        %v3279 = vsel %vm3220, %v3277, %v3278
        %v3280 = vrot.slane %v3278, 4
        %v3281 = vrot.slane %v1509, 6
        %v3282 = vsel %vm3220, %v3280, %v3281
        %v3283 = vrot.slane %v3281, 4
        %v3284 = vrot.slane %v2689, 6
        %v3285 = vsel %vm3220, %v3283, %v3284
        %v3286 = vrot.slane %v3199, 6
        %v3287 = vrot.slane %v3286, 4
        %v3288 = vrot.slane %v1511, 6
        %v3289 = vsel %vm3220, %v3287, %v3288
        %v3290 = vrot.slane %v3288, 4
        %v3291 = vrot.slane %v1512, 6
        %v3292 = vsel %vm3220, %v3290, %v3291
        %v3293 = vrot.slane %v3291, 4
        %v3294 = vrot.slane %v1513, 6
        %v3295 = vsel %vm3220, %v3293, %v3294
        %v3296 = vrot.slane %v3294, 4
        %v3297 = vrot.slane %v2690, 6
        %v3298 = vsel %vm3220, %v3296, %v3297
        %v3299 = vrot.slane %v3200, 6
        %v3300 = vrot.slane %v3299, 4
        %v3301 = vrot.slane %v1515, 6
        %v3302 = vsel %vm3220, %v3300, %v3301
        %v3303 = vrot.slane %v3301, 4
        %v3304 = vrot.slane %v1516, 6
        %v3305 = vsel %vm3220, %v3303, %v3304
        %v3306 = vrot.slane %v3304, 4
        %v3307 = vrot.slane %v1517, 6
        %v3308 = vsel %vm3220, %v3306, %v3307
        %v3309 = vrot.slane %v3307, 4
        %v3310 = vrot.slane %v2691, 6
        %v3311 = vsel %vm3220, %v3309, %v3310
        %v3312 = vrot.slane %v3201, 6
        %v3313 = vrot.slane %v3312, 4
        %v3314 = vrot.slane %v1519, 6
        %v3315 = vsel %vm3220, %v3313, %v3314
        %v3316 = vrot.slane %v3314, 4
        %v3317 = vrot.slane %v1520, 6
        %v3318 = vsel %vm3220, %v3316, %v3317
        %v3319 = vrot.slane %v3317, 4
        %v3320 = vrot.slane %v1521, 6
        %v3321 = vsel %vm3220, %v3319, %v3320
        %v3322 = vrot.slane %v3320, 4
        %v3323 = vrot.slane %v2692, 6
        %v3324 = vsel %vm3220, %v3322, %v3323
        %s3325 = scalar_lea.vmem %s3, 64
        %v3326 = vld [vmem:[%s3325] sm:$0xf]
        %v3327 = vld [vmem:[%s3325 + $0x4] sm:$0xf]
        %v3328 = vld [vmem:[%s3325 + $0x8] sm:$0xf]
        %v3329 = vld [vmem:[%s3325 + $0xc] sm:$0xf]
        %v3330 = vunpack.c.l.b16 %v3224
        %v3331 = vunpack.c.l.b16 %v3227
        %v3332 = vunpack.c.l.b16 %v3230
        %v3333 = vunpack.c.l.b16 %v3233
        %v3334 = vunpack.c.l.b16 %v3237
        %v3335 = vunpack.c.l.b16 %v3240
        %v3336 = vunpack.c.l.b16 %v3243
        %v3337 = vunpack.c.l.b16 %v3246
        %v3338 = vunpack.c.l.b16 %v3250
        %v3339 = vunpack.c.l.b16 %v3253
        %v3340 = vunpack.c.l.b16 %v3256
        %v3341 = vunpack.c.l.b16 %v3259
        %v3342 = vunpack.c.l.b16 %v3263
        %v3343 = vunpack.c.l.b16 %v3266
        %v3344 = vunpack.c.l.b16 %v3269
        %v3345 = vunpack.c.l.b16 %v3272
        %v3346 = vunpack.c.l.b16 %v3276
        %v3347 = vunpack.c.l.b16 %v3279
        %v3348 = vunpack.c.l.b16 %v3282
        %v3349 = vunpack.c.l.b16 %v3285
        %v3350 = vunpack.c.l.b16 %v3289
        %v3351 = vunpack.c.l.b16 %v3292
        %v3352 = vunpack.c.l.b16 %v3295
        %v3353 = vunpack.c.l.b16 %v3298
        %v3354 = vunpack.c.l.b16 %v3302
        %v3355 = vunpack.c.l.b16 %v3305
        %v3356 = vunpack.c.l.b16 %v3308
        %v3357 = vunpack.c.l.b16 %v3311
        %v3358 = vunpack.c.l.b16 %v3315
        %v3359 = vunpack.c.l.b16 %v3318
        %v3360 = vunpack.c.l.b16 %v3321
        %v3361 = vunpack.c.l.b16 %v3324
        %v3362 = vpack.c.b16 %v3331, %v3330
        %v3363 = vpack.c.b16 %v3333, %v3332
        %v3364 = vpack.c.b16 %v3335, %v3334
        %v3365 = vpack.c.b16 %v3337, %v3336
        %v3366 = vpack.c.b16 %v3339, %v3338
        %v3367 = vpack.c.b16 %v3341, %v3340
        %v3368 = vpack.c.b16 %v3343, %v3342
        %v3369 = vpack.c.b16 %v3345, %v3344
        %v3370 = vpack.c.b16 %v3347, %v3346
        %v3371 = vpack.c.b16 %v3349, %v3348
        %v3372 = vpack.c.b16 %v3351, %v3350
        %v3373 = vpack.c.b16 %v3353, %v3352
        %v3374 = vpack.c.b16 %v3355, %v3354
        %v3375 = vpack.c.b16 %v3357, %v3356
        %v3376 = vpack.c.b16 %v3359, %v3358
        %v3377 = vpack.c.b16 %v3361, %v3360
        %v3382 = vunpack.c.l.b16 %v3326
        %v3383 = vunpack.c.l.b16 %v3327
        %v3384 = vunpack.c.l.b16 %v3328
        %v3385 = vunpack.c.l.b16 %v3329
        %v3386 = vpack.c.b16 %v3383, %v3382
        %v3387 = vpack.c.b16 %v3385, %v3384
        %v3391 = vsel %vm1029, %v3362, 0
        %v3394 = vsel %vm1029, %v3363, 0
        %v3397 = vsel %vm1029, %v3364, 0
        %v3400 = vsel %vm1029, %v3365, 0
        %v3403 = vsel %vm1029, %v3366, 0
        %v3406 = vsel %vm1029, %v3367, 0
        %v3409 = vsel %vm1029, %v3368, 0
        %v3412 = vsel %vm1029, %v3369, 0
        %v3415 = vsel %vm1029, %v3370, 0
        %v3418 = vsel %vm1029, %v3371, 0
        %v3421 = vsel %vm1029, %v3372, 0
        %v3424 = vsel %vm1029, %v3373, 0
        %v3427 = vsel %vm1029, %v3374, 0
        %v3430 = vsel %vm1029, %v3375, 0
        %v3433 = vsel %vm1029, %v3376, 0
        %v3436 = vsel %vm1029, %v3377, 0
        %3438 = vmatpush.bf16.msra.mxu0 0
        %3439 = vmatpush.bf16.msra.mxu0 0
        %3440 = vmatpush.bf16.msra.mxu0 0
        %3441 = vmatpush.bf16.msra.mxu0 0
        %3442 = vmatpush.bf16.msra.mxu0 0
        %3443 = vmatpush.bf16.msra.mxu0 0
        %3444 = vmatpush.bf16.msra.mxu0 %v3387
        %3445 = vmatpush.bf16.msra.mxu0 %v3386
        %3446 = vmatmul.bf16.gmra.mxu0 %v3391
        %v3447 = vpop.f32.mrf.mxu0
        %v3448 = vadd.f32 0.0, %v3447
        %v3449 = vpop.f32.mrf.mxu0
        %v3450 = vadd.f32 0.0, %v3449
        %3451 = vmatmul.bf16.gmra.mxu0 %v3394
        %v3452 = vpop.f32.mrf.mxu0
        %v3453 = vadd.f32 0.0, %v3452
        %v3454 = vpop.f32.mrf.mxu0
        %v3455 = vadd.f32 0.0, %v3454
        %3456 = vmatmul.bf16.gmra.mxu0 %v3397
        %v3457 = vpop.f32.mrf.mxu0
        %v3458 = vadd.f32 0.0, %v3457
        %v3459 = vpop.f32.mrf.mxu0
        %v3460 = vadd.f32 0.0, %v3459
        %3461 = vmatmul.bf16.gmra.mxu0 %v3400
        %v3462 = vpop.f32.mrf.mxu0
        %v3463 = vadd.f32 0.0, %v3462
        %v3464 = vpop.f32.mrf.mxu0
        %v3465 = vadd.f32 0.0, %v3464
        %3466 = vmatmul.bf16.gmra.mxu0 %v3403
        %v3467 = vpop.f32.mrf.mxu0
        %v3468 = vadd.f32 0.0, %v3467
        %v3469 = vpop.f32.mrf.mxu0
        %v3470 = vadd.f32 0.0, %v3469
        %3471 = vmatmul.bf16.gmra.mxu0 %v3406
        %v3472 = vpop.f32.mrf.mxu0
        %v3473 = vadd.f32 0.0, %v3472
        %v3474 = vpop.f32.mrf.mxu0
        %v3475 = vadd.f32 0.0, %v3474
        %3476 = vmatmul.bf16.gmra.mxu0 %v3409
        %v3477 = vpop.f32.mrf.mxu0
        %v3478 = vadd.f32 0.0, %v3477
        %v3479 = vpop.f32.mrf.mxu0
        %v3480 = vadd.f32 0.0, %v3479
        %3481 = vmatmul.bf16.gmra.mxu0 %v3412
        %v3482 = vpop.f32.mrf.mxu0
        %v3483 = vadd.f32 0.0, %v3482
        %v3484 = vpop.f32.mrf.mxu0
        %v3485 = vadd.f32 0.0, %v3484
        %3486 = vmatmul.bf16.gmra.mxu0 %v3415
        %v3487 = vpop.f32.mrf.mxu0
        %v3488 = vadd.f32 0.0, %v3487
        %v3489 = vpop.f32.mrf.mxu0
        %v3490 = vadd.f32 0.0, %v3489
        %3491 = vmatmul.bf16.gmra.mxu0 %v3418
        %v3492 = vpop.f32.mrf.mxu0
        %v3493 = vadd.f32 0.0, %v3492
        %v3494 = vpop.f32.mrf.mxu0
        %v3495 = vadd.f32 0.0, %v3494
        %3496 = vmatmul.bf16.gmra.mxu0 %v3421
        %v3497 = vpop.f32.mrf.mxu0
        %v3498 = vadd.f32 0.0, %v3497
        %v3499 = vpop.f32.mrf.mxu0
        %v3500 = vadd.f32 0.0, %v3499
        %3501 = vmatmul.bf16.gmra.mxu0 %v3424
        %v3502 = vpop.f32.mrf.mxu0
        %v3503 = vadd.f32 0.0, %v3502
        %v3504 = vpop.f32.mrf.mxu0
        %v3505 = vadd.f32 0.0, %v3504
        %3506 = vmatmul.bf16.gmra.mxu0 %v3427
        %v3507 = vpop.f32.mrf.mxu0
        %v3508 = vadd.f32 0.0, %v3507
        %v3509 = vpop.f32.mrf.mxu0
        %v3510 = vadd.f32 0.0, %v3509
        %3511 = vmatmul.bf16.gmra.mxu0 %v3430
        %v3512 = vpop.f32.mrf.mxu0
        %v3513 = vadd.f32 0.0, %v3512
        %v3514 = vpop.f32.mrf.mxu0
        %v3515 = vadd.f32 0.0, %v3514
        %3516 = vmatmul.bf16.gmra.mxu0 %v3433
        %v3517 = vpop.f32.mrf.mxu0
        %v3518 = vadd.f32 0.0, %v3517
        %v3519 = vpop.f32.mrf.mxu0
        %v3520 = vadd.f32 0.0, %v3519
        %3521 = vmatmul.bf16.gmra.mxu0 %v3436
        %v3522 = vpop.f32.mrf.mxu0
        %v3523 = vadd.f32 0.0, %v3522
        %v3524 = vpop.f32.mrf.mxu0
        %v3525 = vadd.f32 0.0, %v3524
        %3526 = vdwg.mxu0
        %v3527 = vadd.f32 %v3162, %v3448
        %v3528 = vadd.f32 %v3163, %v3450
        %v3529 = vadd.f32 %v3164, %v3453
        %v3530 = vadd.f32 %v3165, %v3455
        %v3531 = vadd.f32 %v3166, %v3458
        %v3532 = vadd.f32 %v3167, %v3460
        %v3533 = vadd.f32 %v3168, %v3463
        %v3534 = vadd.f32 %v3169, %v3465
        %v3535 = vadd.f32 %v3170, %v3468
        %v3536 = vadd.f32 %v3171, %v3470
        %v3537 = vadd.f32 %v3172, %v3473
        %v3538 = vadd.f32 %v3173, %v3475
        %v3539 = vadd.f32 %v3174, %v3478
        %v3540 = vadd.f32 %v3175, %v3480
        %v3541 = vadd.f32 %v3176, %v3483
        %v3542 = vadd.f32 %v3177, %v3485
        %v3543 = vadd.f32 %v3178, %v3488
        %v3544 = vadd.f32 %v3179, %v3490
        %v3545 = vadd.f32 %v3180, %v3493
        %v3546 = vadd.f32 %v3181, %v3495
        %v3547 = vadd.f32 %v3182, %v3498
        %v3548 = vadd.f32 %v3183, %v3500
        %v3549 = vadd.f32 %v3184, %v3503
        %v3550 = vadd.f32 %v3185, %v3505
        %v3551 = vadd.f32 %v3186, %v3508
        %v3552 = vadd.f32 %v3187, %v3510
        %v3553 = vadd.f32 %v3188, %v3513
        %v3554 = vadd.f32 %v3189, %v3515
        %v3555 = vadd.f32 %v3190, %v3518
        %v3556 = vadd.f32 %v3191, %v3520
        %v3557 = vadd.f32 %v3192, %v3523
        %v3558 = vadd.f32 %v3193, %v3525
        %v3559 = vld [vmem:[%s4] sm:$0x1]
        %v3561 = vperm.slane %v3559, 0
        %v3563 = vadd.f32 %v3527, %v3561
        %v3564 = vadd.f32 %v3528, %v3561
        %v3565 = vadd.f32 %v3529, %v3561
        %v3566 = vadd.f32 %v3530, %v3561
        %v3567 = vadd.f32 %v3531, %v3561
        %v3568 = vadd.f32 %v3532, %v3561
        %v3569 = vadd.f32 %v3533, %v3561
        %v3570 = vadd.f32 %v3534, %v3561
        %v3571 = vadd.f32 %v3535, %v3561
        %v3572 = vadd.f32 %v3536, %v3561
        %v3573 = vadd.f32 %v3537, %v3561
        %v3574 = vadd.f32 %v3538, %v3561
        %v3575 = vadd.f32 %v3539, %v3561
        %v3576 = vadd.f32 %v3540, %v3561
        %v3577 = vadd.f32 %v3541, %v3561
        %v3578 = vadd.f32 %v3542, %v3561
        %v3579 = vadd.f32 %v3543, %v3561
        %v3580 = vadd.f32 %v3544, %v3561
        %v3581 = vadd.f32 %v3545, %v3561
        %v3582 = vadd.f32 %v3546, %v3561
        %v3583 = vadd.f32 %v3547, %v3561
        %v3584 = vadd.f32 %v3548, %v3561
        %v3585 = vadd.f32 %v3549, %v3561
        %v3586 = vadd.f32 %v3550, %v3561
        %v3587 = vadd.f32 %v3551, %v3561
        %v3588 = vadd.f32 %v3552, %v3561
        %v3589 = vadd.f32 %v3553, %v3561
        %v3590 = vadd.f32 %v3554, %v3561
        %v3591 = vadd.f32 %v3555, %v3561
        %v3592 = vadd.f32 %v3556, %v3561
        %v3593 = vadd.f32 %v3557, %v3561
        %v3594 = vadd.f32 %v3558, %v3561
        %v3595 = vmax.f32 %v3563, 0.0
        %v3596 = vmax.f32 %v3564, 0.0
        %v3597 = vmax.f32 %v3565, 0.0
        %v3598 = vmax.f32 %v3566, 0.0
        %v3599 = vmax.f32 %v3567, 0.0
        %v3600 = vmax.f32 %v3568, 0.0
        %v3601 = vmax.f32 %v3569, 0.0
        %v3602 = vmax.f32 %v3570, 0.0
        %v3603 = vmax.f32 %v3571, 0.0
        %v3604 = vmax.f32 %v3572, 0.0
        %v3605 = vmax.f32 %v3573, 0.0
        %v3606 = vmax.f32 %v3574, 0.0
        %v3607 = vmax.f32 %v3575, 0.0
        %v3608 = vmax.f32 %v3576, 0.0
        %v3609 = vmax.f32 %v3577, 0.0
        %v3610 = vmax.f32 %v3578, 0.0
        %v3611 = vmax.f32 %v3579, 0.0
        %v3612 = vmax.f32 %v3580, 0.0
        %v3613 = vmax.f32 %v3581, 0.0
        %v3614 = vmax.f32 %v3582, 0.0
        %v3615 = vmax.f32 %v3583, 0.0
        %v3616 = vmax.f32 %v3584, 0.0
        %v3617 = vmax.f32 %v3585, 0.0
        %v3618 = vmax.f32 %v3586, 0.0
        %v3619 = vmax.f32 %v3587, 0.0
        %v3620 = vmax.f32 %v3588, 0.0
        %v3621 = vmax.f32 %v3589, 0.0
        %v3622 = vmax.f32 %v3590, 0.0
        %v3623 = vmax.f32 %v3591, 0.0
        %v3624 = vmax.f32 %v3592, 0.0
        %v3625 = vmax.f32 %v3593, 0.0
        %v3626 = vmax.f32 %v3594, 0.0
        %vm3627 = vcmask 516096
        %3628 = vst.msk [vmem:[#allocation3] sm:$0x1] %vm3627, 0
        %3629 = vst.msk [vmem:[#allocation3 + $0xc] sm:$0x1] %vm3627, 0
        %3630 = vst.msk [vmem:[#allocation3 + $0x18] sm:$0x1] %vm3627, 0
        %3631 = vst.msk [vmem:[#allocation3 + $0x24] sm:$0x1] %vm3627, 0
        %3632 = vst.msk [vmem:[#allocation3 + $0x30] sm:$0x1] %vm3627, 0
        %3633 = vst.msk [vmem:[#allocation3 + $0x3c] sm:$0x1] %vm3627, 0
        %3634 = vst.msk [vmem:[#allocation3 + $0x48] sm:$0x1] %vm3627, 0
        %3635 = vst.msk [vmem:[#allocation3 + $0x54] sm:$0x1] %vm3627, 0
        %vm3636 = vcmask 517121
        %3637 = vst.msk [vmem:[#allocation3 + $0x8] sm:$0x2] %vm3636, 0
        %3638 = vst.msk [vmem:[#allocation3 + $0x14] sm:$0x2] %vm3636, 0
        %3639 = vst.msk [vmem:[#allocation3 + $0x20] sm:$0x2] %vm3636, 0
        %3640 = vst.msk [vmem:[#allocation3 + $0x2c] sm:$0x2] %vm3636, 0
        %3641 = vst.msk [vmem:[#allocation3 + $0x38] sm:$0x2] %vm3636, 0
        %3642 = vst.msk [vmem:[#allocation3 + $0x44] sm:$0x2] %vm3636, 0
        %3643 = vst.msk [vmem:[#allocation3 + $0x50] sm:$0x2] %vm3636, 0
        %3644 = vst.msk [vmem:[#allocation3 + $0x5c] sm:$0x2] %vm3636, 0
        %vm3645 = vcmask 523264
        %3646 = vst.msk [vmem:[#allocation6] sm:$0xff] %vm3645, %v3595
        %3647 = vst.msk [vmem:[#allocation6 + $0x8] sm:$0xff] %vm3645, %v3596
        %3648 = vst.msk [vmem:[#allocation6 + $0x10] sm:$0xff] %vm3645, %v3597
        %3649 = vst.msk [vmem:[#allocation6 + $0x18] sm:$0xff] %vm3645, %v3598
        %3650 = vst.msk [vmem:[#allocation6 + $0x20] sm:$0xff] %vm3645, %v3599
        %3651 = vst.msk [vmem:[#allocation6 + $0x28] sm:$0xff] %vm3645, %v3600
        %3652 = vst.msk [vmem:[#allocation6 + $0x30] sm:$0xff] %vm3645, %v3601
        %3653 = vst.msk [vmem:[#allocation6 + $0x38] sm:$0xff] %vm3645, %v3602
        %3654 = vst.msk [vmem:[#allocation6 + $0x40] sm:$0xff] %vm3645, %v3603
        %3655 = vst.msk [vmem:[#allocation6 + $0x48] sm:$0xff] %vm3645, %v3604
        %3656 = vst.msk [vmem:[#allocation6 + $0x50] sm:$0xff] %vm3645, %v3605
        %3657 = vst.msk [vmem:[#allocation6 + $0x58] sm:$0xff] %vm3645, %v3606
        %3658 = vst.msk [vmem:[#allocation6 + $0x60] sm:$0xff] %vm3645, %v3607
        %3659 = vst.msk [vmem:[#allocation6 + $0x68] sm:$0xff] %vm3645, %v3608
        %3660 = vst.msk [vmem:[#allocation6 + $0x70] sm:$0xff] %vm3645, %v3609
        %3661 = vst.msk [vmem:[#allocation6 + $0x78] sm:$0xff] %vm3645, %v3610
        %3662 = vst.msk [vmem:[#allocation6 + $0x80] sm:$0xff] %vm3645, %v3611
        %3663 = vst.msk [vmem:[#allocation6 + $0x88] sm:$0xff] %vm3645, %v3612
        %3664 = vst.msk [vmem:[#allocation6 + $0x90] sm:$0xff] %vm3645, %v3613
        %3665 = vst.msk [vmem:[#allocation6 + $0x98] sm:$0xff] %vm3645, %v3614
        %3666 = vst.msk [vmem:[#allocation6 + $0xa0] sm:$0xff] %vm3645, %v3615
        %3667 = vst.msk [vmem:[#allocation6 + $0xa8] sm:$0xff] %vm3645, %v3616
        %3668 = vst.msk [vmem:[#allocation6 + $0xb0] sm:$0xff] %vm3645, %v3617
        %3669 = vst.msk [vmem:[#allocation6 + $0xb8] sm:$0xff] %vm3645, %v3618
        %3670 = vst.msk [vmem:[#allocation6 + $0xc0] sm:$0xff] %vm3645, %v3619
        %3671 = vst.msk [vmem:[#allocation6 + $0xc8] sm:$0xff] %vm3645, %v3620
        %3672 = vst.msk [vmem:[#allocation6 + $0xd0] sm:$0xff] %vm3645, %v3621
        %3673 = vst.msk [vmem:[#allocation6 + $0xd8] sm:$0xff] %vm3645, %v3622
        %3674 = vst.msk [vmem:[#allocation6 + $0xe0] sm:$0xff] %vm3645, %v3623
        %3675 = vst.msk [vmem:[#allocation6 + $0xe8] sm:$0xff] %vm3645, %v3624
        %3676 = vst.msk [vmem:[#allocation6 + $0xf0] sm:$0xff] %vm3645, %v3625
        %3677 = vst.msk [vmem:[#allocation6 + $0xf8] sm:$0xff] %vm3645, %v3626
        %v3678 = vld [vmem:[#allocation6] ss:$2 sm:$0xff]
        %s3679 = scalar_lea.vmem [#allocation6], 16
        %v3680 = vld [vmem:[%s3679] ss:$2 sm:$0xff]
        %s3681 = scalar_lea.vmem [#allocation6], 32
        %v3682 = vld [vmem:[%s3681] ss:$2 sm:$0xff]
        %s3683 = scalar_lea.vmem [#allocation6], 48
        %v3684 = vld [vmem:[%s3683] ss:$2 sm:$0xff]
        %s3685 = scalar_lea.vmem [#allocation6], 64
        %v3686 = vld [vmem:[%s3685] ss:$2 sm:$0xff]
        %s3687 = scalar_lea.vmem [#allocation6], 80
        %v3688 = vld [vmem:[%s3687] ss:$2 sm:$0xff]
        %s3689 = scalar_lea.vmem [#allocation6], 96
        %v3690 = vld [vmem:[%s3689] ss:$2 sm:$0xff]
        %s3691 = scalar_lea.vmem [#allocation6], 112
        %v3692 = vld [vmem:[%s3691] ss:$2 sm:$0xff]
        %s3693 = scalar_lea.vmem [#allocation6], 128
        %v3694 = vld [vmem:[%s3693] ss:$2 sm:$0xff]
        %s3695 = scalar_lea.vmem [#allocation6], 144
        %v3696 = vld [vmem:[%s3695] ss:$2 sm:$0xff]
        %s3697 = scalar_lea.vmem [#allocation6], 160
        %v3698 = vld [vmem:[%s3697] ss:$2 sm:$0xff]
        %s3699 = scalar_lea.vmem [#allocation6], 176
        %v3700 = vld [vmem:[%s3699] ss:$2 sm:$0xff]
        %s3701 = scalar_lea.vmem [#allocation6], 192
        %v3702 = vld [vmem:[%s3701] ss:$2 sm:$0xff]
        %s3703 = scalar_lea.vmem [#allocation6], 208
        %v3704 = vld [vmem:[%s3703] ss:$2 sm:$0xff]
        %s3705 = scalar_lea.vmem [#allocation6], 224
        %v3706 = vld [vmem:[%s3705] ss:$2 sm:$0xff]
        %s3707 = scalar_lea.vmem [#allocation6], 240
        %v3708 = vld [vmem:[%s3707] ss:$2 sm:$0xff]
        %s3709 = scalar_lea.vmem [#allocation6], 1
        %v3710 = vld [vmem:[%s3709] ss:$2 sm:$0xff]
        %s3711 = scalar_lea.vmem [#allocation6], 17
        %v3712 = vld [vmem:[%s3711] ss:$2 sm:$0xff]
        %s3713 = scalar_lea.vmem [#allocation6], 33
        %v3714 = vld [vmem:[%s3713] ss:$2 sm:$0xff]
        %s3715 = scalar_lea.vmem [#allocation6], 49
        %v3716 = vld [vmem:[%s3715] ss:$2 sm:$0xff]
        %s3717 = scalar_lea.vmem [#allocation6], 65
        %v3718 = vld [vmem:[%s3717] ss:$2 sm:$0xff]
        %s3719 = scalar_lea.vmem [#allocation6], 81
        %v3720 = vld [vmem:[%s3719] ss:$2 sm:$0xff]
        %s3721 = scalar_lea.vmem [#allocation6], 97
        %v3722 = vld [vmem:[%s3721] ss:$2 sm:$0xff]
        %s3723 = scalar_lea.vmem [#allocation6], 113
        %v3724 = vld [vmem:[%s3723] ss:$2 sm:$0xff]
        %s3725 = scalar_lea.vmem [#allocation6], 129
        %v3726 = vld [vmem:[%s3725] ss:$2 sm:$0xff]
        %s3727 = scalar_lea.vmem [#allocation6], 145
        %v3728 = vld [vmem:[%s3727] ss:$2 sm:$0xff]
        %s3729 = scalar_lea.vmem [#allocation6], 161
        %v3730 = vld [vmem:[%s3729] ss:$2 sm:$0xff]
        %s3731 = scalar_lea.vmem [#allocation6], 177
        %v3732 = vld [vmem:[%s3731] ss:$2 sm:$0xff]
        %s3733 = scalar_lea.vmem [#allocation6], 193
        %v3734 = vld [vmem:[%s3733] ss:$2 sm:$0xff]
        %s3735 = scalar_lea.vmem [#allocation6], 209
        %v3736 = vld [vmem:[%s3735] ss:$2 sm:$0xff]
        %s3737 = scalar_lea.vmem [#allocation6], 225
        %v3738 = vld [vmem:[%s3737] ss:$2 sm:$0xff]
        %s3739 = scalar_lea.vmem [#allocation6], 241
        %v3740 = vld [vmem:[%s3739] ss:$2 sm:$0xff]
        %v3741 = vmax.f32 %v3678, %v3710
        %v3742 = vmax.f32 %v3680, %v3712
        %v3743 = vmax.f32 %v3682, %v3714
        %v3744 = vmax.f32 %v3684, %v3716
        %v3745 = vmax.f32 %v3686, %v3718
        %v3746 = vmax.f32 %v3688, %v3720
        %v3747 = vmax.f32 %v3690, %v3722
        %v3748 = vmax.f32 %v3692, %v3724
        %v3749 = vmax.f32 %v3694, %v3726
        %v3750 = vmax.f32 %v3696, %v3728
        %v3751 = vmax.f32 %v3698, %v3730
        %v3752 = vmax.f32 %v3700, %v3732
        %v3753 = vmax.f32 %v3702, %v3734
        %v3754 = vmax.f32 %v3704, %v3736
        %v3755 = vmax.f32 %v3706, %v3738
        %v3756 = vmax.f32 %v3708, %v3740
        %v3757 = vpack.c.bf16 %v3741, %v3741
        %v3758 = vpack.c.bf16 %v3742, %v3742
        %v3759 = vpack.c.bf16 %v3743, %v3743
        %v3760 = vpack.c.bf16 %v3744, %v3744
        %v3761 = vpack.c.bf16 %v3745, %v3745
        %v3762 = vpack.c.bf16 %v3746, %v3746
        %v3763 = vpack.c.bf16 %v3747, %v3747
        %v3764 = vpack.c.bf16 %v3748, %v3748
        %v3765 = vpack.c.bf16 %v3749, %v3749
        %v3766 = vpack.c.bf16 %v3750, %v3750
        %v3767 = vpack.c.bf16 %v3751, %v3751
        %v3768 = vpack.c.bf16 %v3752, %v3752
        %v3769 = vpack.c.bf16 %v3753, %v3753
        %v3770 = vpack.c.bf16 %v3754, %v3754
        %v3771 = vpack.c.bf16 %v3755, %v3755
        %v3772 = vpack.c.bf16 %v3756, %v3756
        %v3789 = vrot.slane %v3757, 7
        %v3790 = vrot.slane %v3789, 4
        %v3791 = vrot.slane %v3758, 7
        %v3792 = vsel %vm1319, %v3790, %v3791
        %v3793 = vrot.slane %v3791, 4
        %v3794 = vrot.slane %v3759, 7
        %v3795 = vrot.slane %v3794, 4
        %v3796 = vrot.slane %v3760, 7
        %v3797 = vsel %vm1319, %v3795, %v3796
        %v3798 = vrot.slane %v3796, 4
        %v3799 = vrot.slane %v3761, 7
        %v3800 = vrot.slane %v3799, 4
        %v3801 = vrot.slane %v3762, 7
        %v3802 = vsel %vm1319, %v3800, %v3801
        %v3803 = vrot.slane %v3801, 4
        %v3804 = vrot.slane %v3763, 7
        %v3805 = vrot.slane %v3804, 4
        %v3806 = vrot.slane %v3764, 7
        %v3807 = vsel %vm1319, %v3805, %v3806
        %v3808 = vrot.slane %v3806, 4
        %v3809 = vrot.slane %v3765, 7
        %v3810 = vrot.slane %v3809, 4
        %v3811 = vrot.slane %v3766, 7
        %v3812 = vsel %vm1319, %v3810, %v3811
        %v3813 = vrot.slane %v3811, 4
        %v3814 = vrot.slane %v3767, 7
        %v3815 = vrot.slane %v3814, 4
        %v3816 = vrot.slane %v3768, 7
        %v3817 = vsel %vm1319, %v3815, %v3816
        %v3818 = vrot.slane %v3816, 4
        %v3819 = vrot.slane %v3769, 7
        %v3820 = vrot.slane %v3819, 4
        %v3821 = vrot.slane %v3770, 7
        %v3822 = vsel %vm1319, %v3820, %v3821
        %v3823 = vrot.slane %v3821, 4
        %v3824 = vrot.slane %v3771, 7
        %v3825 = vrot.slane %v3824, 4
        %v3826 = vrot.slane %v3772, 7
        %v3827 = vsel %vm1319, %v3825, %v3826
        %v3828 = vrot.slane %v3826, 4
        %vm3853 = vcmask 519169
        %3854 = vst.msk [vmem:[#allocation3] sm:$0xe] %vm3853, %v3789
        %vm3855 = vcmask 519168
        %3856 = vst.msk [vmem:[#allocation3 + $0x4] sm:$0xf] %vm3855, %v3792
        %3857 = vst.msk [vmem:[#allocation3 + $0x8] sm:$0x1] %vm3627, %v3793
        %3858 = vst.msk [vmem:[#allocation3 + $0xc] sm:$0xe] %vm3853, %v3794
        %3859 = vst.msk [vmem:[#allocation3 + $0x10] sm:$0xf] %vm3855, %v3797
        %3860 = vst.msk [vmem:[#allocation3 + $0x14] sm:$0x1] %vm3627, %v3798
        %3861 = vst.msk [vmem:[#allocation3 + $0x18] sm:$0xe] %vm3853, %v3799
        %3862 = vst.msk [vmem:[#allocation3 + $0x1c] sm:$0xf] %vm3855, %v3802
        %3863 = vst.msk [vmem:[#allocation3 + $0x20] sm:$0x1] %vm3627, %v3803
        %3864 = vst.msk [vmem:[#allocation3 + $0x24] sm:$0xe] %vm3853, %v3804
        %3865 = vst.msk [vmem:[#allocation3 + $0x28] sm:$0xf] %vm3855, %v3807
        %3866 = vst.msk [vmem:[#allocation3 + $0x2c] sm:$0x1] %vm3627, %v3808
        %3867 = vst.msk [vmem:[#allocation3 + $0x30] sm:$0xe] %vm3853, %v3809
        %3868 = vst.msk [vmem:[#allocation3 + $0x34] sm:$0xf] %vm3855, %v3812
        %3869 = vst.msk [vmem:[#allocation3 + $0x38] sm:$0x1] %vm3627, %v3813
        %3870 = vst.msk [vmem:[#allocation3 + $0x3c] sm:$0xe] %vm3853, %v3814
        %3871 = vst.msk [vmem:[#allocation3 + $0x40] sm:$0xf] %vm3855, %v3817
        %3872 = vst.msk [vmem:[#allocation3 + $0x44] sm:$0x1] %vm3627, %v3818
        %3873 = vst.msk [vmem:[#allocation3 + $0x48] sm:$0xe] %vm3853, %v3819
        %3874 = vst.msk [vmem:[#allocation3 + $0x4c] sm:$0xf] %vm3855, %v3822
        %3875 = vst.msk [vmem:[#allocation3 + $0x50] sm:$0x1] %vm3627, %v3823
        %3876 = vst.msk [vmem:[#allocation3 + $0x54] sm:$0xe] %vm3853, %v3824
        %3877 = vst.msk [vmem:[#allocation3 + $0x58] sm:$0xf] %vm3855, %v3827
        %3878 = vst.msk [vmem:[#allocation3 + $0x5c] sm:$0x1] %vm3627, %v3828
        %v3879 = vld [vmem:[#allocation3] sm:$0xf]
        %v3880 = vld [vmem:[#allocation3 + $0x4] sm:$0xf]
        %v3881 = vld [vmem:[#allocation3 + $0xc] sm:$0xf]
        %v3882 = vld [vmem:[#allocation3 + $0x10] sm:$0xf]
        %v3883 = vld [vmem:[#allocation3 + $0x18] sm:$0xf]
        %v3884 = vld [vmem:[#allocation3 + $0x1c] sm:$0xf]
        %v3885 = vld [vmem:[#allocation3 + $0x24] sm:$0xf]
        %v3886 = vld [vmem:[#allocation3 + $0x28] sm:$0xf]
        %v3887 = vld [vmem:[#allocation3 + $0x30] sm:$0xf]
        %v3888 = vld [vmem:[#allocation3 + $0x34] sm:$0xf]
        %v3889 = vld [vmem:[#allocation3 + $0x3c] sm:$0xf]
        %v3890 = vld [vmem:[#allocation3 + $0x40] sm:$0xf]
        %v3891 = vld [vmem:[#allocation3 + $0x48] sm:$0xf]
        %v3892 = vld [vmem:[#allocation3 + $0x4c] sm:$0xf]
        %v3893 = vld [vmem:[#allocation3 + $0x54] sm:$0xf]
        %v3894 = vld [vmem:[#allocation3 + $0x58] sm:$0xf]
        %v3895 = vld [vmem:[%s5] sm:$0xf]
        %v3896 = vld [vmem:[%s5 + $0x4] sm:$0xf]
        %v3897 = vld [vmem:[%s5 + $0x8] sm:$0xf]
        %v3898 = vld [vmem:[%s5 + $0xc] sm:$0xf]
        %v3899 = vld [vmem:[%s5 + $0x10] sm:$0xf]
        %v3900 = vld [vmem:[%s5 + $0x14] sm:$0xf]
        %v3901 = vld [vmem:[%s5 + $0x18] sm:$0xf]
        %v3902 = vld [vmem:[%s5 + $0x1c] sm:$0xf]
        %v3903 = vld [vmem:[#allocation3 + $0x8] sm:$0x1]
        %v3904 = vld [vmem:[#allocation3 + $0x14] sm:$0x1]
        %v3905 = vld [vmem:[#allocation3 + $0x20] sm:$0x1]
        %v3906 = vld [vmem:[#allocation3 + $0x2c] sm:$0x1]
        %v3907 = vld [vmem:[#allocation3 + $0x38] sm:$0x1]
        %v3908 = vld [vmem:[#allocation3 + $0x44] sm:$0x1]
        %v3909 = vld [vmem:[#allocation3 + $0x50] sm:$0x1]
        %v3910 = vld [vmem:[#allocation3 + $0x5c] sm:$0x1]
        %v3912 = vshrl.u32 %v3879, 16
        %v3914 = vrot.slane %v3912, 4
        %v3915 = vshll.u32 %v3879, 16
        %v3917 = vrot.slane %v3915, 5
        %v3918 = vor.u32 %v3914, %v3917
        %v3919 = vrot.slane %v3918, 4
        %v3921 = vshll.u32 %v3880, 16
        %v3923 = vrot.slane %v3921, 5
        %v3924 = vsel %vm1536, %v3919, %v3923
        %v3925 = vshrl.u32 %v3880, 16
        %v3927 = vrot.slane %v3925, 4
        %v3928 = vor.u32 %v3927, %v3923
        %v3929 = vrot.slane %v3928, 4
        %v3931 = vshll.u32 %v3903, 16
        %v3933 = vrot.slane %v3931, 5
        %v3934 = vsel %vm1536, %v3929, %v3933
        %v3936 = vshrl.u32 %v3881, 16
        %v3938 = vrot.slane %v3936, 4
        %v3939 = vshll.u32 %v3881, 16
        %v3941 = vrot.slane %v3939, 5
        %v3942 = vor.u32 %v3938, %v3941
        %v3943 = vrot.slane %v3942, 4
        %v3945 = vshll.u32 %v3882, 16
        %v3947 = vrot.slane %v3945, 5
        %v3948 = vsel %vm1536, %v3943, %v3947
        %v3949 = vshrl.u32 %v3882, 16
        %v3951 = vrot.slane %v3949, 4
        %v3952 = vor.u32 %v3951, %v3947
        %v3953 = vrot.slane %v3952, 4
        %v3955 = vshll.u32 %v3904, 16
        %v3957 = vrot.slane %v3955, 5
        %v3958 = vsel %vm1536, %v3953, %v3957
        %v3960 = vshrl.u32 %v3883, 16
        %v3962 = vrot.slane %v3960, 4
        %v3963 = vshll.u32 %v3883, 16
        %v3965 = vrot.slane %v3963, 5
        %v3966 = vor.u32 %v3962, %v3965
        %v3967 = vrot.slane %v3966, 4
        %v3969 = vshll.u32 %v3884, 16
        %v3971 = vrot.slane %v3969, 5
        %v3972 = vsel %vm1536, %v3967, %v3971
        %v3973 = vshrl.u32 %v3884, 16
        %v3975 = vrot.slane %v3973, 4
        %v3976 = vor.u32 %v3975, %v3971
        %v3977 = vrot.slane %v3976, 4
        %v3979 = vshll.u32 %v3905, 16
        %v3981 = vrot.slane %v3979, 5
        %v3982 = vsel %vm1536, %v3977, %v3981
        %v3984 = vshrl.u32 %v3885, 16
        %v3986 = vrot.slane %v3984, 4
        %v3987 = vshll.u32 %v3885, 16
        %v3989 = vrot.slane %v3987, 5
        %v3990 = vor.u32 %v3986, %v3989
        %v3991 = vrot.slane %v3990, 4
        %v3993 = vshll.u32 %v3886, 16
        %v3995 = vrot.slane %v3993, 5
        %v3996 = vsel %vm1536, %v3991, %v3995
        %v3997 = vshrl.u32 %v3886, 16
        %v3999 = vrot.slane %v3997, 4
        %v4000 = vor.u32 %v3999, %v3995
        %v4001 = vrot.slane %v4000, 4
        %v4003 = vshll.u32 %v3906, 16
        %v4005 = vrot.slane %v4003, 5
        %v4006 = vsel %vm1536, %v4001, %v4005
        %v4008 = vshrl.u32 %v3887, 16
        %v4010 = vrot.slane %v4008, 4
        %v4011 = vshll.u32 %v3887, 16
        %v4013 = vrot.slane %v4011, 5
        %v4014 = vor.u32 %v4010, %v4013
        %v4015 = vrot.slane %v4014, 4
        %v4017 = vshll.u32 %v3888, 16
        %v4019 = vrot.slane %v4017, 5
        %v4020 = vsel %vm1536, %v4015, %v4019
        %v4021 = vshrl.u32 %v3888, 16
        %v4023 = vrot.slane %v4021, 4
        %v4024 = vor.u32 %v4023, %v4019
        %v4025 = vrot.slane %v4024, 4
        %v4027 = vshll.u32 %v3907, 16
        %v4029 = vrot.slane %v4027, 5
        %v4030 = vsel %vm1536, %v4025, %v4029
        %v4032 = vshrl.u32 %v3889, 16
        %v4034 = vrot.slane %v4032, 4
        %v4035 = vshll.u32 %v3889, 16
        %v4037 = vrot.slane %v4035, 5
        %v4038 = vor.u32 %v4034, %v4037
        %v4039 = vrot.slane %v4038, 4
        %v4041 = vshll.u32 %v3890, 16
        %v4043 = vrot.slane %v4041, 5
        %v4044 = vsel %vm1536, %v4039, %v4043
        %v4045 = vshrl.u32 %v3890, 16
        %v4047 = vrot.slane %v4045, 4
        %v4048 = vor.u32 %v4047, %v4043
        %v4049 = vrot.slane %v4048, 4
        %v4051 = vshll.u32 %v3908, 16
        %v4053 = vrot.slane %v4051, 5
        %v4054 = vsel %vm1536, %v4049, %v4053
        %v4056 = vshrl.u32 %v3891, 16
        %v4058 = vrot.slane %v4056, 4
        %v4059 = vshll.u32 %v3891, 16
        %v4061 = vrot.slane %v4059, 5
        %v4062 = vor.u32 %v4058, %v4061
        %v4063 = vrot.slane %v4062, 4
        %v4065 = vshll.u32 %v3892, 16
        %v4067 = vrot.slane %v4065, 5
        %v4068 = vsel %vm1536, %v4063, %v4067
        %v4069 = vshrl.u32 %v3892, 16
        %v4071 = vrot.slane %v4069, 4
        %v4072 = vor.u32 %v4071, %v4067
        %v4073 = vrot.slane %v4072, 4
        %v4075 = vshll.u32 %v3909, 16
        %v4077 = vrot.slane %v4075, 5
        %v4078 = vsel %vm1536, %v4073, %v4077
        %v4080 = vshrl.u32 %v3893, 16
        %v4082 = vrot.slane %v4080, 4
        %v4083 = vshll.u32 %v3893, 16
        %v4085 = vrot.slane %v4083, 5
        %v4086 = vor.u32 %v4082, %v4085
        %v4087 = vrot.slane %v4086, 4
        %v4089 = vshll.u32 %v3894, 16
        %v4091 = vrot.slane %v4089, 5
        %v4092 = vsel %vm1536, %v4087, %v4091
        %v4093 = vshrl.u32 %v3894, 16
        %v4095 = vrot.slane %v4093, 4
        %v4096 = vor.u32 %v4095, %v4091
        %v4097 = vrot.slane %v4096, 4
        %v4099 = vshll.u32 %v3910, 16
        %v4101 = vrot.slane %v4099, 5
        %v4102 = vsel %vm1536, %v4097, %v4101
        %s4103 = scalar_lea.vmem %s5, 32
        %v4104 = vld [vmem:[%s4103] sm:$0xf]
        %v4105 = vld [vmem:[%s4103 + $0x4] sm:$0xf]
        %v4106 = vld [vmem:[%s4103 + $0x8] sm:$0xf]
        %v4107 = vld [vmem:[%s4103 + $0xc] sm:$0xf]
        %v4108 = vld [vmem:[%s4103 + $0x10] sm:$0xf]
        %v4109 = vld [vmem:[%s4103 + $0x14] sm:$0xf]
        %v4110 = vld [vmem:[%s4103 + $0x18] sm:$0xf]
        %v4111 = vld [vmem:[%s4103 + $0x1c] sm:$0xf]
        %v4112 = vunpack.c.l.b16 %v3924
        %v4113 = vunpack.c.l.b16 %v3934
        %v4114 = vunpack.c.l.b16 %v3948
        %v4115 = vunpack.c.l.b16 %v3958
        %v4116 = vunpack.c.l.b16 %v3972
        %v4117 = vunpack.c.l.b16 %v3982
        %v4118 = vunpack.c.l.b16 %v3996
        %v4119 = vunpack.c.l.b16 %v4006
        %v4120 = vunpack.c.l.b16 %v4020
        %v4121 = vunpack.c.l.b16 %v4030
        %v4122 = vunpack.c.l.b16 %v4044
        %v4123 = vunpack.c.l.b16 %v4054
        %v4124 = vunpack.c.l.b16 %v4068
        %v4125 = vunpack.c.l.b16 %v4078
        %v4126 = vunpack.c.l.b16 %v4092
        %v4127 = vunpack.c.l.b16 %v4102
        %v4128 = vpack.c.b16 %v4113, %v4112
        %v4129 = vpack.c.b16 %v4115, %v4114
        %v4130 = vpack.c.b16 %v4117, %v4116
        %v4131 = vpack.c.b16 %v4119, %v4118
        %v4132 = vpack.c.b16 %v4121, %v4120
        %v4133 = vpack.c.b16 %v4123, %v4122
        %v4134 = vpack.c.b16 %v4125, %v4124
        %v4135 = vpack.c.b16 %v4127, %v4126
        %v4144 = vunpack.c.l.b16 %v4104
        %v4145 = vunpack.c.l.b16 %v4105
        %v4146 = vunpack.c.l.b16 %v4106
        %v4147 = vunpack.c.l.b16 %v4107
        %v4148 = vunpack.c.l.b16 %v4108
        %v4149 = vunpack.c.l.b16 %v4109
        %v4150 = vunpack.c.l.b16 %v4110
        %v4151 = vunpack.c.l.b16 %v4111
        %v4152 = vpack.c.b16 %v4145, %v4144
        %v4153 = vpack.c.b16 %v4147, %v4146
        %v4154 = vpack.c.b16 %v4149, %v4148
        %v4155 = vpack.c.b16 %v4151, %v4150
        %v4161 = vsel %vm3645, %v4128, 0
        %v4164 = vsel %vm3645, %v4129, 0
        %v4167 = vsel %vm3645, %v4130, 0
        %v4170 = vsel %vm3645, %v4131, 0
        %v4173 = vsel %vm3645, %v4132, 0
        %v4176 = vsel %vm3645, %v4133, 0
        %v4179 = vsel %vm3645, %v4134, 0
        %v4182 = vsel %vm3645, %v4135, 0
        %4184 = vmatpush.bf16.msra.mxu0 0
        %4185 = vmatpush.bf16.msra.mxu0 0
        %4186 = vmatpush.bf16.msra.mxu0 0
        %4187 = vmatpush.bf16.msra.mxu0 0
        %4188 = vmatpush.bf16.msra.mxu0 %v4155
        %4189 = vmatpush.bf16.msra.mxu0 %v4154
        %4190 = vmatpush.bf16.msra.mxu0 %v4153
        %4191 = vmatpush.bf16.msra.mxu0 %v4152
        %4192 = vmatmul.bf16.gmra.mxu0 %v4161
        %v4193 = vpop.f32.mrf.mxu0
        %v4194 = vadd.f32 0.0, %v4193
        %v4195 = vpop.f32.mrf.mxu0
        %v4196 = vadd.f32 0.0, %v4195
        %4197 = vmatmul.bf16.gmra.mxu0 %v4164
        %v4198 = vpop.f32.mrf.mxu0
        %v4199 = vadd.f32 0.0, %v4198
        %v4200 = vpop.f32.mrf.mxu0
        %v4201 = vadd.f32 0.0, %v4200
        %4202 = vmatmul.bf16.gmra.mxu0 %v4167
        %v4203 = vpop.f32.mrf.mxu0
        %v4204 = vadd.f32 0.0, %v4203
        %v4205 = vpop.f32.mrf.mxu0
        %v4206 = vadd.f32 0.0, %v4205
        %4207 = vmatmul.bf16.gmra.mxu0 %v4170
        %v4208 = vpop.f32.mrf.mxu0
        %v4209 = vadd.f32 0.0, %v4208
        %v4210 = vpop.f32.mrf.mxu0
        %v4211 = vadd.f32 0.0, %v4210
        %4212 = vmatmul.bf16.gmra.mxu0 %v4173
        %v4213 = vpop.f32.mrf.mxu0
        %v4214 = vadd.f32 0.0, %v4213
        %v4215 = vpop.f32.mrf.mxu0
        %v4216 = vadd.f32 0.0, %v4215
        %4217 = vmatmul.bf16.gmra.mxu0 %v4176
        %v4218 = vpop.f32.mrf.mxu0
        %v4219 = vadd.f32 0.0, %v4218
        %v4220 = vpop.f32.mrf.mxu0
        %v4221 = vadd.f32 0.0, %v4220
        %4222 = vmatmul.bf16.gmra.mxu0 %v4179
        %v4223 = vpop.f32.mrf.mxu0
        %v4224 = vadd.f32 0.0, %v4223
        %v4225 = vpop.f32.mrf.mxu0
        %v4226 = vadd.f32 0.0, %v4225
        %4227 = vmatmul.bf16.gmra.mxu0 %v4182
        %v4228 = vpop.f32.mrf.mxu0
        %v4229 = vadd.f32 0.0, %v4228
        %v4230 = vpop.f32.mrf.mxu0
        %v4231 = vadd.f32 0.0, %v4230
        %4232 = vdwg.mxu0
        %v4249 = vunpack.c.l.b16 %v3879
        %v4250 = vunpack.c.l.b16 %v3880
        %v4251 = vunpack.c.l.b16 %v3881
        %v4252 = vunpack.c.l.b16 %v3882
        %v4253 = vunpack.c.l.b16 %v3883
        %v4254 = vunpack.c.l.b16 %v3884
        %v4255 = vunpack.c.l.b16 %v3885
        %v4256 = vunpack.c.l.b16 %v3886
        %v4257 = vunpack.c.l.b16 %v3887
        %v4258 = vunpack.c.l.b16 %v3888
        %v4259 = vunpack.c.l.b16 %v3889
        %v4260 = vunpack.c.l.b16 %v3890
        %v4261 = vunpack.c.l.b16 %v3891
        %v4262 = vunpack.c.l.b16 %v3892
        %v4263 = vunpack.c.l.b16 %v3893
        %v4264 = vunpack.c.l.b16 %v3894
        %v4265 = vpack.c.b16 %v4250, %v4249
        %v4266 = vpack.c.b16 %v4252, %v4251
        %v4267 = vpack.c.b16 %v4254, %v4253
        %v4268 = vpack.c.b16 %v4256, %v4255
        %v4269 = vpack.c.b16 %v4258, %v4257
        %v4270 = vpack.c.b16 %v4260, %v4259
        %v4271 = vpack.c.b16 %v4262, %v4261
        %v4272 = vpack.c.b16 %v4264, %v4263
        %v4281 = vunpack.c.l.b16 %v3895
        %v4282 = vunpack.c.l.b16 %v3896
        %v4283 = vunpack.c.l.b16 %v3897
        %v4284 = vunpack.c.l.b16 %v3898
        %v4285 = vunpack.c.l.b16 %v3899
        %v4286 = vunpack.c.l.b16 %v3900
        %v4287 = vunpack.c.l.b16 %v3901
        %v4288 = vunpack.c.l.b16 %v3902
        %v4289 = vpack.c.b16 %v4282, %v4281
        %v4290 = vpack.c.b16 %v4284, %v4283
        %v4291 = vpack.c.b16 %v4286, %v4285
        %v4292 = vpack.c.b16 %v4288, %v4287
        %v4298 = vsel %vm3645, %v4265, 0
        %v4301 = vsel %vm3645, %v4266, 0
        %v4304 = vsel %vm3645, %v4267, 0
        %v4307 = vsel %vm3645, %v4268, 0
        %v4310 = vsel %vm3645, %v4269, 0
        %v4313 = vsel %vm3645, %v4270, 0
        %v4316 = vsel %vm3645, %v4271, 0
        %v4319 = vsel %vm3645, %v4272, 0
        %4321 = vmatpush.bf16.msra.mxu0 0
        %4322 = vmatpush.bf16.msra.mxu0 0
        %4323 = vmatpush.bf16.msra.mxu0 0
        %4324 = vmatpush.bf16.msra.mxu0 0
        %4325 = vmatpush.bf16.msra.mxu0 %v4292
        %4326 = vmatpush.bf16.msra.mxu0 %v4291
        %4327 = vmatpush.bf16.msra.mxu0 %v4290
        %4328 = vmatpush.bf16.msra.mxu0 %v4289
        %4329 = vmatmul.bf16.gmra.mxu0 %v4298
        %v4330 = vpop.f32.mrf.mxu0
        %v4331 = vadd.f32 %v4194, %v4330
        %v4332 = vpop.f32.mrf.mxu0
        %v4333 = vadd.f32 %v4196, %v4332
        %4334 = vmatmul.bf16.gmra.mxu0 %v4301
        %v4335 = vpop.f32.mrf.mxu0
        %v4336 = vadd.f32 %v4199, %v4335
        %v4337 = vpop.f32.mrf.mxu0
        %v4338 = vadd.f32 %v4201, %v4337
        %4339 = vmatmul.bf16.gmra.mxu0 %v4304
        %v4340 = vpop.f32.mrf.mxu0
        %v4341 = vadd.f32 %v4204, %v4340
        %v4342 = vpop.f32.mrf.mxu0
        %v4343 = vadd.f32 %v4206, %v4342
        %4344 = vmatmul.bf16.gmra.mxu0 %v4307
        %v4345 = vpop.f32.mrf.mxu0
        %v4346 = vadd.f32 %v4209, %v4345
        %v4347 = vpop.f32.mrf.mxu0
        %v4348 = vadd.f32 %v4211, %v4347
        %4349 = vmatmul.bf16.gmra.mxu0 %v4310
        %v4350 = vpop.f32.mrf.mxu0
        %v4351 = vadd.f32 %v4214, %v4350
        %v4352 = vpop.f32.mrf.mxu0
        %v4353 = vadd.f32 %v4216, %v4352
        %4354 = vmatmul.bf16.gmra.mxu0 %v4313
        %v4355 = vpop.f32.mrf.mxu0
        %v4356 = vadd.f32 %v4219, %v4355
        %v4357 = vpop.f32.mrf.mxu0
        %v4358 = vadd.f32 %v4221, %v4357
        %4359 = vmatmul.bf16.gmra.mxu0 %v4316
        %v4360 = vpop.f32.mrf.mxu0
        %v4361 = vadd.f32 %v4224, %v4360
        %v4362 = vpop.f32.mrf.mxu0
        %v4363 = vadd.f32 %v4226, %v4362
        %4364 = vmatmul.bf16.gmra.mxu0 %v4319
        %v4365 = vpop.f32.mrf.mxu0
        %v4366 = vadd.f32 %v4229, %v4365
        %v4367 = vpop.f32.mrf.mxu0
        %v4368 = vadd.f32 %v4231, %v4367
        %4369 = vdwg.mxu0
        %v4370 = vld [vmem:[#allocation3] sm:$0xe]
        %v4371 = vld [vmem:[#allocation3 + $0xc] sm:$0xe]
        %v4372 = vld [vmem:[#allocation3 + $0x18] sm:$0xe]
        %v4373 = vld [vmem:[#allocation3 + $0x24] sm:$0xe]
        %v4374 = vld [vmem:[#allocation3 + $0x30] sm:$0xe]
        %v4375 = vld [vmem:[#allocation3 + $0x3c] sm:$0xe]
        %v4376 = vld [vmem:[#allocation3 + $0x48] sm:$0xe]
        %v4377 = vld [vmem:[#allocation3 + $0x54] sm:$0xe]
        %v4394 = vrot.slane %v4370, 5
        %v4395 = vrot.slane %v4394, 4
        %v4396 = vrot.slane %v3880, 5
        %v4397 = vsel %vm2346, %v4395, %v4396
        %v4398 = vrot.slane %v4396, 4
        %v4399 = vrot.slane %v3903, 5
        %v4400 = vsel %vm2346, %v4398, %v4399
        %v4401 = vrot.slane %v4371, 5
        %v4402 = vrot.slane %v4401, 4
        %v4403 = vrot.slane %v3882, 5
        %v4404 = vsel %vm2346, %v4402, %v4403
        %v4405 = vrot.slane %v4403, 4
        %v4406 = vrot.slane %v3904, 5
        %v4407 = vsel %vm2346, %v4405, %v4406
        %v4408 = vrot.slane %v4372, 5
        %v4409 = vrot.slane %v4408, 4
        %v4410 = vrot.slane %v3884, 5
        %v4411 = vsel %vm2346, %v4409, %v4410
        %v4412 = vrot.slane %v4410, 4
        %v4413 = vrot.slane %v3905, 5
        %v4414 = vsel %vm2346, %v4412, %v4413
        %v4415 = vrot.slane %v4373, 5
        %v4416 = vrot.slane %v4415, 4
        %v4417 = vrot.slane %v3886, 5
        %v4418 = vsel %vm2346, %v4416, %v4417
        %v4419 = vrot.slane %v4417, 4
        %v4420 = vrot.slane %v3906, 5
        %v4421 = vsel %vm2346, %v4419, %v4420
        %v4422 = vrot.slane %v4374, 5
        %v4423 = vrot.slane %v4422, 4
        %v4424 = vrot.slane %v3888, 5
        %v4425 = vsel %vm2346, %v4423, %v4424
        %v4426 = vrot.slane %v4424, 4
        %v4427 = vrot.slane %v3907, 5
        %v4428 = vsel %vm2346, %v4426, %v4427
        %v4429 = vrot.slane %v4375, 5
        %v4430 = vrot.slane %v4429, 4
        %v4431 = vrot.slane %v3890, 5
        %v4432 = vsel %vm2346, %v4430, %v4431
        %v4433 = vrot.slane %v4431, 4
        %v4434 = vrot.slane %v3908, 5
        %v4435 = vsel %vm2346, %v4433, %v4434
        %v4436 = vrot.slane %v4376, 5
        %v4437 = vrot.slane %v4436, 4
        %v4438 = vrot.slane %v3892, 5
        %v4439 = vsel %vm2346, %v4437, %v4438
        %v4440 = vrot.slane %v4438, 4
        %v4441 = vrot.slane %v3909, 5
        %v4442 = vsel %vm2346, %v4440, %v4441
        %v4443 = vrot.slane %v4377, 5
        %v4444 = vrot.slane %v4443, 4
        %v4445 = vrot.slane %v3894, 5
        %v4446 = vsel %vm2346, %v4444, %v4445
        %v4447 = vrot.slane %v4445, 4
        %v4448 = vrot.slane %v3910, 5
        %v4449 = vsel %vm2346, %v4447, %v4448
        %s4450 = scalar_lea.vmem %s5, 64
        %v4451 = vld [vmem:[%s4450] sm:$0xf]
        %v4452 = vld [vmem:[%s4450 + $0x4] sm:$0xf]
        %v4453 = vld [vmem:[%s4450 + $0x8] sm:$0xf]
        %v4454 = vld [vmem:[%s4450 + $0xc] sm:$0xf]
        %v4455 = vld [vmem:[%s4450 + $0x10] sm:$0xf]
        %v4456 = vld [vmem:[%s4450 + $0x14] sm:$0xf]
        %v4457 = vld [vmem:[%s4450 + $0x18] sm:$0xf]
        %v4458 = vld [vmem:[%s4450 + $0x1c] sm:$0xf]
        %v4459 = vunpack.c.l.b16 %v4397
        %v4460 = vunpack.c.l.b16 %v4400
        %v4461 = vunpack.c.l.b16 %v4404
        %v4462 = vunpack.c.l.b16 %v4407
        %v4463 = vunpack.c.l.b16 %v4411
        %v4464 = vunpack.c.l.b16 %v4414
        %v4465 = vunpack.c.l.b16 %v4418
        %v4466 = vunpack.c.l.b16 %v4421
        %v4467 = vunpack.c.l.b16 %v4425
        %v4468 = vunpack.c.l.b16 %v4428
        %v4469 = vunpack.c.l.b16 %v4432
        %v4470 = vunpack.c.l.b16 %v4435
        %v4471 = vunpack.c.l.b16 %v4439
        %v4472 = vunpack.c.l.b16 %v4442
        %v4473 = vunpack.c.l.b16 %v4446
        %v4474 = vunpack.c.l.b16 %v4449
        %v4475 = vpack.c.b16 %v4460, %v4459
        %v4476 = vpack.c.b16 %v4462, %v4461
        %v4477 = vpack.c.b16 %v4464, %v4463
        %v4478 = vpack.c.b16 %v4466, %v4465
        %v4479 = vpack.c.b16 %v4468, %v4467
        %v4480 = vpack.c.b16 %v4470, %v4469
        %v4481 = vpack.c.b16 %v4472, %v4471
        %v4482 = vpack.c.b16 %v4474, %v4473
        %v4491 = vunpack.c.l.b16 %v4451
        %v4492 = vunpack.c.l.b16 %v4452
        %v4493 = vunpack.c.l.b16 %v4453
        %v4494 = vunpack.c.l.b16 %v4454
        %v4495 = vunpack.c.l.b16 %v4455
        %v4496 = vunpack.c.l.b16 %v4456
        %v4497 = vunpack.c.l.b16 %v4457
        %v4498 = vunpack.c.l.b16 %v4458
        %v4499 = vpack.c.b16 %v4492, %v4491
        %v4500 = vpack.c.b16 %v4494, %v4493
        %v4501 = vpack.c.b16 %v4496, %v4495
        %v4502 = vpack.c.b16 %v4498, %v4497
        %v4508 = vsel %vm3645, %v4475, 0
        %v4511 = vsel %vm3645, %v4476, 0
        %v4514 = vsel %vm3645, %v4477, 0
        %v4517 = vsel %vm3645, %v4478, 0
        %v4520 = vsel %vm3645, %v4479, 0
        %v4523 = vsel %vm3645, %v4480, 0
        %v4526 = vsel %vm3645, %v4481, 0
        %v4529 = vsel %vm3645, %v4482, 0
        %4531 = vmatpush.bf16.msra.mxu0 0
        %4532 = vmatpush.bf16.msra.mxu0 0
        %4533 = vmatpush.bf16.msra.mxu0 0
        %4534 = vmatpush.bf16.msra.mxu0 0
        %4535 = vmatpush.bf16.msra.mxu0 %v4502
        %4536 = vmatpush.bf16.msra.mxu0 %v4501
        %4537 = vmatpush.bf16.msra.mxu0 %v4500
        %4538 = vmatpush.bf16.msra.mxu0 %v4499
        %4539 = vmatmul.bf16.gmra.mxu0 %v4508
        %v4540 = vpop.f32.mrf.mxu0
        %v4541 = vadd.f32 0.0, %v4540
        %v4542 = vpop.f32.mrf.mxu0
        %v4543 = vadd.f32 0.0, %v4542
        %4544 = vmatmul.bf16.gmra.mxu0 %v4511
        %v4545 = vpop.f32.mrf.mxu0
        %v4546 = vadd.f32 0.0, %v4545
        %v4547 = vpop.f32.mrf.mxu0
        %v4548 = vadd.f32 0.0, %v4547
        %4549 = vmatmul.bf16.gmra.mxu0 %v4514
        %v4550 = vpop.f32.mrf.mxu0
        %v4551 = vadd.f32 0.0, %v4550
        %v4552 = vpop.f32.mrf.mxu0
        %v4553 = vadd.f32 0.0, %v4552
        %4554 = vmatmul.bf16.gmra.mxu0 %v4517
        %v4555 = vpop.f32.mrf.mxu0
        %v4556 = vadd.f32 0.0, %v4555
        %v4557 = vpop.f32.mrf.mxu0
        %v4558 = vadd.f32 0.0, %v4557
        %4559 = vmatmul.bf16.gmra.mxu0 %v4520
        %v4560 = vpop.f32.mrf.mxu0
        %v4561 = vadd.f32 0.0, %v4560
        %v4562 = vpop.f32.mrf.mxu0
        %v4563 = vadd.f32 0.0, %v4562
        %4564 = vmatmul.bf16.gmra.mxu0 %v4523
        %v4565 = vpop.f32.mrf.mxu0
        %v4566 = vadd.f32 0.0, %v4565
        %v4567 = vpop.f32.mrf.mxu0
        %v4568 = vadd.f32 0.0, %v4567
        %4569 = vmatmul.bf16.gmra.mxu0 %v4526
        %v4570 = vpop.f32.mrf.mxu0
        %v4571 = vadd.f32 0.0, %v4570
        %v4572 = vpop.f32.mrf.mxu0
        %v4573 = vadd.f32 0.0, %v4572
        %4574 = vmatmul.bf16.gmra.mxu0 %v4529
        %v4575 = vpop.f32.mrf.mxu0
        %v4576 = vadd.f32 0.0, %v4575
        %v4577 = vpop.f32.mrf.mxu0
        %v4578 = vadd.f32 0.0, %v4577
        %4579 = vdwg.mxu0
        %v4580 = vadd.f32 %v4331, %v4541
        %v4581 = vadd.f32 %v4333, %v4543
        %v4582 = vadd.f32 %v4336, %v4546
        %v4583 = vadd.f32 %v4338, %v4548
        %v4584 = vadd.f32 %v4341, %v4551
        %v4585 = vadd.f32 %v4343, %v4553
        %v4586 = vadd.f32 %v4346, %v4556
        %v4587 = vadd.f32 %v4348, %v4558
        %v4588 = vadd.f32 %v4351, %v4561
        %v4589 = vadd.f32 %v4353, %v4563
        %v4590 = vadd.f32 %v4356, %v4566
        %v4591 = vadd.f32 %v4358, %v4568
        %v4592 = vadd.f32 %v4361, %v4571
        %v4593 = vadd.f32 %v4363, %v4573
        %v4594 = vadd.f32 %v4366, %v4576
        %v4595 = vadd.f32 %v4368, %v4578
        %v4596 = vld [vmem:[#allocation3 + $0x8] sm:$0x3]
        %v4597 = vld [vmem:[#allocation3 + $0x14] sm:$0x3]
        %v4598 = vld [vmem:[#allocation3 + $0x20] sm:$0x3]
        %v4599 = vld [vmem:[#allocation3 + $0x2c] sm:$0x3]
        %v4600 = vld [vmem:[#allocation3 + $0x38] sm:$0x3]
        %v4601 = vld [vmem:[#allocation3 + $0x44] sm:$0x3]
        %v4602 = vld [vmem:[#allocation3 + $0x50] sm:$0x3]
        %v4603 = vld [vmem:[#allocation3 + $0x5c] sm:$0x3]
        %v4605 = vshrl.u32 %v4370, 16
        %v4607 = vrot.slane %v4605, 5
        %v4608 = vshll.u32 %v4370, 16
        %v4610 = vrot.slane %v4608, 6
        %v4611 = vor.u32 %v4607, %v4610
        %v4612 = vrot.slane %v4611, 4
        %v4613 = vrot.slane %v3925, 5
        %v4614 = vrot.slane %v3921, 6
        %v4615 = vor.u32 %v4613, %v4614
        %v4616 = vsel %vm2695, %v4612, %v4615
        %v4617 = vrot.slane %v4615, 4
        %v4619 = vshrl.u32 %v4596, 16
        %v4621 = vrot.slane %v4619, 5
        %v4622 = vshll.u32 %v4596, 16
        %v4624 = vrot.slane %v4622, 6
        %v4625 = vor.u32 %v4621, %v4624
        %v4626 = vsel %vm2695, %v4617, %v4625
        %v4628 = vshrl.u32 %v4371, 16
        %v4630 = vrot.slane %v4628, 5
        %v4631 = vshll.u32 %v4371, 16
        %v4633 = vrot.slane %v4631, 6
        %v4634 = vor.u32 %v4630, %v4633
        %v4635 = vrot.slane %v4634, 4
        %v4636 = vrot.slane %v3949, 5
        %v4637 = vrot.slane %v3945, 6
        %v4638 = vor.u32 %v4636, %v4637
        %v4639 = vsel %vm2695, %v4635, %v4638
        %v4640 = vrot.slane %v4638, 4
        %v4642 = vshrl.u32 %v4597, 16
        %v4644 = vrot.slane %v4642, 5
        %v4645 = vshll.u32 %v4597, 16
        %v4647 = vrot.slane %v4645, 6
        %v4648 = vor.u32 %v4644, %v4647
        %v4649 = vsel %vm2695, %v4640, %v4648
        %v4651 = vshrl.u32 %v4372, 16
        %v4653 = vrot.slane %v4651, 5
        %v4654 = vshll.u32 %v4372, 16
        %v4656 = vrot.slane %v4654, 6
        %v4657 = vor.u32 %v4653, %v4656
        %v4658 = vrot.slane %v4657, 4
        %v4659 = vrot.slane %v3973, 5
        %v4660 = vrot.slane %v3969, 6
        %v4661 = vor.u32 %v4659, %v4660
        %v4662 = vsel %vm2695, %v4658, %v4661
        %v4663 = vrot.slane %v4661, 4
        %v4665 = vshrl.u32 %v4598, 16
        %v4667 = vrot.slane %v4665, 5
        %v4668 = vshll.u32 %v4598, 16
        %v4670 = vrot.slane %v4668, 6
        %v4671 = vor.u32 %v4667, %v4670
        %v4672 = vsel %vm2695, %v4663, %v4671
        %v4674 = vshrl.u32 %v4373, 16
        %v4676 = vrot.slane %v4674, 5
        %v4677 = vshll.u32 %v4373, 16
        %v4679 = vrot.slane %v4677, 6
        %v4680 = vor.u32 %v4676, %v4679
        %v4681 = vrot.slane %v4680, 4
        %v4682 = vrot.slane %v3997, 5
        %v4683 = vrot.slane %v3993, 6
        %v4684 = vor.u32 %v4682, %v4683
        %v4685 = vsel %vm2695, %v4681, %v4684
        %v4686 = vrot.slane %v4684, 4
        %v4688 = vshrl.u32 %v4599, 16
        %v4690 = vrot.slane %v4688, 5
        %v4691 = vshll.u32 %v4599, 16
        %v4693 = vrot.slane %v4691, 6
        %v4694 = vor.u32 %v4690, %v4693
        %v4695 = vsel %vm2695, %v4686, %v4694
        %v4697 = vshrl.u32 %v4374, 16
        %v4699 = vrot.slane %v4697, 5
        %v4700 = vshll.u32 %v4374, 16
        %v4702 = vrot.slane %v4700, 6
        %v4703 = vor.u32 %v4699, %v4702
        %v4704 = vrot.slane %v4703, 4
        %v4705 = vrot.slane %v4021, 5
        %v4706 = vrot.slane %v4017, 6
        %v4707 = vor.u32 %v4705, %v4706
        %v4708 = vsel %vm2695, %v4704, %v4707
        %v4709 = vrot.slane %v4707, 4
        %v4711 = vshrl.u32 %v4600, 16
        %v4713 = vrot.slane %v4711, 5
        %v4714 = vshll.u32 %v4600, 16
        %v4716 = vrot.slane %v4714, 6
        %v4717 = vor.u32 %v4713, %v4716
        %v4718 = vsel %vm2695, %v4709, %v4717
        %v4720 = vshrl.u32 %v4375, 16
        %v4722 = vrot.slane %v4720, 5
        %v4723 = vshll.u32 %v4375, 16
        %v4725 = vrot.slane %v4723, 6
        %v4726 = vor.u32 %v4722, %v4725
        %v4727 = vrot.slane %v4726, 4
        %v4728 = vrot.slane %v4045, 5
        %v4729 = vrot.slane %v4041, 6
        %v4730 = vor.u32 %v4728, %v4729
        %v4731 = vsel %vm2695, %v4727, %v4730
        %v4732 = vrot.slane %v4730, 4
        %v4734 = vshrl.u32 %v4601, 16
        %v4736 = vrot.slane %v4734, 5
        %v4737 = vshll.u32 %v4601, 16
        %v4739 = vrot.slane %v4737, 6
        %v4740 = vor.u32 %v4736, %v4739
        %v4741 = vsel %vm2695, %v4732, %v4740
        %v4743 = vshrl.u32 %v4376, 16
        %v4745 = vrot.slane %v4743, 5
        %v4746 = vshll.u32 %v4376, 16
        %v4748 = vrot.slane %v4746, 6
        %v4749 = vor.u32 %v4745, %v4748
        %v4750 = vrot.slane %v4749, 4
        %v4751 = vrot.slane %v4069, 5
        %v4752 = vrot.slane %v4065, 6
        %v4753 = vor.u32 %v4751, %v4752
        %v4754 = vsel %vm2695, %v4750, %v4753
        %v4755 = vrot.slane %v4753, 4
        %v4757 = vshrl.u32 %v4602, 16
        %v4759 = vrot.slane %v4757, 5
        %v4760 = vshll.u32 %v4602, 16
        %v4762 = vrot.slane %v4760, 6
        %v4763 = vor.u32 %v4759, %v4762
        %v4764 = vsel %vm2695, %v4755, %v4763
        %v4766 = vshrl.u32 %v4377, 16
        %v4768 = vrot.slane %v4766, 5
        %v4769 = vshll.u32 %v4377, 16
        %v4771 = vrot.slane %v4769, 6
        %v4772 = vor.u32 %v4768, %v4771
        %v4773 = vrot.slane %v4772, 4
        %v4774 = vrot.slane %v4093, 5
        %v4775 = vrot.slane %v4089, 6
        %v4776 = vor.u32 %v4774, %v4775
        %v4777 = vsel %vm2695, %v4773, %v4776
        %v4778 = vrot.slane %v4776, 4
        %v4780 = vshrl.u32 %v4603, 16
        %v4782 = vrot.slane %v4780, 5
        %v4783 = vshll.u32 %v4603, 16
        %v4785 = vrot.slane %v4783, 6
        %v4786 = vor.u32 %v4782, %v4785
        %v4787 = vsel %vm2695, %v4778, %v4786
        %s4788 = scalar_lea.vmem %s5, 96
        %v4789 = vld [vmem:[%s4788] sm:$0xf]
        %v4790 = vld [vmem:[%s4788 + $0x4] sm:$0xf]
        %v4791 = vld [vmem:[%s4788 + $0x8] sm:$0xf]
        %v4792 = vld [vmem:[%s4788 + $0xc] sm:$0xf]
        %v4793 = vld [vmem:[%s4788 + $0x10] sm:$0xf]
        %v4794 = vld [vmem:[%s4788 + $0x14] sm:$0xf]
        %v4795 = vld [vmem:[%s4788 + $0x18] sm:$0xf]
        %v4796 = vld [vmem:[%s4788 + $0x1c] sm:$0xf]
        %v4797 = vunpack.c.l.b16 %v4616
        %v4798 = vunpack.c.l.b16 %v4626
        %v4799 = vunpack.c.l.b16 %v4639
        %v4800 = vunpack.c.l.b16 %v4649
        %v4801 = vunpack.c.l.b16 %v4662
        %v4802 = vunpack.c.l.b16 %v4672
        %v4803 = vunpack.c.l.b16 %v4685
        %v4804 = vunpack.c.l.b16 %v4695
        %v4805 = vunpack.c.l.b16 %v4708
        %v4806 = vunpack.c.l.b16 %v4718
        %v4807 = vunpack.c.l.b16 %v4731
        %v4808 = vunpack.c.l.b16 %v4741
        %v4809 = vunpack.c.l.b16 %v4754
        %v4810 = vunpack.c.l.b16 %v4764
        %v4811 = vunpack.c.l.b16 %v4777
        %v4812 = vunpack.c.l.b16 %v4787
        %v4813 = vpack.c.b16 %v4798, %v4797
        %v4814 = vpack.c.b16 %v4800, %v4799
        %v4815 = vpack.c.b16 %v4802, %v4801
        %v4816 = vpack.c.b16 %v4804, %v4803
        %v4817 = vpack.c.b16 %v4806, %v4805
        %v4818 = vpack.c.b16 %v4808, %v4807
        %v4819 = vpack.c.b16 %v4810, %v4809
        %v4820 = vpack.c.b16 %v4812, %v4811
        %v4829 = vunpack.c.l.b16 %v4789
        %v4830 = vunpack.c.l.b16 %v4790
        %v4831 = vunpack.c.l.b16 %v4791
        %v4832 = vunpack.c.l.b16 %v4792
        %v4833 = vunpack.c.l.b16 %v4793
        %v4834 = vunpack.c.l.b16 %v4794
        %v4835 = vunpack.c.l.b16 %v4795
        %v4836 = vunpack.c.l.b16 %v4796
        %v4837 = vpack.c.b16 %v4830, %v4829
        %v4838 = vpack.c.b16 %v4832, %v4831
        %v4839 = vpack.c.b16 %v4834, %v4833
        %v4840 = vpack.c.b16 %v4836, %v4835
        %v4846 = vsel %vm3645, %v4813, 0
        %v4849 = vsel %vm3645, %v4814, 0
        %v4852 = vsel %vm3645, %v4815, 0
        %v4855 = vsel %vm3645, %v4816, 0
        %v4858 = vsel %vm3645, %v4817, 0
        %v4861 = vsel %vm3645, %v4818, 0
        %v4864 = vsel %vm3645, %v4819, 0
        %v4867 = vsel %vm3645, %v4820, 0
        %4869 = vmatpush.bf16.msra.mxu0 0
        %4870 = vmatpush.bf16.msra.mxu0 0
        %4871 = vmatpush.bf16.msra.mxu0 0
        %4872 = vmatpush.bf16.msra.mxu0 0
        %4873 = vmatpush.bf16.msra.mxu0 %v4840
        %4874 = vmatpush.bf16.msra.mxu0 %v4839
        %4875 = vmatpush.bf16.msra.mxu0 %v4838
        %4876 = vmatpush.bf16.msra.mxu0 %v4837
        %4877 = vmatmul.bf16.gmra.mxu0 %v4846
        %v4878 = vpop.f32.mrf.mxu0
        %v4879 = vadd.f32 0.0, %v4878
        %v4880 = vpop.f32.mrf.mxu0
        %v4881 = vadd.f32 0.0, %v4880
        %4882 = vmatmul.bf16.gmra.mxu0 %v4849
        %v4883 = vpop.f32.mrf.mxu0
        %v4884 = vadd.f32 0.0, %v4883
        %v4885 = vpop.f32.mrf.mxu0
        %v4886 = vadd.f32 0.0, %v4885
        %4887 = vmatmul.bf16.gmra.mxu0 %v4852
        %v4888 = vpop.f32.mrf.mxu0
        %v4889 = vadd.f32 0.0, %v4888
        %v4890 = vpop.f32.mrf.mxu0
        %v4891 = vadd.f32 0.0, %v4890
        %4892 = vmatmul.bf16.gmra.mxu0 %v4855
        %v4893 = vpop.f32.mrf.mxu0
        %v4894 = vadd.f32 0.0, %v4893
        %v4895 = vpop.f32.mrf.mxu0
        %v4896 = vadd.f32 0.0, %v4895
        %4897 = vmatmul.bf16.gmra.mxu0 %v4858
        %v4898 = vpop.f32.mrf.mxu0
        %v4899 = vadd.f32 0.0, %v4898
        %v4900 = vpop.f32.mrf.mxu0
        %v4901 = vadd.f32 0.0, %v4900
        %4902 = vmatmul.bf16.gmra.mxu0 %v4861
        %v4903 = vpop.f32.mrf.mxu0
        %v4904 = vadd.f32 0.0, %v4903
        %v4905 = vpop.f32.mrf.mxu0
        %v4906 = vadd.f32 0.0, %v4905
        %4907 = vmatmul.bf16.gmra.mxu0 %v4864
        %v4908 = vpop.f32.mrf.mxu0
        %v4909 = vadd.f32 0.0, %v4908
        %v4910 = vpop.f32.mrf.mxu0
        %v4911 = vadd.f32 0.0, %v4910
        %4912 = vmatmul.bf16.gmra.mxu0 %v4867
        %v4913 = vpop.f32.mrf.mxu0
        %v4914 = vadd.f32 0.0, %v4913
        %v4915 = vpop.f32.mrf.mxu0
        %v4916 = vadd.f32 0.0, %v4915
        %4917 = vdwg.mxu0
        %v4918 = vadd.f32 %v4580, %v4879
        %v4919 = vadd.f32 %v4581, %v4881
        %v4920 = vadd.f32 %v4582, %v4884
        %v4921 = vadd.f32 %v4583, %v4886
        %v4922 = vadd.f32 %v4584, %v4889
        %v4923 = vadd.f32 %v4585, %v4891
        %v4924 = vadd.f32 %v4586, %v4894
        %v4925 = vadd.f32 %v4587, %v4896
        %v4926 = vadd.f32 %v4588, %v4899
        %v4927 = vadd.f32 %v4589, %v4901
        %v4928 = vadd.f32 %v4590, %v4904
        %v4929 = vadd.f32 %v4591, %v4906
        %v4930 = vadd.f32 %v4592, %v4909
        %v4931 = vadd.f32 %v4593, %v4911
        %v4932 = vadd.f32 %v4594, %v4914
        %v4933 = vadd.f32 %v4595, %v4916
        %v4934 = vld [vmem:[#allocation3] sm:$0xc]
        %v4935 = vld [vmem:[#allocation3 + $0xc] sm:$0xc]
        %v4936 = vld [vmem:[#allocation3 + $0x18] sm:$0xc]
        %v4937 = vld [vmem:[#allocation3 + $0x24] sm:$0xc]
        %v4938 = vld [vmem:[#allocation3 + $0x30] sm:$0xc]
        %v4939 = vld [vmem:[#allocation3 + $0x3c] sm:$0xc]
        %v4940 = vld [vmem:[#allocation3 + $0x48] sm:$0xc]
        %v4941 = vld [vmem:[#allocation3 + $0x54] sm:$0xc]
        %v4958 = vrot.slane %v4934, 6
        %v4959 = vrot.slane %v4958, 4
        %v4960 = vrot.slane %v3880, 6
        %v4961 = vsel %vm3220, %v4959, %v4960
        %v4962 = vrot.slane %v4960, 4
        %v4963 = vrot.slane %v4596, 6
        %v4964 = vsel %vm3220, %v4962, %v4963
        %v4965 = vrot.slane %v4935, 6
        %v4966 = vrot.slane %v4965, 4
        %v4967 = vrot.slane %v3882, 6
        %v4968 = vsel %vm3220, %v4966, %v4967
        %v4969 = vrot.slane %v4967, 4
        %v4970 = vrot.slane %v4597, 6
        %v4971 = vsel %vm3220, %v4969, %v4970
        %v4972 = vrot.slane %v4936, 6
        %v4973 = vrot.slane %v4972, 4
        %v4974 = vrot.slane %v3884, 6
        %v4975 = vsel %vm3220, %v4973, %v4974
        %v4976 = vrot.slane %v4974, 4
        %v4977 = vrot.slane %v4598, 6
        %v4978 = vsel %vm3220, %v4976, %v4977
        %v4979 = vrot.slane %v4937, 6
        %v4980 = vrot.slane %v4979, 4
        %v4981 = vrot.slane %v3886, 6
        %v4982 = vsel %vm3220, %v4980, %v4981
        %v4983 = vrot.slane %v4981, 4
        %v4984 = vrot.slane %v4599, 6
        %v4985 = vsel %vm3220, %v4983, %v4984
        %v4986 = vrot.slane %v4938, 6
        %v4987 = vrot.slane %v4986, 4
        %v4988 = vrot.slane %v3888, 6
        %v4989 = vsel %vm3220, %v4987, %v4988
        %v4990 = vrot.slane %v4988, 4
        %v4991 = vrot.slane %v4600, 6
        %v4992 = vsel %vm3220, %v4990, %v4991
        %v4993 = vrot.slane %v4939, 6
        %v4994 = vrot.slane %v4993, 4
        %v4995 = vrot.slane %v3890, 6
        %v4996 = vsel %vm3220, %v4994, %v4995
        %v4997 = vrot.slane %v4995, 4
        %v4998 = vrot.slane %v4601, 6
        %v4999 = vsel %vm3220, %v4997, %v4998
        %v5000 = vrot.slane %v4940, 6
        %v5001 = vrot.slane %v5000, 4
        %v5002 = vrot.slane %v3892, 6
        %v5003 = vsel %vm3220, %v5001, %v5002
        %v5004 = vrot.slane %v5002, 4
        %v5005 = vrot.slane %v4602, 6
        %v5006 = vsel %vm3220, %v5004, %v5005
        %v5007 = vrot.slane %v4941, 6
        %v5008 = vrot.slane %v5007, 4
        %v5009 = vrot.slane %v3894, 6
        %v5010 = vsel %vm3220, %v5008, %v5009
        %v5011 = vrot.slane %v5009, 4
        %v5012 = vrot.slane %v4603, 6
        %v5013 = vsel %vm3220, %v5011, %v5012
        %s5014 = scalar_lea.vmem %s5, 128
        %v5015 = vld [vmem:[%s5014] sm:$0xf]
        %v5016 = vld [vmem:[%s5014 + $0x4] sm:$0xf]
        %v5017 = vld [vmem:[%s5014 + $0x8] sm:$0xf]
        %v5018 = vld [vmem:[%s5014 + $0xc] sm:$0xf]
        %v5019 = vld [vmem:[%s5014 + $0x10] sm:$0xf]
        %v5020 = vld [vmem:[%s5014 + $0x14] sm:$0xf]
        %v5021 = vld [vmem:[%s5014 + $0x18] sm:$0xf]
        %v5022 = vld [vmem:[%s5014 + $0x1c] sm:$0xf]
        %v5023 = vunpack.c.l.b16 %v4961
        %v5024 = vunpack.c.l.b16 %v4964
        %v5025 = vunpack.c.l.b16 %v4968
        %v5026 = vunpack.c.l.b16 %v4971
        %v5027 = vunpack.c.l.b16 %v4975
        %v5028 = vunpack.c.l.b16 %v4978
        %v5029 = vunpack.c.l.b16 %v4982
        %v5030 = vunpack.c.l.b16 %v4985
        %v5031 = vunpack.c.l.b16 %v4989
        %v5032 = vunpack.c.l.b16 %v4992
        %v5033 = vunpack.c.l.b16 %v4996
        %v5034 = vunpack.c.l.b16 %v4999
        %v5035 = vunpack.c.l.b16 %v5003
        %v5036 = vunpack.c.l.b16 %v5006
        %v5037 = vunpack.c.l.b16 %v5010
        %v5038 = vunpack.c.l.b16 %v5013
        %v5039 = vpack.c.b16 %v5024, %v5023
        %v5040 = vpack.c.b16 %v5026, %v5025
        %v5041 = vpack.c.b16 %v5028, %v5027
        %v5042 = vpack.c.b16 %v5030, %v5029
        %v5043 = vpack.c.b16 %v5032, %v5031
        %v5044 = vpack.c.b16 %v5034, %v5033
        %v5045 = vpack.c.b16 %v5036, %v5035
        %v5046 = vpack.c.b16 %v5038, %v5037
        %v5055 = vunpack.c.l.b16 %v5015
        %v5056 = vunpack.c.l.b16 %v5016
        %v5057 = vunpack.c.l.b16 %v5017
        %v5058 = vunpack.c.l.b16 %v5018
        %v5059 = vunpack.c.l.b16 %v5019
        %v5060 = vunpack.c.l.b16 %v5020
        %v5061 = vunpack.c.l.b16 %v5021
        %v5062 = vunpack.c.l.b16 %v5022
        %v5063 = vpack.c.b16 %v5056, %v5055
        %v5064 = vpack.c.b16 %v5058, %v5057
        %v5065 = vpack.c.b16 %v5060, %v5059
        %v5066 = vpack.c.b16 %v5062, %v5061
        %v5072 = vsel %vm3645, %v5039, 0
        %v5075 = vsel %vm3645, %v5040, 0
        %v5078 = vsel %vm3645, %v5041, 0
        %v5081 = vsel %vm3645, %v5042, 0
        %v5084 = vsel %vm3645, %v5043, 0
        %v5087 = vsel %vm3645, %v5044, 0
        %v5090 = vsel %vm3645, %v5045, 0
        %v5093 = vsel %vm3645, %v5046, 0
        %5095 = vmatpush.bf16.msra.mxu0 0
        %5096 = vmatpush.bf16.msra.mxu0 0
        %5097 = vmatpush.bf16.msra.mxu0 0
        %5098 = vmatpush.bf16.msra.mxu0 0
        %5099 = vmatpush.bf16.msra.mxu0 %v5066
        %5100 = vmatpush.bf16.msra.mxu0 %v5065
        %5101 = vmatpush.bf16.msra.mxu0 %v5064
        %5102 = vmatpush.bf16.msra.mxu0 %v5063
        %5103 = vmatmul.bf16.gmra.mxu0 %v5072
        %v5104 = vpop.f32.mrf.mxu0
        %v5105 = vadd.f32 0.0, %v5104
        %v5106 = vpop.f32.mrf.mxu0
        %v5107 = vadd.f32 0.0, %v5106
        %5108 = vmatmul.bf16.gmra.mxu0 %v5075
        %v5109 = vpop.f32.mrf.mxu0
        %v5110 = vadd.f32 0.0, %v5109
        %v5111 = vpop.f32.mrf.mxu0
        %v5112 = vadd.f32 0.0, %v5111
        %5113 = vmatmul.bf16.gmra.mxu0 %v5078
        %v5114 = vpop.f32.mrf.mxu0
        %v5115 = vadd.f32 0.0, %v5114
        %v5116 = vpop.f32.mrf.mxu0
        %v5117 = vadd.f32 0.0, %v5116
        %5118 = vmatmul.bf16.gmra.mxu0 %v5081
        %v5119 = vpop.f32.mrf.mxu0
        %v5120 = vadd.f32 0.0, %v5119
        %v5121 = vpop.f32.mrf.mxu0
        %v5122 = vadd.f32 0.0, %v5121
        %5123 = vmatmul.bf16.gmra.mxu0 %v5084
        %v5124 = vpop.f32.mrf.mxu0
        %v5125 = vadd.f32 0.0, %v5124
        %v5126 = vpop.f32.mrf.mxu0
        %v5127 = vadd.f32 0.0, %v5126
        %5128 = vmatmul.bf16.gmra.mxu0 %v5087
        %v5129 = vpop.f32.mrf.mxu0
        %v5130 = vadd.f32 0.0, %v5129
        %v5131 = vpop.f32.mrf.mxu0
        %v5132 = vadd.f32 0.0, %v5131
        %5133 = vmatmul.bf16.gmra.mxu0 %v5090
        %v5134 = vpop.f32.mrf.mxu0
        %v5135 = vadd.f32 0.0, %v5134
        %v5136 = vpop.f32.mrf.mxu0
        %v5137 = vadd.f32 0.0, %v5136
        %5138 = vmatmul.bf16.gmra.mxu0 %v5093
        %v5139 = vpop.f32.mrf.mxu0
        %v5140 = vadd.f32 0.0, %v5139
        %v5141 = vpop.f32.mrf.mxu0
        %v5142 = vadd.f32 0.0, %v5141
        %5143 = vdwg.mxu0
        %v5144 = vadd.f32 %v4918, %v5105
        %v5145 = vadd.f32 %v4919, %v5107
        %v5146 = vadd.f32 %v4920, %v5110
        %v5147 = vadd.f32 %v4921, %v5112
        %v5148 = vadd.f32 %v4922, %v5115
        %v5149 = vadd.f32 %v4923, %v5117
        %v5150 = vadd.f32 %v4924, %v5120
        %v5151 = vadd.f32 %v4925, %v5122
        %v5152 = vadd.f32 %v4926, %v5125
        %v5153 = vadd.f32 %v4927, %v5127
        %v5154 = vadd.f32 %v4928, %v5130
        %v5155 = vadd.f32 %v4929, %v5132
        %v5156 = vadd.f32 %v4930, %v5135
        %v5157 = vadd.f32 %v4931, %v5137
        %v5158 = vadd.f32 %v4932, %v5140
        %v5159 = vadd.f32 %v4933, %v5142
        %v5160 = vld [vmem:[%s6] sm:$0x1]
        %v5162 = vperm.slane %v5160, 0
        %v5164 = vadd.f32 %v5144, %v5162
        %v5165 = vadd.f32 %v5145, %v5162
        %v5166 = vadd.f32 %v5146, %v5162
        %v5167 = vadd.f32 %v5147, %v5162
        %v5168 = vadd.f32 %v5148, %v5162
        %v5169 = vadd.f32 %v5149, %v5162
        %v5170 = vadd.f32 %v5150, %v5162
        %v5171 = vadd.f32 %v5151, %v5162
        %v5172 = vadd.f32 %v5152, %v5162
        %v5173 = vadd.f32 %v5153, %v5162
        %v5174 = vadd.f32 %v5154, %v5162
        %v5175 = vadd.f32 %v5155, %v5162
        %v5176 = vadd.f32 %v5156, %v5162
        %v5177 = vadd.f32 %v5157, %v5162
        %v5178 = vadd.f32 %v5158, %v5162
        %v5179 = vadd.f32 %v5159, %v5162
        %v5180 = vmax.f32 %v5164, 0.0
        %v5181 = vmax.f32 %v5165, 0.0
        %v5182 = vmax.f32 %v5166, 0.0
        %v5183 = vmax.f32 %v5167, 0.0
        %v5184 = vmax.f32 %v5168, 0.0
        %v5185 = vmax.f32 %v5169, 0.0
        %v5186 = vmax.f32 %v5170, 0.0
        %v5187 = vmax.f32 %v5171, 0.0
        %v5188 = vmax.f32 %v5172, 0.0
        %v5189 = vmax.f32 %v5173, 0.0
        %v5190 = vmax.f32 %v5174, 0.0
        %v5191 = vmax.f32 %v5175, 0.0
        %v5192 = vmax.f32 %v5176, 0.0
        %v5193 = vmax.f32 %v5177, 0.0
        %v5194 = vmax.f32 %v5178, 0.0
        %v5195 = vmax.f32 %v5179, 0.0
        %vm5196 = vsmask.f32 256
        %vm5197 = vmand %vm1317, %vm5196
        %v5198 = vld [vmem:[#allocation4] sm:$0x1]
        %v5199 = vsel %vm5197, 0, %v5198
        %5200 = vst [vmem:[#allocation4] sm:$0x1] %v5199
        %v5201 = vld [vmem:[#allocation4 + $0xc] sm:$0x1]
        %v5202 = vsel %vm5197, 0, %v5201
        %5203 = vst [vmem:[#allocation4 + $0xc] sm:$0x1] %v5202
        %v5204 = vld [vmem:[#allocation4 + $0x18] sm:$0x1]
        %v5205 = vsel %vm5197, 0, %v5204
        %5206 = vst [vmem:[#allocation4 + $0x18] sm:$0x1] %v5205
        %v5207 = vld [vmem:[#allocation4 + $0x24] sm:$0x1]
        %v5208 = vsel %vm5197, 0, %v5207
        %5209 = vst [vmem:[#allocation4 + $0x24] sm:$0x1] %v5208
        %v5210 = vld [vmem:[#allocation4 + $0x30] sm:$0x1]
        %v5211 = vsel %vm5197, 0, %v5210
        %5212 = vst [vmem:[#allocation4 + $0x30] sm:$0x1] %v5211
        %v5213 = vld [vmem:[#allocation4 + $0x3c] sm:$0x1]
        %v5214 = vsel %vm5197, 0, %v5213
        %5215 = vst [vmem:[#allocation4 + $0x3c] sm:$0x1] %v5214
        %v5216 = vld [vmem:[#allocation4 + $0x48] sm:$0x1]
        %v5217 = vsel %vm5197, 0, %v5216
        %5218 = vst [vmem:[#allocation4 + $0x48] sm:$0x1] %v5217
        %v5219 = vld [vmem:[#allocation4 + $0x54] sm:$0x1]
        %v5220 = vsel %vm5197, 0, %v5219
        %5221 = vst [vmem:[#allocation4 + $0x54] sm:$0x1] %v5220
        %vm5222 = vsmask.f32 7938
        %vm5223 = vmand %vm1317, %vm5222
        %v5224 = vld [vmem:[#allocation4 + $0x8] sm:$0x1]
        %v5225 = vsel %vm5223, 0, %v5224
        %5226 = vst [vmem:[#allocation4 + $0x8] sm:$0x1] %v5225
        %v5227 = vld [vmem:[#allocation4 + $0x14] sm:$0x1]
        %v5228 = vsel %vm5223, 0, %v5227
        %5229 = vst [vmem:[#allocation4 + $0x14] sm:$0x1] %v5228
        %v5230 = vld [vmem:[#allocation4 + $0x20] sm:$0x1]
        %v5231 = vsel %vm5223, 0, %v5230
        %5232 = vst [vmem:[#allocation4 + $0x20] sm:$0x1] %v5231
        %v5233 = vld [vmem:[#allocation4 + $0x2c] sm:$0x1]
        %v5234 = vsel %vm5223, 0, %v5233
        %5235 = vst [vmem:[#allocation4 + $0x2c] sm:$0x1] %v5234
        %v5236 = vld [vmem:[#allocation4 + $0x38] sm:$0x1]
        %v5237 = vsel %vm5223, 0, %v5236
        %5238 = vst [vmem:[#allocation4 + $0x38] sm:$0x1] %v5237
        %v5239 = vld [vmem:[#allocation4 + $0x44] sm:$0x1]
        %v5240 = vsel %vm5223, 0, %v5239
        %5241 = vst [vmem:[#allocation4 + $0x44] sm:$0x1] %v5240
        %v5242 = vld [vmem:[#allocation4 + $0x50] sm:$0x1]
        %v5243 = vsel %vm5223, 0, %v5242
        %5244 = vst [vmem:[#allocation4 + $0x50] sm:$0x1] %v5243
        %v5245 = vld [vmem:[#allocation4 + $0x5c] sm:$0x1]
        %v5246 = vsel %vm5223, 0, %v5245
        %5247 = vst [vmem:[#allocation4 + $0x5c] sm:$0x1] %v5246
        %v5248 = vpack.c.bf16 %v5180, %v5180
        %v5249 = vpack.c.bf16 %v5181, %v5181
        %v5250 = vpack.c.bf16 %v5182, %v5182
        %v5251 = vpack.c.bf16 %v5183, %v5183
        %v5252 = vpack.c.bf16 %v5184, %v5184
        %v5253 = vpack.c.bf16 %v5185, %v5185
        %v5254 = vpack.c.bf16 %v5186, %v5186
        %v5255 = vpack.c.bf16 %v5187, %v5187
        %v5256 = vpack.c.bf16 %v5188, %v5188
        %v5257 = vpack.c.bf16 %v5189, %v5189
        %v5258 = vpack.c.bf16 %v5190, %v5190
        %v5259 = vpack.c.bf16 %v5191, %v5191
        %v5260 = vpack.c.bf16 %v5192, %v5192
        %v5261 = vpack.c.bf16 %v5193, %v5193
        %v5262 = vpack.c.bf16 %v5194, %v5194
        %v5263 = vpack.c.bf16 %v5195, %v5195
        %vm5264 = vsmask.f32 4368
        %vm5265 = vmor %vm5196, %vm5264
        %v5267 = vshrl.u32 %v5248, 16
        %v5269 = vrot.slane %v5267, 7
        %v5270 = vshll.u32 %v5248, 16
        %v5272 = vor.u32 %v5269, %v5270
        %v5273 = vrot.slane %v5269, 4
        %v5275 = vshrl.u32 %v5249, 16
        %v5277 = vrot.slane %v5275, 7
        %v5278 = vshll.u32 %v5249, 16
        %v5280 = vor.u32 %v5277, %v5278
        %v5281 = vsel %vm5265, %v5273, %v5280
        %v5282 = vrot.slane %v5277, 4
        %v5284 = vshrl.u32 %v5250, 16
        %v5286 = vrot.slane %v5284, 7
        %v5287 = vshll.u32 %v5250, 16
        %v5289 = vor.u32 %v5286, %v5287
        %v5290 = vrot.slane %v5286, 4
        %v5292 = vshrl.u32 %v5251, 16
        %v5294 = vrot.slane %v5292, 7
        %v5295 = vshll.u32 %v5251, 16
        %v5297 = vor.u32 %v5294, %v5295
        %v5298 = vsel %vm5265, %v5290, %v5297
        %v5299 = vrot.slane %v5294, 4
        %v5301 = vshrl.u32 %v5252, 16
        %v5303 = vrot.slane %v5301, 7
        %v5304 = vshll.u32 %v5252, 16
        %v5306 = vor.u32 %v5303, %v5304
        %v5307 = vrot.slane %v5303, 4
        %v5309 = vshrl.u32 %v5253, 16
        %v5311 = vrot.slane %v5309, 7
        %v5312 = vshll.u32 %v5253, 16
        %v5314 = vor.u32 %v5311, %v5312
        %v5315 = vsel %vm5265, %v5307, %v5314
        %v5316 = vrot.slane %v5311, 4
        %v5318 = vshrl.u32 %v5254, 16
        %v5320 = vrot.slane %v5318, 7
        %v5321 = vshll.u32 %v5254, 16
        %v5323 = vor.u32 %v5320, %v5321
        %v5324 = vrot.slane %v5320, 4
        %v5326 = vshrl.u32 %v5255, 16
        %v5328 = vrot.slane %v5326, 7
        %v5329 = vshll.u32 %v5255, 16
        %v5331 = vor.u32 %v5328, %v5329
        %v5332 = vsel %vm5265, %v5324, %v5331
        %v5333 = vrot.slane %v5328, 4
        %v5335 = vshrl.u32 %v5256, 16
        %v5337 = vrot.slane %v5335, 7
        %v5338 = vshll.u32 %v5256, 16
        %v5340 = vor.u32 %v5337, %v5338
        %v5341 = vrot.slane %v5337, 4
        %v5343 = vshrl.u32 %v5257, 16
        %v5345 = vrot.slane %v5343, 7
        %v5346 = vshll.u32 %v5257, 16
        %v5348 = vor.u32 %v5345, %v5346
        %v5349 = vsel %vm5265, %v5341, %v5348
        %v5350 = vrot.slane %v5345, 4
        %v5352 = vshrl.u32 %v5258, 16
        %v5354 = vrot.slane %v5352, 7
        %v5355 = vshll.u32 %v5258, 16
        %v5357 = vor.u32 %v5354, %v5355
        %v5358 = vrot.slane %v5354, 4
        %v5360 = vshrl.u32 %v5259, 16
        %v5362 = vrot.slane %v5360, 7
        %v5363 = vshll.u32 %v5259, 16
        %v5365 = vor.u32 %v5362, %v5363
        %v5366 = vsel %vm5265, %v5358, %v5365
        %v5367 = vrot.slane %v5362, 4
        %v5369 = vshrl.u32 %v5260, 16
        %v5371 = vrot.slane %v5369, 7
        %v5372 = vshll.u32 %v5260, 16
        %v5374 = vor.u32 %v5371, %v5372
        %v5375 = vrot.slane %v5371, 4
        %v5377 = vshrl.u32 %v5261, 16
        %v5379 = vrot.slane %v5377, 7
        %v5380 = vshll.u32 %v5261, 16
        %v5382 = vor.u32 %v5379, %v5380
        %v5383 = vsel %vm5265, %v5375, %v5382
        %v5384 = vrot.slane %v5379, 4
        %v5386 = vshrl.u32 %v5262, 16
        %v5388 = vrot.slane %v5386, 7
        %v5389 = vshll.u32 %v5262, 16
        %v5391 = vor.u32 %v5388, %v5389
        %v5392 = vrot.slane %v5388, 4
        %v5394 = vshrl.u32 %v5263, 16
        %v5396 = vrot.slane %v5394, 7
        %v5397 = vshll.u32 %v5263, 16
        %v5399 = vor.u32 %v5396, %v5397
        %v5400 = vsel %vm5265, %v5392, %v5399
        %v5401 = vrot.slane %v5396, 4
        %vm5426 = vcmask 1043456
        %vm5427 = vmand %vm5426, %vm5222
        %v5428 = vld [vmem:[#allocation4] sm:$0xf]
        %v5429 = vsel %vm5427, %v5272, %v5428
        %5430 = vst [vmem:[#allocation4] sm:$0xf] %v5429
        %5431 = vst [vmem:[#allocation4 + $0x4] sm:$0xf] %v5281
        %v5432 = vld [vmem:[#allocation4 + $0x8] sm:$0x1]
        %v5433 = vsel %vm5197, %v5282, %v5432
        %5434 = vst [vmem:[#allocation4 + $0x8] sm:$0x1] %v5433
        %v5435 = vld [vmem:[#allocation4 + $0xc] sm:$0xf]
        %v5436 = vsel %vm5427, %v5289, %v5435
        %5437 = vst [vmem:[#allocation4 + $0xc] sm:$0xf] %v5436
        %5438 = vst [vmem:[#allocation4 + $0x10] sm:$0xf] %v5298
        %v5439 = vld [vmem:[#allocation4 + $0x14] sm:$0x1]
        %v5440 = vsel %vm5197, %v5299, %v5439
        %5441 = vst [vmem:[#allocation4 + $0x14] sm:$0x1] %v5440
        %v5442 = vld [vmem:[#allocation4 + $0x18] sm:$0xf]
        %v5443 = vsel %vm5427, %v5306, %v5442
        %5444 = vst [vmem:[#allocation4 + $0x18] sm:$0xf] %v5443
        %5445 = vst [vmem:[#allocation4 + $0x1c] sm:$0xf] %v5315
        %v5446 = vld [vmem:[#allocation4 + $0x20] sm:$0x1]
        %v5447 = vsel %vm5197, %v5316, %v5446
        %5448 = vst [vmem:[#allocation4 + $0x20] sm:$0x1] %v5447
        %v5449 = vld [vmem:[#allocation4 + $0x24] sm:$0xf]
        %v5450 = vsel %vm5427, %v5323, %v5449
        %5451 = vst [vmem:[#allocation4 + $0x24] sm:$0xf] %v5450
        %5452 = vst [vmem:[#allocation4 + $0x28] sm:$0xf] %v5332
        %v5453 = vld [vmem:[#allocation4 + $0x2c] sm:$0x1]
        %v5454 = vsel %vm5197, %v5333, %v5453
        %5455 = vst [vmem:[#allocation4 + $0x2c] sm:$0x1] %v5454
        %v5456 = vld [vmem:[#allocation4 + $0x30] sm:$0xf]
        %v5457 = vsel %vm5427, %v5340, %v5456
        %5458 = vst [vmem:[#allocation4 + $0x30] sm:$0xf] %v5457
        %5459 = vst [vmem:[#allocation4 + $0x34] sm:$0xf] %v5349
        %v5460 = vld [vmem:[#allocation4 + $0x38] sm:$0x1]
        %v5461 = vsel %vm5197, %v5350, %v5460
        %5462 = vst [vmem:[#allocation4 + $0x38] sm:$0x1] %v5461
        %v5463 = vld [vmem:[#allocation4 + $0x3c] sm:$0xf]
        %v5464 = vsel %vm5427, %v5357, %v5463
        %5465 = vst [vmem:[#allocation4 + $0x3c] sm:$0xf] %v5464
        %5466 = vst [vmem:[#allocation4 + $0x40] sm:$0xf] %v5366
        %v5467 = vld [vmem:[#allocation4 + $0x44] sm:$0x1]
        %v5468 = vsel %vm5197, %v5367, %v5467
        %5469 = vst [vmem:[#allocation4 + $0x44] sm:$0x1] %v5468
        %v5470 = vld [vmem:[#allocation4 + $0x48] sm:$0xf]
        %v5471 = vsel %vm5427, %v5374, %v5470
        %5472 = vst [vmem:[#allocation4 + $0x48] sm:$0xf] %v5471
        %5473 = vst [vmem:[#allocation4 + $0x4c] sm:$0xf] %v5383
        %v5474 = vld [vmem:[#allocation4 + $0x50] sm:$0x1]
        %v5475 = vsel %vm5197, %v5384, %v5474
        %5476 = vst [vmem:[#allocation4 + $0x50] sm:$0x1] %v5475
        %v5477 = vld [vmem:[#allocation4 + $0x54] sm:$0xf]
        %v5478 = vsel %vm5427, %v5391, %v5477
        %5479 = vst [vmem:[#allocation4 + $0x54] sm:$0xf] %v5478
        %5480 = vst [vmem:[#allocation4 + $0x58] sm:$0xf] %v5400
        %v5481 = vld [vmem:[#allocation4 + $0x5c] sm:$0x1]
        %v5482 = vsel %vm5197, %v5401, %v5481
        %5483 = vst [vmem:[#allocation4 + $0x5c] sm:$0x1] %v5482
        %v5484 = vld [vmem:[#allocation4] sm:$0xf]
        %v5485 = vld [vmem:[#allocation4 + $0x4] sm:$0xf]
        %v5486 = vld [vmem:[#allocation4 + $0xc] sm:$0xf]
        %v5487 = vld [vmem:[#allocation4 + $0x10] sm:$0xf]
        %v5488 = vld [vmem:[#allocation4 + $0x18] sm:$0xf]
        %v5489 = vld [vmem:[#allocation4 + $0x1c] sm:$0xf]
        %v5490 = vld [vmem:[#allocation4 + $0x24] sm:$0xf]
        %v5491 = vld [vmem:[#allocation4 + $0x28] sm:$0xf]
        %v5492 = vld [vmem:[#allocation4 + $0x30] sm:$0xf]
        %v5493 = vld [vmem:[#allocation4 + $0x34] sm:$0xf]
        %v5494 = vld [vmem:[#allocation4 + $0x3c] sm:$0xf]
        %v5495 = vld [vmem:[#allocation4 + $0x40] sm:$0xf]
        %v5496 = vld [vmem:[#allocation4 + $0x48] sm:$0xf]
        %v5497 = vld [vmem:[#allocation4 + $0x4c] sm:$0xf]
        %v5498 = vld [vmem:[#allocation4 + $0x54] sm:$0xf]
        %v5499 = vld [vmem:[#allocation4 + $0x58] sm:$0xf]
        %v5500 = vld [vmem:[%s7] sm:$0xf]
        %v5501 = vld [vmem:[%s7 + $0x4] sm:$0xf]
        %v5502 = vld [vmem:[%s7 + $0x8] sm:$0xf]
        %v5503 = vld [vmem:[%s7 + $0xc] sm:$0xf]
        %v5504 = vld [vmem:[%s7 + $0x10] sm:$0xf]
        %v5505 = vld [vmem:[%s7 + $0x14] sm:$0xf]
        %v5506 = vld [vmem:[%s7 + $0x18] sm:$0xf]
        %v5507 = vld [vmem:[%s7 + $0x1c] sm:$0xf]
        %v5508 = vld [vmem:[%s7 + $0x20] sm:$0xf]
        %v5509 = vld [vmem:[%s7 + $0x24] sm:$0xf]
        %v5510 = vld [vmem:[%s7 + $0x28] sm:$0xf]
        %v5511 = vld [vmem:[%s7 + $0x2c] sm:$0xf]
        %v5512 = vld [vmem:[%s7 + $0x30] sm:$0xf]
        %v5513 = vld [vmem:[%s7 + $0x34] sm:$0xf]
        %v5514 = vld [vmem:[%s7 + $0x38] sm:$0xf]
        %v5515 = vld [vmem:[%s7 + $0x3c] sm:$0xf]
        %v5516 = vld [vmem:[#allocation4 + $0x8] sm:$0x1]
        %v5517 = vld [vmem:[#allocation4 + $0x14] sm:$0x1]
        %v5518 = vld [vmem:[#allocation4 + $0x20] sm:$0x1]
        %v5519 = vld [vmem:[#allocation4 + $0x2c] sm:$0x1]
        %v5520 = vld [vmem:[#allocation4 + $0x38] sm:$0x1]
        %v5521 = vld [vmem:[#allocation4 + $0x44] sm:$0x1]
        %v5522 = vld [vmem:[#allocation4 + $0x50] sm:$0x1]
        %v5523 = vld [vmem:[#allocation4 + $0x5c] sm:$0x1]
        %v5525 = vshrl.u32 %v5484, 16
        %v5527 = vrot.slane %v5525, 4
        %v5528 = vshll.u32 %v5484, 16
        %v5530 = vrot.slane %v5528, 5
        %v5531 = vor.u32 %v5527, %v5530
        %v5532 = vrot.slane %v5531, 4
        %v5534 = vshll.u32 %v5485, 16
        %v5536 = vrot.slane %v5534, 5
        %v5537 = vsel %vm1536, %v5532, %v5536
        %v5538 = vshrl.u32 %v5485, 16
        %v5540 = vrot.slane %v5538, 4
        %v5541 = vor.u32 %v5540, %v5536
        %v5542 = vrot.slane %v5541, 4
        %v5544 = vshll.u32 %v5516, 16
        %v5546 = vrot.slane %v5544, 5
        %v5547 = vsel %vm1536, %v5542, %v5546
        %v5549 = vshrl.u32 %v5486, 16
        %v5551 = vrot.slane %v5549, 4
        %v5552 = vshll.u32 %v5486, 16
        %v5554 = vrot.slane %v5552, 5
        %v5555 = vor.u32 %v5551, %v5554
        %v5556 = vrot.slane %v5555, 4
        %v5558 = vshll.u32 %v5487, 16
        %v5560 = vrot.slane %v5558, 5
        %v5561 = vsel %vm1536, %v5556, %v5560
        %v5562 = vshrl.u32 %v5487, 16
        %v5564 = vrot.slane %v5562, 4
        %v5565 = vor.u32 %v5564, %v5560
        %v5566 = vrot.slane %v5565, 4
        %v5568 = vshll.u32 %v5517, 16
        %v5570 = vrot.slane %v5568, 5
        %v5571 = vsel %vm1536, %v5566, %v5570
        %v5573 = vshrl.u32 %v5488, 16
        %v5575 = vrot.slane %v5573, 4
        %v5576 = vshll.u32 %v5488, 16
        %v5578 = vrot.slane %v5576, 5
        %v5579 = vor.u32 %v5575, %v5578
        %v5580 = vrot.slane %v5579, 4
        %v5582 = vshll.u32 %v5489, 16
        %v5584 = vrot.slane %v5582, 5
        %v5585 = vsel %vm1536, %v5580, %v5584
        %v5586 = vshrl.u32 %v5489, 16
        %v5588 = vrot.slane %v5586, 4
        %v5589 = vor.u32 %v5588, %v5584
        %v5590 = vrot.slane %v5589, 4
        %v5592 = vshll.u32 %v5518, 16
        %v5594 = vrot.slane %v5592, 5
        %v5595 = vsel %vm1536, %v5590, %v5594
        %v5597 = vshrl.u32 %v5490, 16
        %v5599 = vrot.slane %v5597, 4
        %v5600 = vshll.u32 %v5490, 16
        %v5602 = vrot.slane %v5600, 5
        %v5603 = vor.u32 %v5599, %v5602
        %v5604 = vrot.slane %v5603, 4
        %v5606 = vshll.u32 %v5491, 16
        %v5608 = vrot.slane %v5606, 5
        %v5609 = vsel %vm1536, %v5604, %v5608
        %v5610 = vshrl.u32 %v5491, 16
        %v5612 = vrot.slane %v5610, 4
        %v5613 = vor.u32 %v5612, %v5608
        %v5614 = vrot.slane %v5613, 4
        %v5616 = vshll.u32 %v5519, 16
        %v5618 = vrot.slane %v5616, 5
        %v5619 = vsel %vm1536, %v5614, %v5618
        %v5621 = vshrl.u32 %v5492, 16
        %v5623 = vrot.slane %v5621, 4
        %v5624 = vshll.u32 %v5492, 16
        %v5626 = vrot.slane %v5624, 5
        %v5627 = vor.u32 %v5623, %v5626
        %v5628 = vrot.slane %v5627, 4
        %v5630 = vshll.u32 %v5493, 16
        %v5632 = vrot.slane %v5630, 5
        %v5633 = vsel %vm1536, %v5628, %v5632
        %v5634 = vshrl.u32 %v5493, 16
        %v5636 = vrot.slane %v5634, 4
        %v5637 = vor.u32 %v5636, %v5632
        %v5638 = vrot.slane %v5637, 4
        %v5640 = vshll.u32 %v5520, 16
        %v5642 = vrot.slane %v5640, 5
        %v5643 = vsel %vm1536, %v5638, %v5642
        %v5645 = vshrl.u32 %v5494, 16
        %v5647 = vrot.slane %v5645, 4
        %v5648 = vshll.u32 %v5494, 16
        %v5650 = vrot.slane %v5648, 5
        %v5651 = vor.u32 %v5647, %v5650
        %v5652 = vrot.slane %v5651, 4
        %v5654 = vshll.u32 %v5495, 16
        %v5656 = vrot.slane %v5654, 5
        %v5657 = vsel %vm1536, %v5652, %v5656
        %v5658 = vshrl.u32 %v5495, 16
        %v5660 = vrot.slane %v5658, 4
        %v5661 = vor.u32 %v5660, %v5656
        %v5662 = vrot.slane %v5661, 4
        %v5664 = vshll.u32 %v5521, 16
        %v5666 = vrot.slane %v5664, 5
        %v5667 = vsel %vm1536, %v5662, %v5666
        %v5669 = vshrl.u32 %v5496, 16
        %v5671 = vrot.slane %v5669, 4
        %v5672 = vshll.u32 %v5496, 16
        %v5674 = vrot.slane %v5672, 5
        %v5675 = vor.u32 %v5671, %v5674
        %v5676 = vrot.slane %v5675, 4
        %v5678 = vshll.u32 %v5497, 16
        %v5680 = vrot.slane %v5678, 5
        %v5681 = vsel %vm1536, %v5676, %v5680
        %v5682 = vshrl.u32 %v5497, 16
        %v5684 = vrot.slane %v5682, 4
        %v5685 = vor.u32 %v5684, %v5680
        %v5686 = vrot.slane %v5685, 4
        %v5688 = vshll.u32 %v5522, 16
        %v5690 = vrot.slane %v5688, 5
        %v5691 = vsel %vm1536, %v5686, %v5690
        %v5693 = vshrl.u32 %v5498, 16
        %v5695 = vrot.slane %v5693, 4
        %v5696 = vshll.u32 %v5498, 16
        %v5698 = vrot.slane %v5696, 5
        %v5699 = vor.u32 %v5695, %v5698
        %v5700 = vrot.slane %v5699, 4
        %v5702 = vshll.u32 %v5499, 16
        %v5704 = vrot.slane %v5702, 5
        %v5705 = vsel %vm1536, %v5700, %v5704
        %v5706 = vshrl.u32 %v5499, 16
        %v5708 = vrot.slane %v5706, 4
        %v5709 = vor.u32 %v5708, %v5704
        %v5710 = vrot.slane %v5709, 4
        %v5712 = vshll.u32 %v5523, 16
        %v5714 = vrot.slane %v5712, 5
        %v5715 = vsel %vm1536, %v5710, %v5714
        %s5716 = scalar_lea.vmem %s7, 64
        %v5717 = vld [vmem:[%s5716] sm:$0xf]
        %v5718 = vld [vmem:[%s5716 + $0x4] sm:$0xf]
        %v5719 = vld [vmem:[%s5716 + $0x8] sm:$0xf]
        %v5720 = vld [vmem:[%s5716 + $0xc] sm:$0xf]
        %v5721 = vld [vmem:[%s5716 + $0x10] sm:$0xf]
        %v5722 = vld [vmem:[%s5716 + $0x14] sm:$0xf]
        %v5723 = vld [vmem:[%s5716 + $0x18] sm:$0xf]
        %v5724 = vld [vmem:[%s5716 + $0x1c] sm:$0xf]
        %v5725 = vld [vmem:[%s5716 + $0x20] sm:$0xf]
        %v5726 = vld [vmem:[%s5716 + $0x24] sm:$0xf]
        %v5727 = vld [vmem:[%s5716 + $0x28] sm:$0xf]
        %v5728 = vld [vmem:[%s5716 + $0x2c] sm:$0xf]
        %v5729 = vld [vmem:[%s5716 + $0x30] sm:$0xf]
        %v5730 = vld [vmem:[%s5716 + $0x34] sm:$0xf]
        %v5731 = vld [vmem:[%s5716 + $0x38] sm:$0xf]
        %v5732 = vld [vmem:[%s5716 + $0x3c] sm:$0xf]
        %v5733 = vunpack.c.l.b16 %v5537
        %v5734 = vunpack.c.l.b16 %v5547
        %v5735 = vunpack.c.l.b16 %v5561
        %v5736 = vunpack.c.l.b16 %v5571
        %v5737 = vunpack.c.l.b16 %v5585
        %v5738 = vunpack.c.l.b16 %v5595
        %v5739 = vunpack.c.l.b16 %v5609
        %v5740 = vunpack.c.l.b16 %v5619
        %v5741 = vunpack.c.l.b16 %v5633
        %v5742 = vunpack.c.l.b16 %v5643
        %v5743 = vunpack.c.l.b16 %v5657
        %v5744 = vunpack.c.l.b16 %v5667
        %v5745 = vunpack.c.l.b16 %v5681
        %v5746 = vunpack.c.l.b16 %v5691
        %v5747 = vunpack.c.l.b16 %v5705
        %v5748 = vunpack.c.l.b16 %v5715
        %v5749 = vpack.c.b16 %v5734, %v5733
        %v5750 = vpack.c.b16 %v5736, %v5735
        %v5751 = vpack.c.b16 %v5738, %v5737
        %v5752 = vpack.c.b16 %v5740, %v5739
        %v5753 = vpack.c.b16 %v5742, %v5741
        %v5754 = vpack.c.b16 %v5744, %v5743
        %v5755 = vpack.c.b16 %v5746, %v5745
        %v5756 = vpack.c.b16 %v5748, %v5747
        %v5781 = vunpack.c.l.b16 %v5717
        %v5782 = vunpack.c.l.b16 %v5718
        %v5783 = vunpack.c.l.b16 %v5719
        %v5784 = vunpack.c.l.b16 %v5720
        %v5785 = vunpack.c.l.b16 %v5721
        %v5786 = vunpack.c.l.b16 %v5722
        %v5787 = vunpack.c.l.b16 %v5723
        %v5788 = vunpack.c.l.b16 %v5724
        %v5789 = vunpack.c.l.b16 %v5725
        %v5790 = vunpack.c.l.b16 %v5726
        %v5791 = vunpack.c.l.b16 %v5727
        %v5792 = vunpack.c.l.b16 %v5728
        %v5793 = vunpack.c.l.b16 %v5729
        %v5794 = vunpack.c.l.b16 %v5730
        %v5795 = vunpack.c.l.b16 %v5731
        %v5796 = vunpack.c.l.b16 %v5732
        %v5797 = vpack.c.b16 %v5782, %v5781
        %v5798 = vpack.c.b16 %v5784, %v5783
        %v5799 = vpack.c.b16 %v5786, %v5785
        %v5800 = vpack.c.b16 %v5788, %v5787
        %v5801 = vpack.c.b16 %v5790, %v5789
        %v5802 = vpack.c.b16 %v5792, %v5791
        %v5803 = vpack.c.b16 %v5794, %v5793
        %v5804 = vpack.c.b16 %v5796, %v5795
        %5813 = vmatpush.bf16.msra.mxu0 %v5804
        %5814 = vmatpush.bf16.msra.mxu0 %v5803
        %5815 = vmatpush.bf16.msra.mxu0 %v5802
        %5816 = vmatpush.bf16.msra.mxu0 %v5801
        %5817 = vmatpush.bf16.msra.mxu0 %v5800
        %5818 = vmatpush.bf16.msra.mxu0 %v5799
        %5819 = vmatpush.bf16.msra.mxu0 %v5798
        %5820 = vmatpush.bf16.msra.mxu0 %v5797
        %5821 = vmatmul.bf16.gmra.mxu0 %v5749
        %v5822 = vpop.f32.mrf.mxu0
        %v5823 = vadd.f32 0.0, %v5822
        %v5824 = vpop.f32.mrf.mxu0
        %v5825 = vadd.f32 0.0, %v5824
        %5826 = vmatmul.bf16.gmra.mxu0 %v5750
        %v5827 = vpop.f32.mrf.mxu0
        %v5828 = vadd.f32 0.0, %v5827
        %v5829 = vpop.f32.mrf.mxu0
        %v5830 = vadd.f32 0.0, %v5829
        %5831 = vmatmul.bf16.gmra.mxu0 %v5751
        %v5832 = vpop.f32.mrf.mxu0
        %v5833 = vadd.f32 0.0, %v5832
        %v5834 = vpop.f32.mrf.mxu0
        %v5835 = vadd.f32 0.0, %v5834
        %5836 = vmatmul.bf16.gmra.mxu0 %v5752
        %v5837 = vpop.f32.mrf.mxu0
        %v5838 = vadd.f32 0.0, %v5837
        %v5839 = vpop.f32.mrf.mxu0
        %v5840 = vadd.f32 0.0, %v5839
        %5841 = vmatmul.bf16.gmra.mxu0 %v5753
        %v5842 = vpop.f32.mrf.mxu0
        %v5843 = vadd.f32 0.0, %v5842
        %v5844 = vpop.f32.mrf.mxu0
        %v5845 = vadd.f32 0.0, %v5844
        %5846 = vmatmul.bf16.gmra.mxu0 %v5754
        %v5847 = vpop.f32.mrf.mxu0
        %v5848 = vadd.f32 0.0, %v5847
        %v5849 = vpop.f32.mrf.mxu0
        %v5850 = vadd.f32 0.0, %v5849
        %5851 = vmatmul.bf16.gmra.mxu0 %v5755
        %v5852 = vpop.f32.mrf.mxu0
        %v5853 = vadd.f32 0.0, %v5852
        %v5854 = vpop.f32.mrf.mxu0
        %v5855 = vadd.f32 0.0, %v5854
        %5856 = vmatmul.bf16.gmra.mxu0 %v5756
        %v5857 = vpop.f32.mrf.mxu0
        %v5858 = vadd.f32 0.0, %v5857
        %v5859 = vpop.f32.mrf.mxu0
        %v5860 = vadd.f32 0.0, %v5859
        %5861 = vdwg.mxu0
        %v5878 = vunpack.c.l.b16 %v5484
        %v5879 = vunpack.c.l.b16 %v5485
        %v5880 = vunpack.c.l.b16 %v5486
        %v5881 = vunpack.c.l.b16 %v5487
        %v5882 = vunpack.c.l.b16 %v5488
        %v5883 = vunpack.c.l.b16 %v5489
        %v5884 = vunpack.c.l.b16 %v5490
        %v5885 = vunpack.c.l.b16 %v5491
        %v5886 = vunpack.c.l.b16 %v5492
        %v5887 = vunpack.c.l.b16 %v5493
        %v5888 = vunpack.c.l.b16 %v5494
        %v5889 = vunpack.c.l.b16 %v5495
        %v5890 = vunpack.c.l.b16 %v5496
        %v5891 = vunpack.c.l.b16 %v5497
        %v5892 = vunpack.c.l.b16 %v5498
        %v5893 = vunpack.c.l.b16 %v5499
        %v5894 = vpack.c.b16 %v5879, %v5878
        %v5895 = vpack.c.b16 %v5881, %v5880
        %v5896 = vpack.c.b16 %v5883, %v5882
        %v5897 = vpack.c.b16 %v5885, %v5884
        %v5898 = vpack.c.b16 %v5887, %v5886
        %v5899 = vpack.c.b16 %v5889, %v5888
        %v5900 = vpack.c.b16 %v5891, %v5890
        %v5901 = vpack.c.b16 %v5893, %v5892
        %v5926 = vunpack.c.l.b16 %v5500
        %v5927 = vunpack.c.l.b16 %v5501
        %v5928 = vunpack.c.l.b16 %v5502
        %v5929 = vunpack.c.l.b16 %v5503
        %v5930 = vunpack.c.l.b16 %v5504
        %v5931 = vunpack.c.l.b16 %v5505
        %v5932 = vunpack.c.l.b16 %v5506
        %v5933 = vunpack.c.l.b16 %v5507
        %v5934 = vunpack.c.l.b16 %v5508
        %v5935 = vunpack.c.l.b16 %v5509
        %v5936 = vunpack.c.l.b16 %v5510
        %v5937 = vunpack.c.l.b16 %v5511
        %v5938 = vunpack.c.l.b16 %v5512
        %v5939 = vunpack.c.l.b16 %v5513
        %v5940 = vunpack.c.l.b16 %v5514
        %v5941 = vunpack.c.l.b16 %v5515
        %v5942 = vpack.c.b16 %v5927, %v5926
        %v5943 = vpack.c.b16 %v5929, %v5928
        %v5944 = vpack.c.b16 %v5931, %v5930
        %v5945 = vpack.c.b16 %v5933, %v5932
        %v5946 = vpack.c.b16 %v5935, %v5934
        %v5947 = vpack.c.b16 %v5937, %v5936
        %v5948 = vpack.c.b16 %v5939, %v5938
        %v5949 = vpack.c.b16 %v5941, %v5940
        %5958 = vmatpush.bf16.msra.mxu0 %v5949
        %5959 = vmatpush.bf16.msra.mxu0 %v5948
        %5960 = vmatpush.bf16.msra.mxu0 %v5947
        %5961 = vmatpush.bf16.msra.mxu0 %v5946
        %5962 = vmatpush.bf16.msra.mxu0 %v5945
        %5963 = vmatpush.bf16.msra.mxu0 %v5944
        %5964 = vmatpush.bf16.msra.mxu0 %v5943
        %5965 = vmatpush.bf16.msra.mxu0 %v5942
        %5966 = vmatmul.bf16.gmra.mxu0 %v5894
        %v5967 = vpop.f32.mrf.mxu0
        %v5968 = vadd.f32 %v5823, %v5967
        %v5969 = vpop.f32.mrf.mxu0
        %v5970 = vadd.f32 %v5825, %v5969
        %5971 = vmatmul.bf16.gmra.mxu0 %v5895
        %v5972 = vpop.f32.mrf.mxu0
        %v5973 = vadd.f32 %v5828, %v5972
        %v5974 = vpop.f32.mrf.mxu0
        %v5975 = vadd.f32 %v5830, %v5974
        %5976 = vmatmul.bf16.gmra.mxu0 %v5896
        %v5977 = vpop.f32.mrf.mxu0
        %v5978 = vadd.f32 %v5833, %v5977
        %v5979 = vpop.f32.mrf.mxu0
        %v5980 = vadd.f32 %v5835, %v5979
        %5981 = vmatmul.bf16.gmra.mxu0 %v5897
        %v5982 = vpop.f32.mrf.mxu0
        %v5983 = vadd.f32 %v5838, %v5982
        %v5984 = vpop.f32.mrf.mxu0
        %v5985 = vadd.f32 %v5840, %v5984
        %5986 = vmatmul.bf16.gmra.mxu0 %v5898
        %v5987 = vpop.f32.mrf.mxu0
        %v5988 = vadd.f32 %v5843, %v5987
        %v5989 = vpop.f32.mrf.mxu0
        %v5990 = vadd.f32 %v5845, %v5989
        %5991 = vmatmul.bf16.gmra.mxu0 %v5899
        %v5992 = vpop.f32.mrf.mxu0
        %v5993 = vadd.f32 %v5848, %v5992
        %v5994 = vpop.f32.mrf.mxu0
        %v5995 = vadd.f32 %v5850, %v5994
        %5996 = vmatmul.bf16.gmra.mxu0 %v5900
        %v5997 = vpop.f32.mrf.mxu0
        %v5998 = vadd.f32 %v5853, %v5997
        %v5999 = vpop.f32.mrf.mxu0
        %v6000 = vadd.f32 %v5855, %v5999
        %6001 = vmatmul.bf16.gmra.mxu0 %v5901
        %v6002 = vpop.f32.mrf.mxu0
        %v6003 = vadd.f32 %v5858, %v6002
        %v6004 = vpop.f32.mrf.mxu0
        %v6005 = vadd.f32 %v5860, %v6004
        %6006 = vdwg.mxu0
        %v6007 = vld [vmem:[#allocation4] sm:$0xe]
        %v6008 = vld [vmem:[#allocation4 + $0xc] sm:$0xe]
        %v6009 = vld [vmem:[#allocation4 + $0x18] sm:$0xe]
        %v6010 = vld [vmem:[#allocation4 + $0x24] sm:$0xe]
        %v6011 = vld [vmem:[#allocation4 + $0x30] sm:$0xe]
        %v6012 = vld [vmem:[#allocation4 + $0x3c] sm:$0xe]
        %v6013 = vld [vmem:[#allocation4 + $0x48] sm:$0xe]
        %v6014 = vld [vmem:[#allocation4 + $0x54] sm:$0xe]
        %v6031 = vrot.slane %v6007, 5
        %v6032 = vrot.slane %v6031, 4
        %v6033 = vrot.slane %v5485, 5
        %v6034 = vsel %vm2346, %v6032, %v6033
        %v6035 = vrot.slane %v6033, 4
        %v6036 = vrot.slane %v5516, 5
        %v6037 = vsel %vm2346, %v6035, %v6036
        %v6038 = vrot.slane %v6008, 5
        %v6039 = vrot.slane %v6038, 4
        %v6040 = vrot.slane %v5487, 5
        %v6041 = vsel %vm2346, %v6039, %v6040
        %v6042 = vrot.slane %v6040, 4
        %v6043 = vrot.slane %v5517, 5
        %v6044 = vsel %vm2346, %v6042, %v6043
        %v6045 = vrot.slane %v6009, 5
        %v6046 = vrot.slane %v6045, 4
        %v6047 = vrot.slane %v5489, 5
        %v6048 = vsel %vm2346, %v6046, %v6047
        %v6049 = vrot.slane %v6047, 4
        %v6050 = vrot.slane %v5518, 5
        %v6051 = vsel %vm2346, %v6049, %v6050
        %v6052 = vrot.slane %v6010, 5
        %v6053 = vrot.slane %v6052, 4
        %v6054 = vrot.slane %v5491, 5
        %v6055 = vsel %vm2346, %v6053, %v6054
        %v6056 = vrot.slane %v6054, 4
        %v6057 = vrot.slane %v5519, 5
        %v6058 = vsel %vm2346, %v6056, %v6057
        %v6059 = vrot.slane %v6011, 5
        %v6060 = vrot.slane %v6059, 4
        %v6061 = vrot.slane %v5493, 5
        %v6062 = vsel %vm2346, %v6060, %v6061
        %v6063 = vrot.slane %v6061, 4
        %v6064 = vrot.slane %v5520, 5
        %v6065 = vsel %vm2346, %v6063, %v6064
        %v6066 = vrot.slane %v6012, 5
        %v6067 = vrot.slane %v6066, 4
        %v6068 = vrot.slane %v5495, 5
        %v6069 = vsel %vm2346, %v6067, %v6068
        %v6070 = vrot.slane %v6068, 4
        %v6071 = vrot.slane %v5521, 5
        %v6072 = vsel %vm2346, %v6070, %v6071
        %v6073 = vrot.slane %v6013, 5
        %v6074 = vrot.slane %v6073, 4
        %v6075 = vrot.slane %v5497, 5
        %v6076 = vsel %vm2346, %v6074, %v6075
        %v6077 = vrot.slane %v6075, 4
        %v6078 = vrot.slane %v5522, 5
        %v6079 = vsel %vm2346, %v6077, %v6078
        %v6080 = vrot.slane %v6014, 5
        %v6081 = vrot.slane %v6080, 4
        %v6082 = vrot.slane %v5499, 5
        %v6083 = vsel %vm2346, %v6081, %v6082
        %v6084 = vrot.slane %v6082, 4
        %v6085 = vrot.slane %v5523, 5
        %v6086 = vsel %vm2346, %v6084, %v6085
        %s6087 = scalar_lea.vmem %s7, 128
        %v6088 = vld [vmem:[%s6087] sm:$0xf]
        %v6089 = vld [vmem:[%s6087 + $0x4] sm:$0xf]
        %v6090 = vld [vmem:[%s6087 + $0x8] sm:$0xf]
        %v6091 = vld [vmem:[%s6087 + $0xc] sm:$0xf]
        %v6092 = vld [vmem:[%s6087 + $0x10] sm:$0xf]
        %v6093 = vld [vmem:[%s6087 + $0x14] sm:$0xf]
        %v6094 = vld [vmem:[%s6087 + $0x18] sm:$0xf]
        %v6095 = vld [vmem:[%s6087 + $0x1c] sm:$0xf]
        %v6096 = vld [vmem:[%s6087 + $0x20] sm:$0xf]
        %v6097 = vld [vmem:[%s6087 + $0x24] sm:$0xf]
        %v6098 = vld [vmem:[%s6087 + $0x28] sm:$0xf]
        %v6099 = vld [vmem:[%s6087 + $0x2c] sm:$0xf]
        %v6100 = vld [vmem:[%s6087 + $0x30] sm:$0xf]
        %v6101 = vld [vmem:[%s6087 + $0x34] sm:$0xf]
        %v6102 = vld [vmem:[%s6087 + $0x38] sm:$0xf]
        %v6103 = vld [vmem:[%s6087 + $0x3c] sm:$0xf]
        %v6104 = vunpack.c.l.b16 %v6034
        %v6105 = vunpack.c.l.b16 %v6037
        %v6106 = vunpack.c.l.b16 %v6041
        %v6107 = vunpack.c.l.b16 %v6044
        %v6108 = vunpack.c.l.b16 %v6048
        %v6109 = vunpack.c.l.b16 %v6051
        %v6110 = vunpack.c.l.b16 %v6055
        %v6111 = vunpack.c.l.b16 %v6058
        %v6112 = vunpack.c.l.b16 %v6062
        %v6113 = vunpack.c.l.b16 %v6065
        %v6114 = vunpack.c.l.b16 %v6069
        %v6115 = vunpack.c.l.b16 %v6072
        %v6116 = vunpack.c.l.b16 %v6076
        %v6117 = vunpack.c.l.b16 %v6079
        %v6118 = vunpack.c.l.b16 %v6083
        %v6119 = vunpack.c.l.b16 %v6086
        %v6120 = vpack.c.b16 %v6105, %v6104
        %v6121 = vpack.c.b16 %v6107, %v6106
        %v6122 = vpack.c.b16 %v6109, %v6108
        %v6123 = vpack.c.b16 %v6111, %v6110
        %v6124 = vpack.c.b16 %v6113, %v6112
        %v6125 = vpack.c.b16 %v6115, %v6114
        %v6126 = vpack.c.b16 %v6117, %v6116
        %v6127 = vpack.c.b16 %v6119, %v6118
        %v6152 = vunpack.c.l.b16 %v6088
        %v6153 = vunpack.c.l.b16 %v6089
        %v6154 = vunpack.c.l.b16 %v6090
        %v6155 = vunpack.c.l.b16 %v6091
        %v6156 = vunpack.c.l.b16 %v6092
        %v6157 = vunpack.c.l.b16 %v6093
        %v6158 = vunpack.c.l.b16 %v6094
        %v6159 = vunpack.c.l.b16 %v6095
        %v6160 = vunpack.c.l.b16 %v6096
        %v6161 = vunpack.c.l.b16 %v6097
        %v6162 = vunpack.c.l.b16 %v6098
        %v6163 = vunpack.c.l.b16 %v6099
        %v6164 = vunpack.c.l.b16 %v6100
        %v6165 = vunpack.c.l.b16 %v6101
        %v6166 = vunpack.c.l.b16 %v6102
        %v6167 = vunpack.c.l.b16 %v6103
        %v6168 = vpack.c.b16 %v6153, %v6152
        %v6169 = vpack.c.b16 %v6155, %v6154
        %v6170 = vpack.c.b16 %v6157, %v6156
        %v6171 = vpack.c.b16 %v6159, %v6158
        %v6172 = vpack.c.b16 %v6161, %v6160
        %v6173 = vpack.c.b16 %v6163, %v6162
        %v6174 = vpack.c.b16 %v6165, %v6164
        %v6175 = vpack.c.b16 %v6167, %v6166
        %6184 = vmatpush.bf16.msra.mxu0 %v6175
        %6185 = vmatpush.bf16.msra.mxu0 %v6174
        %6186 = vmatpush.bf16.msra.mxu0 %v6173
        %6187 = vmatpush.bf16.msra.mxu0 %v6172
        %6188 = vmatpush.bf16.msra.mxu0 %v6171
        %6189 = vmatpush.bf16.msra.mxu0 %v6170
        %6190 = vmatpush.bf16.msra.mxu0 %v6169
        %6191 = vmatpush.bf16.msra.mxu0 %v6168
        %6192 = vmatmul.bf16.gmra.mxu0 %v6120
        %v6193 = vpop.f32.mrf.mxu0
        %v6194 = vadd.f32 0.0, %v6193
        %v6195 = vpop.f32.mrf.mxu0
        %v6196 = vadd.f32 0.0, %v6195
        %6197 = vmatmul.bf16.gmra.mxu0 %v6121
        %v6198 = vpop.f32.mrf.mxu0
        %v6199 = vadd.f32 0.0, %v6198
        %v6200 = vpop.f32.mrf.mxu0
        %v6201 = vadd.f32 0.0, %v6200
        %6202 = vmatmul.bf16.gmra.mxu0 %v6122
        %v6203 = vpop.f32.mrf.mxu0
        %v6204 = vadd.f32 0.0, %v6203
        %v6205 = vpop.f32.mrf.mxu0
        %v6206 = vadd.f32 0.0, %v6205
        %6207 = vmatmul.bf16.gmra.mxu0 %v6123
        %v6208 = vpop.f32.mrf.mxu0
        %v6209 = vadd.f32 0.0, %v6208
        %v6210 = vpop.f32.mrf.mxu0
        %v6211 = vadd.f32 0.0, %v6210
        %6212 = vmatmul.bf16.gmra.mxu0 %v6124
        %v6213 = vpop.f32.mrf.mxu0
        %v6214 = vadd.f32 0.0, %v6213
        %v6215 = vpop.f32.mrf.mxu0
        %v6216 = vadd.f32 0.0, %v6215
        %6217 = vmatmul.bf16.gmra.mxu0 %v6125
        %v6218 = vpop.f32.mrf.mxu0
        %v6219 = vadd.f32 0.0, %v6218
        %v6220 = vpop.f32.mrf.mxu0
        %v6221 = vadd.f32 0.0, %v6220
        %6222 = vmatmul.bf16.gmra.mxu0 %v6126
        %v6223 = vpop.f32.mrf.mxu0
        %v6224 = vadd.f32 0.0, %v6223
        %v6225 = vpop.f32.mrf.mxu0
        %v6226 = vadd.f32 0.0, %v6225
        %6227 = vmatmul.bf16.gmra.mxu0 %v6127
        %v6228 = vpop.f32.mrf.mxu0
        %v6229 = vadd.f32 0.0, %v6228
        %v6230 = vpop.f32.mrf.mxu0
        %v6231 = vadd.f32 0.0, %v6230
        %6232 = vdwg.mxu0
        %v6233 = vadd.f32 %v5968, %v6194
        %v6234 = vadd.f32 %v5970, %v6196
        %v6235 = vadd.f32 %v5973, %v6199
        %v6236 = vadd.f32 %v5975, %v6201
        %v6237 = vadd.f32 %v5978, %v6204
        %v6238 = vadd.f32 %v5980, %v6206
        %v6239 = vadd.f32 %v5983, %v6209
        %v6240 = vadd.f32 %v5985, %v6211
        %v6241 = vadd.f32 %v5988, %v6214
        %v6242 = vadd.f32 %v5990, %v6216
        %v6243 = vadd.f32 %v5993, %v6219
        %v6244 = vadd.f32 %v5995, %v6221
        %v6245 = vadd.f32 %v5998, %v6224
        %v6246 = vadd.f32 %v6000, %v6226
        %v6247 = vadd.f32 %v6003, %v6229
        %v6248 = vadd.f32 %v6005, %v6231
        %v6249 = vld [vmem:[%s8] sm:$0x1]
        %v6251 = vperm.slane %v6249, 0
        %v6253 = vadd.f32 %v6233, %v6251
        %v6254 = vadd.f32 %v6234, %v6251
        %v6255 = vadd.f32 %v6235, %v6251
        %v6256 = vadd.f32 %v6236, %v6251
        %v6257 = vadd.f32 %v6237, %v6251
        %v6258 = vadd.f32 %v6238, %v6251
        %v6259 = vadd.f32 %v6239, %v6251
        %v6260 = vadd.f32 %v6240, %v6251
        %v6261 = vadd.f32 %v6241, %v6251
        %v6262 = vadd.f32 %v6242, %v6251
        %v6263 = vadd.f32 %v6243, %v6251
        %v6264 = vadd.f32 %v6244, %v6251
        %v6265 = vadd.f32 %v6245, %v6251
        %v6266 = vadd.f32 %v6246, %v6251
        %v6267 = vadd.f32 %v6247, %v6251
        %v6268 = vadd.f32 %v6248, %v6251
        %v6269 = vmax.f32 %v6253, 0.0
        %v6270 = vmax.f32 %v6254, 0.0
        %v6271 = vmax.f32 %v6255, 0.0
        %v6272 = vmax.f32 %v6256, 0.0
        %v6273 = vmax.f32 %v6257, 0.0
        %v6274 = vmax.f32 %v6258, 0.0
        %v6275 = vmax.f32 %v6259, 0.0
        %v6276 = vmax.f32 %v6260, 0.0
        %v6277 = vmax.f32 %v6261, 0.0
        %v6278 = vmax.f32 %v6262, 0.0
        %v6279 = vmax.f32 %v6263, 0.0
        %v6280 = vmax.f32 %v6264, 0.0
        %v6281 = vmax.f32 %v6265, 0.0
        %v6282 = vmax.f32 %v6266, 0.0
        %v6283 = vmax.f32 %v6267, 0.0
        %v6284 = vmax.f32 %v6268, 0.0
        %v6285 = vadd.f32 %v6269, %v6270
        %v6286 = vrot.slane %v6285, 4
        %v6287 = vadd.f32 %v6285, %v6286
        %v6288 = vrot.slane %v6287, 2
        %v6289 = vadd.f32 %v6287, %v6288
        %v6290 = vrot.slane %v6289, 1
        %v6291 = vadd.f32 %v6289, %v6290
        %v6292 = vadd.f32 %v6271, %v6272
        %v6293 = vrot.slane %v6292, 4
        %v6294 = vadd.f32 %v6292, %v6293
        %v6295 = vrot.slane %v6294, 2
        %v6296 = vadd.f32 %v6294, %v6295
        %v6297 = vrot.slane %v6296, 1
        %v6298 = vadd.f32 %v6296, %v6297
        %v6299 = vadd.f32 %v6273, %v6274
        %v6300 = vrot.slane %v6299, 4
        %v6301 = vadd.f32 %v6299, %v6300
        %v6302 = vrot.slane %v6301, 2
        %v6303 = vadd.f32 %v6301, %v6302
        %v6304 = vrot.slane %v6303, 1
        %v6305 = vadd.f32 %v6303, %v6304
        %v6306 = vadd.f32 %v6275, %v6276
        %v6307 = vrot.slane %v6306, 4
        %v6308 = vadd.f32 %v6306, %v6307
        %v6309 = vrot.slane %v6308, 2
        %v6310 = vadd.f32 %v6308, %v6309
        %v6311 = vrot.slane %v6310, 1
        %v6312 = vadd.f32 %v6310, %v6311
        %v6313 = vadd.f32 %v6277, %v6278
        %v6314 = vrot.slane %v6313, 4
        %v6315 = vadd.f32 %v6313, %v6314
        %v6316 = vrot.slane %v6315, 2
        %v6317 = vadd.f32 %v6315, %v6316
        %v6318 = vrot.slane %v6317, 1
        %v6319 = vadd.f32 %v6317, %v6318
        %v6320 = vadd.f32 %v6279, %v6280
        %v6321 = vrot.slane %v6320, 4
        %v6322 = vadd.f32 %v6320, %v6321
        %v6323 = vrot.slane %v6322, 2
        %v6324 = vadd.f32 %v6322, %v6323
        %v6325 = vrot.slane %v6324, 1
        %v6326 = vadd.f32 %v6324, %v6325
        %v6327 = vadd.f32 %v6281, %v6282
        %v6328 = vrot.slane %v6327, 4
        %v6329 = vadd.f32 %v6327, %v6328
        %v6330 = vrot.slane %v6329, 2
        %v6331 = vadd.f32 %v6329, %v6330
        %v6332 = vrot.slane %v6331, 1
        %v6333 = vadd.f32 %v6331, %v6332
        %v6334 = vadd.f32 %v6283, %v6284
        %v6335 = vrot.slane %v6334, 4
        %v6336 = vadd.f32 %v6334, %v6335
        %v6337 = vrot.slane %v6336, 2
        %v6338 = vadd.f32 %v6336, %v6337
        %v6339 = vrot.slane %v6338, 1
        %v6340 = vadd.f32 %v6338, %v6339
        %v6341 = vmul.f32 %v6291, 0.0625
        %v6342 = vmul.f32 %v6298, 0.0625
        %v6343 = vmul.f32 %v6305, 0.0625
        %v6344 = vmul.f32 %v6312, 0.0625
        %v6345 = vmul.f32 %v6319, 0.0625
        %v6346 = vmul.f32 %v6326, 0.0625
        %v6347 = vmul.f32 %v6333, 0.0625
        %v6348 = vmul.f32 %v6340, 0.0625
        %v6349 = vld [vmem:[%s9] sm:$0xff]
        %v6350 = vld [vmem:[%s9 + $0x8] sm:$0xff]
        %v6351 = vld [vmem:[%s9 + $0x10] sm:$0xff]
        %v6352 = vld [vmem:[%s9 + $0x18] sm:$0xff]
        %v6353 = vld [vmem:[%s9 + $0x20] sm:$0xff]
        %v6354 = vld [vmem:[%s9 + $0x28] sm:$0xff]
        %v6355 = vld [vmem:[%s9 + $0x30] sm:$0xff]
        %v6356 = vld [vmem:[%s9 + $0x38] sm:$0xff]
        %v6357 = vld [vmem:[%s9 + $0x40] sm:$0xff]
        %v6358 = vld [vmem:[%s9 + $0x48] sm:$0xff]
        %v6359 = vld [vmem:[%s9 + $0x50] sm:$0xff]
        %v6360 = vld [vmem:[%s9 + $0x58] sm:$0xff]
        %v6361 = vld [vmem:[%s9 + $0x60] sm:$0xff]
        %v6362 = vld [vmem:[%s9 + $0x68] sm:$0xff]
        %v6363 = vld [vmem:[%s9 + $0x70] sm:$0xff]
        %v6364 = vld [vmem:[%s9 + $0x78] sm:$0xff]
        %v6365 = vld [vmem:[%s10] sm:$0x1]
        %v6367 = vperm.slane %v6365, 0
        %vm6377 = vcmask 1041409
        %v6378 = vsel %vm6377, %v6342, %v6341
        %vm6379 = vcmask 1042434
        %v6380 = vsel %vm6379, %v6343, %v6378
        %vm6381 = vcmask 1043459
        %v6382 = vsel %vm6381, %v6344, %v6380
        %vm6383 = vcmask 1044484
        %v6384 = vsel %vm6383, %v6345, %v6382
        %vm6385 = vcmask 1045509
        %v6386 = vsel %vm6385, %v6346, %v6384
        %vm6387 = vcmask 1046534
        %v6388 = vsel %vm6387, %v6347, %v6386
        %vm6389 = vcmask 1047559
        %v6390 = vsel %vm6389, %v6348, %v6388
        %6392 = vmatpush.msra.mxu0 %v6364
        %6393 = vmatpush.msra.mxu0 %v6363
        %6394 = vmatpush.msra.mxu0 %v6362
        %6395 = vmatpush.msra.mxu0 %v6361
        %6396 = vmatpush.msra.mxu0 %v6360
        %6397 = vmatpush.msra.mxu0 %v6359
        %6398 = vmatpush.msra.mxu0 %v6358
        %6399 = vmatpush.msra.mxu0 %v6357
        %6400 = vmatpush.msra.mxu0 %v6356
        %6401 = vmatpush.msra.mxu0 %v6355
        %6402 = vmatpush.msra.mxu0 %v6354
        %6403 = vmatpush.msra.mxu0 %v6353
        %6404 = vmatpush.msra.mxu0 %v6352
        %6405 = vmatpush.msra.mxu0 %v6351
        %6406 = vmatpush.msra.mxu0 %v6350
        %6407 = vmatpush.msra.mxu0 %v6349
        %6408 = vmatmul.f32.gmra.mxu0 %v6390
        %v6409 = vpop.f32.mrf.mxu0
        %v6410 = vadd.f32 %v6367, %v6409
        %6411 = vdwg.mxu0
        %v6412 = vmax.f32 %v6410, 0.0
        %v6413 = vld [vmem:[%s11] sm:$0xff]
        %v6414 = vld [vmem:[%s11 + $0x8] sm:$0xff]
        %v6415 = vld [vmem:[%s11 + $0x10] sm:$0xff]
        %v6416 = vld [vmem:[%s11 + $0x18] sm:$0xff]
        %v6417 = vld [vmem:[%s11 + $0x20] sm:$0xff]
        %v6418 = vld [vmem:[%s11 + $0x28] sm:$0xff]
        %v6419 = vld [vmem:[%s11 + $0x30] sm:$0xff]
        %v6420 = vld [vmem:[%s11 + $0x38] sm:$0xff]
        %v6421 = vld [vmem:[%s12] sm:$0x1]
        %v6423 = vperm.slane %v6421, 0
        %v6426 = vsel %vm3645, %v6412, 0
        %6428 = vmatpush.msra.mxu0 0.0
        %6429 = vmatpush.msra.mxu0 0.0
        %6430 = vmatpush.msra.mxu0 0.0
        %6431 = vmatpush.msra.mxu0 0.0
        %6432 = vmatpush.msra.mxu0 0.0
        %6433 = vmatpush.msra.mxu0 0.0
        %6434 = vmatpush.msra.mxu0 0.0
        %6435 = vmatpush.msra.mxu0 0.0
        %6436 = vmatpush.msra.mxu0 %v6420
        %6437 = vmatpush.msra.mxu0 %v6419
        %6438 = vmatpush.msra.mxu0 %v6418
        %6439 = vmatpush.msra.mxu0 %v6417
        %6440 = vmatpush.msra.mxu0 %v6416
        %6441 = vmatpush.msra.mxu0 %v6415
        %6442 = vmatpush.msra.mxu0 %v6414
        %6443 = vmatpush.msra.mxu0 %v6413
        %6444 = vmatmul.f32.gmra.mxu0 %v6426
        %v6445 = vpop.f32.mrf.mxu0
        %v6446 = vadd.f32 %v6423, %v6445
        %6447 = vdwg.mxu0
        %vm6448 = vcmask 80896
        %6449 = vst.msk [vmem:[%s436] sm:$0xff] %vm6448, %v6446
        %s6450 = sand.u32 %s313, 1
        %s6451 = scalar_lea.sflag [#allocation8], %s6450
        %s6452 = sand.u32 %s313, 1
        %s6453 = smul.addr %s6452, 8
        %s6454 = scalar_lea.vmem [#allocation7], %s6453
        // Predicated region
        $region73: #{cnn_forward.1} parent=71 // pred_check
          %p6455 = pneg %p323
        $region74: #{cnn_forward.1} parent=71 // pred_check_branch
          %6457 = sbr.rel (%p6455) target = $region76
        $region75: #{cnn_forward.1} parent=71 // pred_region
          %6459 = vsyncadd %s6451, 0
          %s6460 = smul.addr %s27, 8
          %s6461 = scalar_lea.hbm %s13, %s6460
          %s6463 = sshll.u32 %s6454, 4
          %s6464 = int_to_ptr.vmem [resolvable:$true] %s6463
          %s6465 = sshll.u32 %s6461, 4
          %s6466 = int_to_ptr.hbm [resolvable:$true] %s6465
          %6468 = dma.vmem_to_hbm [thread:$0]  %s6464, 128, %s6466, %s6451
        $region76: #{cnn_forward.1} parent=71 // pred_fallthru
          _
      $region72: #{cnn_forward.1} parent=5 // pred_fallthru
        _
      %p6469 = scmp.le.s32.totalorder 2, %s22
      // Predicated region
      $region77: #{cnn_forward.1} parent=5 // pred_check
        %p6470 = pneg %p6469
      $region78: #{cnn_forward.1} parent=5 // pred_check_branch
        %6472 = sbr.rel (%p6470) target = $region80
      $region79: #{cnn_forward.1} parent=5 // pred_region
        %s6473 = ssub.s32 %s22, 2
        // Predicated region
        $region81: #{cnn_forward.1} parent=79 // pred_check
          %p6474 = pneg %p329
        $region82: #{cnn_forward.1} parent=79 // pred_check_branch
          %6476 = sbr.rel (%p6474) target = $region84
        $region83: #{cnn_forward.1} parent=79 // pred_region
          %s6477 = sand.u32 %s314, 1
          %s6478 = scalar_lea.sflag [#allocation8], %s6477
          %s6479 = sand.u32 %s314, 1
          %s6480 = smul.addr %s6479, 8
          %s6481 = scalar_lea.vmem [#allocation7], %s6480
          %6483 = dma.done %s6478, 128
        $region84: #{cnn_forward.1} parent=79 // pred_fallthru
          _
      $region80: #{cnn_forward.1} parent=5 // pred_fallthru
        _
    $region6: #{cnn_forward.1} parent=1 // loop_footer
      %s26 = sadd.s32 1, %s22
    $region7: #{cnn_forward.1} parent=1 // loop_footer_branch
      %21 = sbr.rel target = $region3
    $region8: #{cnn_forward.1} parent=1 // loop_exit
      _
    %6484 = vsyncpa [#allocation8], 1
    %s6485 = scalar_lea.sflag [#allocation8], 1
    %6486 = vsyncpa %s6485, 1

</llo_original>
